<compile_context>
chip_gen: v7x
topology: tpu7x:2x2x1
jax: 0.10.0
libtpu: 0.0.40
codegen_flags: <defaults>
</compile_context>

<pallas_src>
import functools
import math

import jax
import jax.numpy as jnp
from jax.experimental import pallas as pl
from jax.experimental.pallas import tpu as pltpu


def _layer_norm(v, g, b, eps=1e-5):
    mu = jnp.mean(v, axis=-1, keepdims=True)
    var = jnp.mean((v - mu) ** 2, axis=-1, keepdims=True)
    return (v - mu) * jax.lax.rsqrt(var + eps) * g + b


def _transformer_layer_kernel(
    x_ref, mask_ref,
    ln1_g_ref, ln1_b_ref,
    wq_ref, bq_ref, wkv_ref, bkv_ref,
    wo_ref, bo_ref,
    ln2_g_ref, ln2_b_ref,
    w1_ref, b1_ref, w2_ref, b2_ref,
    o_ref,
    k_scr, v_scr,
    *, num_heads: int,
):
    bf16, f32 = jnp.bfloat16, jnp.float32
    _, seq, d_model = x_ref.shape          # x block: (1, S, D), fetched once per b
    tq = o_ref.shape[1]                    # out block: (1, TQ, D)
    d_k = d_model // num_heads
    scale = 1.0 / math.sqrt(d_k)

    # ---- K/V for the whole sequence: computed once per batch element ----------
    @pl.when(pl.program_id(1) == 0)
    def _():
        z = _layer_norm(x_ref[0], ln1_g_ref[...], ln1_b_ref[...])          # (S, D) f32
        kv = (jnp.dot(z.astype(bf16), wkv_ref[...],
                      preferred_element_type=f32)
              + bkv_ref[...]).astype(bf16)                                 # (S, 2D) bf16
        k_scr[...] = jnp.transpose(
            kv[:, :d_model].reshape(seq, num_heads, d_k), (1, 0, 2))       # (H, S, dk)
        v_scr[...] = jnp.transpose(
            kv[:, d_model:].reshape(seq, num_heads, d_k), (1, 0, 2))       # (H, S, dk)

    # ---- query / residual rows for this grid step ------------------------------
    if tq == seq:
        x_t = x_ref[0]                                                     # (TQ, D) f32
    else:
        q_start = pl.multiple_of(pl.program_id(1) * tq, tq)
        x_t = x_ref[0, pl.ds(q_start, tq), :]

    # Q projection only for the TQ rows; fold 1/sqrt(dk) into q in f32.
    z_t = _layer_norm(x_t, ln1_g_ref[...], ln1_b_ref[...])
    q_t = jnp.dot(z_t.astype(bf16), wq_ref[...],
                  preferred_element_type=f32) + bq_ref[...]                # (TQ, D) f32
    q_t = (q_t * scale).astype(bf16)
    qh = jnp.transpose(q_t.reshape(tq, num_heads, d_k), (1, 0, 2))         # (H, TQ, dk)

    # ---- head-batched attention -------------------------------------------------
    s = jnp.einsum("hqd,hkd->hqk", qh, k_scr[...],
                   preferred_element_type=f32)                             # (H, TQ, S)
    s = s + mask_ref[...][None, :, :]          # additive mask: 0 = attend, -1e9 = masked
    s = s - jnp.max(s, axis=-1, keepdims=True)
    p = jnp.exp(s)
    # approx reciprocal on the EUP; fine for inference (documented precision trade-off)
    p = p * pl.reciprocal(jnp.sum(p, axis=-1, keepdims=True), approx=True)

    attn_h = jnp.einsum("hqk,hkd->hqd", p.astype(bf16), v_scr[...],
                        preferred_element_type=f32)                        # (H, TQ, dk)

    # Merge heads, then a single K = H*dk = D output projection on the MXU.
    attn_m = jnp.transpose(attn_h, (1, 0, 2)).reshape(tq, d_model)         # (TQ, D) f32
    attn = jnp.dot(attn_m.astype(bf16), wo_ref[...],
                   preferred_element_type=f32) + bo_ref[...]               # (TQ, D)

    x1 = x_t + attn                        # dropout = identity (eval)

    # ---- pre-norm + feed forward -------------------------------------------------
    z2 = _layer_norm(x1, ln2_g_ref[...], ln2_b_ref[...])
    h1 = jnp.maximum(
        jnp.dot(z2.astype(bf16), w1_ref[...],
                preferred_element_type=f32) + b1_ref[...], 0.0)
    ff = jnp.dot(h1.astype(bf16), w2_ref[...],
                 preferred_element_type=f32) + b2_ref[...]

    o_ref[0] = (x1 + ff).astype(o_ref.dtype)


def prepare_transformer_params(params, *, num_heads):
    """One-time weight preparation (concat / dtype casts), done outside the call."""
    bf16, f32 = jnp.bfloat16, jnp.float32
    del num_heads  # head reshape happens in-kernel; kept for API symmetry
    return {
        "ln1_g": params["ln1_g"].astype(f32), "ln1_b": params["ln1_b"].astype(f32),
        "wq": params["wq"].astype(bf16), "bq": params["bq"].astype(f32),
        "wkv": jnp.concatenate([params["wk"], params["wv"]], axis=1).astype(bf16),
        "bkv": jnp.concatenate([params["bk"], params["bv"]], axis=1).astype(f32),
        "wo": params["wo"].astype(bf16), "bo": params["bo"].astype(f32),
        "ln2_g": params["ln2_g"].astype(f32), "ln2_b": params["ln2_b"].astype(f32),
        "w1": params["w1"].astype(bf16), "b1": params["b1"].astype(f32),
        "w2": params["w2"].astype(bf16), "b2": params["b2"].astype(f32),
    }


def prepare_additive_mask(mask):
    """(S, S) mask (nonzero = attend) -> additive f32 mask (0 / -1e9)."""
    return jnp.where(mask != 0, 0.0, -1e9).astype(jnp.float32)


def _vmem_limit_bytes():
    # Generation-aware scoped-VMEM budget: physical capacity minus headroom
    # (~112 MiB on v5e/v6e with 128 MiB, ~56 MiB on v7x with 64 MiB/TC).
    try:
        cap = int(pltpu.get_tpu_info().vmem_capacity_bytes)
    except Exception:
        cap = 64 * 1024 * 1024
    headroom = min(16 * 1024 * 1024, cap // 8)
    return max(32 * 1024 * 1024, cap - headroom)


def transformer_layer(x, additive_mask, prepared, *, num_heads, tq=128):
    """x: (B, S, D) float32; additive_mask: (S, S) f32 (0 = attend, -1e9 = masked);
    prepared: output of prepare_transformer_params.  For v7x megacore use B >= 2."""
    B, S, D = x.shape
    assert D % num_heads == 0
    assert additive_mask.shape == (S, S), "mask is shared across the batch: (S, S)"
    tq = min(tq, S)
    assert S % tq == 0
    n_q_tiles = S // tq
    d_k = D // num_heads

    param_vals = [
        prepared["ln1_g"], prepared["ln1_b"],
        prepared["wq"], prepared["bq"], prepared["wkv"], prepared["bkv"],
        prepared["wo"], prepared["bo"],
        prepared["ln2_g"], prepared["ln2_b"],
        prepared["w1"], prepared["b1"], prepared["w2"], prepared["b2"],
    ]

    kernel = functools.partial(_transformer_layer_kernel, num_heads=num_heads)

    def _build(single_buffer_weights):
        def _const_spec(arr):
            # Constant index_map: block fetched once, never re-fetched across the grid.
            nd = arr.ndim
            imap = lambda b, qi, _nd=nd: (0,) * _nd
            if single_buffer_weights:
                # Single-buffer the never-changing weight blocks (halves their VMEM).
                return pl.BlockSpec(arr.shape, imap, pipeline_mode=pl.Buffered(1))
            return pl.BlockSpec(arr.shape, imap)

        in_specs = [
            # x: full sequence per batch element (re-DMA'd only when b changes).
            pl.BlockSpec((1, S, D), lambda b, qi: (b, 0, 0)),
            # additive mask rows for this query tile.
            pl.BlockSpec((tq, S), lambda b, qi: (qi, 0)),
        ] + [_const_spec(p) for p in param_vals]

        return pl.pallas_call(
            kernel,
            out_shape=jax.ShapeDtypeStruct((B, S, D), x.dtype),
            grid=(B, n_q_tiles),
            in_specs=in_specs,
            out_specs=pl.BlockSpec((1, tq, D), lambda b, qi: (b, qi, 0)),
            scratch_shapes=[
                pltpu.VMEM((num_heads, S, d_k), jnp.bfloat16),   # K, head-major
                pltpu.VMEM((num_heads, S, d_k), jnp.bfloat16),   # V, head-major
            ],
            compiler_params=pltpu.CompilerParams(
                # Query axis is "arbitrary": K/V scratch written at qi==0 is reused
                # across qi.  Batch axis stays "parallel" for v7x megacore.
                dimension_semantics=("parallel", "arbitrary"),
                vmem_limit_bytes=_vmem_limit_bytes()),
        )

    last_err = None
    for single_buffer in (True, False):
        try:
            out = _build(single_buffer)(x, additive_mask, *param_vals)
            return jax.block_until_ready(out)
        except Exception as e:  # fall back if pl.Buffered(1) is unsupported here
            last_err = e
    raise last_err


def _reference(x, mask, params, *, num_heads, compute_dtype=jnp.float32):
    """Pure-JAX reference. compute_dtype=bfloat16 mirrors the kernel's mixed
    precision (bf16 matmul operands, f32 accumulation); float32 is exact."""
    f32 = jnp.float32
    cd = compute_dtype

    def ln(v, g, b):
        mu = jnp.mean(v, axis=-1, keepdims=True)
        var = jnp.mean((v - mu) ** 2, axis=-1, keepdims=True)
        return (v - mu) * jax.lax.rsqrt(var + 1e-5) * g + b

    B, S, D = x.shape
    H = num_heads
    d_k = D // H
    scale = 1.0 / math.sqrt(d_k)

    wq, wk, wv = (params[n].astype(cd) for n in ("wq", "wk", "wv"))
    wo, w1, w2 = (params[n].astype(cd) for n in ("wo", "w1", "w2"))

    z = ln(x, params["ln1_g"], params["ln1_b"]).astype(cd)
    q = jnp.einsum("bsd,de->bse", z, wq, preferred_element_type=f32) + params["bq"]
    k = jnp.einsum("bsd,de->bse", z, wk, preferred_element_type=f32) + params["bk"]
    v = jnp.einsum("bsd,de->bse", z, wv, preferred_element_type=f32) + params["bv"]

    qh = q.reshape(B, S, H, d_k).astype(cd)
    kh = k.reshape(B, S, H, d_k).astype(cd)
    vh = v.reshape(B, S, H, d_k).astype(cd)
    s = jnp.einsum("bqhd,bkhd->bhqk", qh, kh, preferred_element_type=f32) * scale
    s = jnp.where(mask[None, None, :, :] != 0, s, -1e30)
    s = s - jnp.max(s, axis=-1, keepdims=True)
    p = jnp.exp(s)
    p = p / jnp.sum(p, axis=-1, keepdims=True)
    a = jnp.einsum("bhqk,bkhd->bqhd", p.astype(cd), vh,
                   preferred_element_type=f32).reshape(B, S, D)
    attn = jnp.einsum("bsd,de->bse", a.astype(cd), wo,
                      preferred_element_type=f32) + params["bo"]
    x1 = x + attn

    z2 = ln(x1, params["ln2_g"], params["ln2_b"]).astype(cd)
    h1 = jnp.maximum(
        jnp.einsum("bsd,df->bsf", z2, w1, preferred_element_type=f32) + params["b1"],
        0.0)
    ff = jnp.einsum("bsf,fd->bsd", h1.astype(cd), w2,
                    preferred_element_type=f32) + params["b2"]
    return x1 + ff


if __name__ == "__main__":
    # Small shapes; S=16 with tq=8 exercises the persistent K/V scratch across
    # two query tiles, and B=2 exercises the parallel batch axis.
    B, S, D, H, D_FF = 2, 16, 32, 4, 64

    key = jax.random.PRNGKey(0)
    ks = jax.random.split(key, 8)

    def w(k, shape):
        return (0.02 * jax.random.normal(k, shape)).astype(jnp.float32)

    params = {
        "ln1_g": jnp.ones((1, D), jnp.float32), "ln1_b": jnp.zeros((1, D), jnp.float32),
        "wq": w(ks[0], (D, D)), "bq": jnp.zeros((1, D), jnp.float32),
        "wk": w(ks[1], (D, D)), "bk": jnp.zeros((1, D), jnp.float32),
        "wv": w(ks[2], (D, D)), "bv": jnp.zeros((1, D), jnp.float32),
        "wo": w(ks[3], (D, D)), "bo": jnp.zeros((1, D), jnp.float32),
        "ln2_g": jnp.ones((1, D), jnp.float32), "ln2_b": jnp.zeros((1, D), jnp.float32),
        "w1": w(ks[4], (D, D_FF)), "b1": jnp.zeros((1, D_FF), jnp.float32),
        "w2": w(ks[5], (D_FF, D)), "b2": jnp.zeros((1, D), jnp.float32),
    }

    x = jax.random.normal(ks[6], (B, S, D), jnp.float32)
    # causal attention mask, shared across the batch: (S, S), 1 = attend
    mask = jnp.tril(jnp.ones((S, S), jnp.float32))

    prepared = prepare_transformer_params(params, num_heads=H)
    add_mask = prepare_additive_mask(mask)

    out = transformer_layer(x, add_mask, prepared, num_heads=H, tq=8)
    out = jax.block_until_ready(out)
    assert out.shape == (B, S, D)

    # Tight check vs a reference using the same bf16-operand / f32-accumulate
    # policy, plus a looser sanity check vs the exact float32 reference.
    ref_mp = _reference(x, mask, params, num_heads=H, compute_dtype=jnp.bfloat16)
    ref_fp = _reference(x, mask, params, num_heads=H, compute_dtype=jnp.float32)
    assert jnp.allclose(out, ref_mp, atol=2e-3, rtol=1e-2), \
        "mismatch vs matched-precision reference"
    assert jnp.allclose(out, ref_fp, atol=3e-2, rtol=3e-2), \
        "mismatch vs float32 reference"

    print("KERNEL_OK")
</pallas_src>

<mosaic_0001>
module attributes {stable_mosaic.version = 11 : i64} {
  func.func @_transformer_layer_kernel(%arg0: i32, %arg1: i32, %arg2: memref<1x16x32xf32, #tpu.memory_space<vmem>>, %arg3: memref<8x16xf32, #tpu.memory_space<vmem>>, %arg4: memref<1x32xf32, #tpu.memory_space<vmem>>, %arg5: memref<1x32xf32, #tpu.memory_space<vmem>>, %arg6: memref<32x32xbf16, #tpu.memory_space<vmem>>, %arg7: memref<1x32xf32, #tpu.memory_space<vmem>>, %arg8: memref<32x64xbf16, #tpu.memory_space<vmem>>, %arg9: memref<1x64xf32, #tpu.memory_space<vmem>>, %arg10: memref<32x32xbf16, #tpu.memory_space<vmem>>, %arg11: memref<1x32xf32, #tpu.memory_space<vmem>>, %arg12: memref<1x32xf32, #tpu.memory_space<vmem>>, %arg13: memref<1x32xf32, #tpu.memory_space<vmem>>, %arg14: memref<32x64xbf16, #tpu.memory_space<vmem>>, %arg15: memref<1x64xf32, #tpu.memory_space<vmem>>, %arg16: memref<64x32xbf16, #tpu.memory_space<vmem>>, %arg17: memref<1x32xf32, #tpu.memory_space<vmem>>, %arg18: memref<1x8x32xf32, #tpu.memory_space<vmem>>, %arg19: memref<4x16x8xbf16, #tpu.memory_space<vmem>>, %arg20: memref<4x16x8xbf16, #tpu.memory_space<vmem>>) attributes {dimension_semantics = [#tpu.dimension_semantics<parallel>, #tpu.dimension_semantics<arbitrary>], iteration_bounds = array<i64: 2, 2>, scalar_prefetch = 0 : i64, scratch_operands = 2 : i64, tpu.core_type = #tpu.core_type<tc>, window_params = [{transform_indices = @transform_0, window_bounds = array<i64: 1, 16, 32>}, {transform_indices = @transform_1, window_bounds = array<i64: 8, 16>}, {pipeline_mode = #tpu.pipeline_mode<synchronous>, transform_indices = @transform_2, window_bounds = array<i64: 1, 32>}, {pipeline_mode = #tpu.pipeline_mode<synchronous>, transform_indices = @transform_3, window_bounds = array<i64: 1, 32>}, {pipeline_mode = #tpu.pipeline_mode<synchronous>, transform_indices = @transform_4, window_bounds = array<i64: 32, 32>}, {pipeline_mode = #tpu.pipeline_mode<synchronous>, transform_indices = @transform_5, window_bounds = array<i64: 1, 32>}, {pipeline_mode = #tpu.pipeline_mode<synchronous>, transform_indices = @transform_6, window_bounds = array<i64: 32, 64>}, {pipeline_mode = #tpu.pipeline_mode<synchronous>, transform_indices = @transform_7, window_bounds = array<i64: 1, 64>}, {pipeline_mode = #tpu.pipeline_mode<synchronous>, transform_indices = @transform_8, window_bounds = array<i64: 32, 32>}, {pipeline_mode = #tpu.pipeline_mode<synchronous>, transform_indices = @transform_9, window_bounds = array<i64: 1, 32>}, {pipeline_mode = #tpu.pipeline_mode<synchronous>, transform_indices = @transform_10, window_bounds = array<i64: 1, 32>}, {pipeline_mode = #tpu.pipeline_mode<synchronous>, transform_indices = @transform_11, window_bounds = array<i64: 1, 32>}, {pipeline_mode = #tpu.pipeline_mode<synchronous>, transform_indices = @transform_12, window_bounds = array<i64: 32, 64>}, {pipeline_mode = #tpu.pipeline_mode<synchronous>, transform_indices = @transform_13, window_bounds = array<i64: 1, 64>}, {pipeline_mode = #tpu.pipeline_mode<synchronous>, transform_indices = @transform_14, window_bounds = array<i64: 64, 32>}, {pipeline_mode = #tpu.pipeline_mode<synchronous>, transform_indices = @transform_15, window_bounds = array<i64: 1, 32>}, {transform_indices = @transform_16, window_bounds = array<i64: 1, 8, 32>}]} {
    %c0_i32 = arith.constant 0 : i32
    %0 = arith.cmpi eq, %arg1, %c0_i32 : i32
    %1 = arith.extui %0 : i1 to i32
    %c0_i32_0 = arith.constant 0 : i32
    %2 = arith.cmpi ne, %1, %c0_i32_0 : i32
    scf.if %2 {
      %c0_56 = arith.constant 0 : index
      %c0_57 = arith.constant 0 : index
      %c0_58 = arith.constant 0 : index
      %113 = vector.load %arg2[%c0_56, %c0_57, %c0_58] : memref<1x16x32xf32, #tpu.memory_space<vmem>>, vector<1x16x32xf32>
      %114 = vector.shape_cast %113 : vector<1x16x32xf32> to vector<16x32xf32>
      %c0_59 = arith.constant 0 : index
      %c0_60 = arith.constant 0 : index
      %115 = vector.load %arg4[%c0_59, %c0_60] : memref<1x32xf32, #tpu.memory_space<vmem>>, vector<1x32xf32>
      %c0_61 = arith.constant 0 : index
      %c0_62 = arith.constant 0 : index
      %116 = vector.load %arg5[%c0_61, %c0_62] : memref<1x32xf32, #tpu.memory_space<vmem>>, vector<1x32xf32>
      %cst_63 = arith.constant dense<0.000000e+00> : vector<16xf32>
      %117 = vector.multi_reduction <add>, %114, %cst_63 [1] : vector<16x32xf32> to vector<16xf32>
      %118 = vector.shape_cast %117 : vector<16xf32> to vector<16x1xf32>
      %cst_64 = arith.constant 3.200000e+01 : f32
      %119 = vector.broadcast %cst_64 : f32 to vector<16x1xf32>
      %120 = arith.divf %118, %119 : vector<16x1xf32>
      %121 = vector.broadcast %120 : vector<16x1xf32> to vector<16x32xf32>
      %122 = arith.subf %114, %121 : vector<16x32xf32>
      %123 = arith.mulf %122, %122 : vector<16x32xf32>
      %cst_65 = arith.constant dense<0.000000e+00> : vector<16xf32>
      %124 = vector.multi_reduction <add>, %123, %cst_65 [1] : vector<16x32xf32> to vector<16xf32>
      %125 = vector.shape_cast %124 : vector<16xf32> to vector<16x1xf32>
      %cst_66 = arith.constant 3.200000e+01 : f32
      %126 = vector.broadcast %cst_66 : f32 to vector<16x1xf32>
      %127 = arith.divf %125, %126 : vector<16x1xf32>
      %128 = vector.broadcast %120 : vector<16x1xf32> to vector<16x32xf32>
      %129 = arith.subf %114, %128 : vector<16x32xf32>
      %cst_67 = arith.constant 9.99999974E-6 : f32
      %130 = vector.broadcast %cst_67 : f32 to vector<16x1xf32>
      %131 = arith.addf %127, %130 : vector<16x1xf32>
      %132 = math.rsqrt %131 : vector<16x1xf32>
      %133 = vector.broadcast %132 : vector<16x1xf32> to vector<16x32xf32>
      %134 = arith.mulf %129, %133 : vector<16x32xf32>
      %135 = vector.broadcast %115 : vector<1x32xf32> to vector<16x32xf32>
      %136 = arith.mulf %134, %135 : vector<16x32xf32>
      %137 = vector.broadcast %116 : vector<1x32xf32> to vector<16x32xf32>
      %138 = arith.addf %136, %137 : vector<16x32xf32>
      %139 = arith.truncf %138 : vector<16x32xf32> to vector<16x32xbf16>
      %c0_68 = arith.constant 0 : index
      %c0_69 = arith.constant 0 : index
      %140 = vector.load %arg8[%c0_68, %c0_69] : memref<32x64xbf16, #tpu.memory_space<vmem>>, vector<32x64xbf16>
      %cst_70 = arith.constant dense<0.000000e+00> : vector<16x64xf32>
      %141 = tpu.matmul %139, %140, %cst_70 {dimension_numbers = #tpu.dot_dimension_numbers<[1], [0], [0], [1], [0, 0, 1, 1], [], []>} : vector<16x32xbf16>, vector<32x64xbf16>, vector<16x64xf32> -> vector<16x64xf32>
      %c0_71 = arith.constant 0 : index
      %c0_72 = arith.constant 0 : index
      %142 = vector.load %arg9[%c0_71, %c0_72] : memref<1x64xf32, #tpu.memory_space<vmem>>, vector<1x64xf32>
      %143 = vector.broadcast %142 : vector<1x64xf32> to vector<16x64xf32>
      %144 = arith.addf %141, %143 : vector<16x64xf32>
      %145 = arith.truncf %144 : vector<16x64xf32> to vector<16x64xbf16>
      %146 = vector.extract_strided_slice %145 {offsets = [0, 0], sizes = [16, 32], strides = [1, 1]} : vector<16x64xbf16> to vector<16x32xbf16>
      %147 = vector.shape_cast %146 : vector<16x32xbf16> to vector<16x4x8xbf16>
      %148 = tpu.transpose %147, [1, 0, 2] : vector<16x4x8xbf16> -> vector<4x16x8xbf16>
      %c0_73 = arith.constant 0 : index
      %c0_74 = arith.constant 0 : index
      %c0_75 = arith.constant 0 : index
      %149 = vector.load %arg19[%c0_73, %c0_74, %c0_75] : memref<4x16x8xbf16, #tpu.memory_space<vmem>>, vector<4x16x8xbf16>
      tpu.vector_store %arg19[%c0_73, %c0_74, %c0_75], %148 {strides = array<i32>} : memref<4x16x8xbf16, #tpu.memory_space<vmem>>, vector<4x16x8xbf16>,
      %150 = vector.extract_strided_slice %145 {offsets = [0, 32], sizes = [16, 32], strides = [1, 1]} : vector<16x64xbf16> to vector<16x32xbf16>
      %151 = vector.shape_cast %150 : vector<16x32xbf16> to vector<16x4x8xbf16>
      %152 = tpu.transpose %151, [1, 0, 2] : vector<16x4x8xbf16> -> vector<4x16x8xbf16>
      %c0_76 = arith.constant 0 : index
      %c0_77 = arith.constant 0 : index
      %c0_78 = arith.constant 0 : index
      %153 = vector.load %arg20[%c0_76, %c0_77, %c0_78] : memref<4x16x8xbf16, #tpu.memory_space<vmem>>, vector<4x16x8xbf16>
      tpu.vector_store %arg20[%c0_76, %c0_77, %c0_78], %152 {strides = array<i32>} : memref<4x16x8xbf16, #tpu.memory_space<vmem>>, vector<4x16x8xbf16>,
    } else {
    }
    %c8_i32 = arith.constant 8 : i32
    %3 = arith.muli %arg1, %c8_i32 : i32
    %4 = tpu.assume_multiple %3, 8 : i32
    %c0 = arith.constant 0 : index
    %5 = arith.index_cast %4 : i32 to index
    %c0_1 = arith.constant 0 : index
    %6 = vector.load %arg2[%c0, %5, %c0_1] : memref<1x16x32xf32, #tpu.memory_space<vmem>>, vector<1x8x32xf32>
    %7 = vector.shape_cast %6 : vector<1x8x32xf32> to vector<8x32xf32>
    %c0_2 = arith.constant 0 : index
    %c0_3 = arith.constant 0 : index
    %8 = vector.load %arg4[%c0_2, %c0_3] : memref<1x32xf32, #tpu.memory_space<vmem>>, vector<1x32xf32>
    %c0_4 = arith.constant 0 : index
    %c0_5 = arith.constant 0 : index
    %9 = vector.load %arg5[%c0_4, %c0_5] : memref<1x32xf32, #tpu.memory_space<vmem>>, vector<1x32xf32>
    %cst = arith.constant dense<0.000000e+00> : vector<8xf32>
    %10 = vector.multi_reduction <add>, %7, %cst [1] : vector<8x32xf32> to vector<8xf32>
    %11 = vector.shape_cast %10 : vector<8xf32> to vector<8x1xf32>
    %cst_6 = arith.constant 3.200000e+01 : f32
    %12 = vector.broadcast %cst_6 : f32 to vector<8x1xf32>
    %13 = arith.divf %11, %12 : vector<8x1xf32>
    %14 = vector.broadcast %13 : vector<8x1xf32> to vector<8x32xf32>
    %15 = arith.subf %7, %14 : vector<8x32xf32>
    %16 = arith.mulf %15, %15 : vector<8x32xf32>
    %cst_7 = arith.constant dense<0.000000e+00> : vector<8xf32>
    %17 = vector.multi_reduction <add>, %16, %cst_7 [1] : vector<8x32xf32> to vector<8xf32>
    %18 = vector.shape_cast %17 : vector<8xf32> to vector<8x1xf32>
    %cst_8 = arith.constant 3.200000e+01 : f32
    %19 = vector.broadcast %cst_8 : f32 to vector<8x1xf32>
    %20 = arith.divf %18, %19 : vector<8x1xf32>
    %21 = vector.broadcast %13 : vector<8x1xf32> to vector<8x32xf32>
    %22 = arith.subf %7, %21 : vector<8x32xf32>
    %cst_9 = arith.constant 9.99999974E-6 : f32
    %23 = vector.broadcast %cst_9 : f32 to vector<8x1xf32>
    %24 = arith.addf %20, %23 : vector<8x1xf32>
    %25 = math.rsqrt %24 : vector<8x1xf32>
    %26 = vector.broadcast %25 : vector<8x1xf32> to vector<8x32xf32>
    %27 = arith.mulf %22, %26 : vector<8x32xf32>
    %28 = vector.broadcast %8 : vector<1x32xf32> to vector<8x32xf32>
    %29 = arith.mulf %27, %28 : vector<8x32xf32>
    %30 = vector.broadcast %9 : vector<1x32xf32> to vector<8x32xf32>
    %31 = arith.addf %29, %30 : vector<8x32xf32>
    %32 = arith.truncf %31 : vector<8x32xf32> to vector<8x32xbf16>
    %c0_10 = arith.constant 0 : index
    %c0_11 = arith.constant 0 : index
    %33 = vector.load %arg6[%c0_10, %c0_11] : memref<32x32xbf16, #tpu.memory_space<vmem>>, vector<32x32xbf16>
    %cst_12 = arith.constant dense<0.000000e+00> : vector<8x32xf32>
    %34 = tpu.matmul %32, %33, %cst_12 {dimension_numbers = #tpu.dot_dimension_numbers<[1], [0], [0], [1], [0, 0, 1, 1], [], []>} : vector<8x32xbf16>, vector<32x32xbf16>, vector<8x32xf32> -> vector<8x32xf32>
    %c0_13 = arith.constant 0 : index
    %c0_14 = arith.constant 0 : index
    %35 = vector.load %arg7[%c0_13, %c0_14] : memref<1x32xf32, #tpu.memory_space<vmem>>, vector<1x32xf32>
    %36 = vector.broadcast %35 : vector<1x32xf32> to vector<8x32xf32>
    %37 = arith.addf %34, %36 : vector<8x32xf32>
    %cst_15 = arith.constant 0.353553385 : f32
    %38 = vector.broadcast %cst_15 : f32 to vector<8x32xf32>
    %39 = arith.mulf %37, %38 : vector<8x32xf32>
    %40 = arith.truncf %39 : vector<8x32xf32> to vector<8x32xbf16>
    %41 = vector.shape_cast %40 : vector<8x32xbf16> to vector<8x4x8xbf16>
    %42 = tpu.transpose %41, [1, 0, 2] : vector<8x4x8xbf16> -> vector<4x8x8xbf16>
    %c0_16 = arith.constant 0 : index
    %c0_17 = arith.constant 0 : index
    %c0_18 = arith.constant 0 : index
    %43 = vector.load %arg19[%c0_16, %c0_17, %c0_18] : memref<4x16x8xbf16, #tpu.memory_space<vmem>>, vector<4x16x8xbf16>
    "tpu.trace_start"() <{level = 10 : i32, message = "hqd,hkd->hqk"}> : () -> ()
    %cst_19 = arith.constant dense<0.000000e+00> : vector<4x8x16xf32>
    %44 = tpu.matmul %42, %43, %cst_19 {dimension_numbers = #tpu.dot_dimension_numbers<[2], [2], [1], [1], [0, 0, 0, 1, 1, 1], [0], [0]>} : vector<4x8x8xbf16>, vector<4x16x8xbf16>, vector<4x8x16xf32> -> vector<4x8x16xf32>
    "tpu.trace_stop"() : () -> ()
    %c0_20 = arith.constant 0 : index
    %c0_21 = arith.constant 0 : index
    %45 = vector.load %arg3[%c0_20, %c0_21] : memref<8x16xf32, #tpu.memory_space<vmem>>, vector<8x16xf32>
    %46 = vector.shape_cast %45 : vector<8x16xf32> to vector<1x8x16xf32>
    %47 = vector.broadcast %46 : vector<1x8x16xf32> to vector<4x8x16xf32>
    %48 = arith.addf %44, %47 : vector<4x8x16xf32>
    %cst_22 = arith.constant dense<0xFF800000> : vector<4x8xf32>
    %49 = vector.multi_reduction <maximumf>, %48, %cst_22 [2] : vector<4x8x16xf32> to vector<4x8xf32>
    %50 = vector.shape_cast %49 : vector<4x8xf32> to vector<4x8x1xf32>
    %51 = vector.broadcast %50 : vector<4x8x1xf32> to vector<4x8x16xf32>
    %52 = arith.subf %48, %51 : vector<4x8x16xf32>
    %53 = math.exp %52 : vector<4x8x16xf32>
    %cst_23 = arith.constant dense<0.000000e+00> : vector<4x8xf32>
    %54 = vector.multi_reduction <add>, %53, %cst_23 [2] : vector<4x8x16xf32> to vector<4x8xf32>
    %55 = vector.shape_cast %54 : vector<4x8xf32> to vector<4x8x1xf32>
    %56 = tpu.reciprocal %55 {approx = true} : vector<4x8x1xf32> -> vector<4x8x1xf32>
    %57 = vector.broadcast %56 : vector<4x8x1xf32> to vector<4x8x16xf32>
    %58 = arith.mulf %53, %57 : vector<4x8x16xf32>
    %59 = arith.truncf %58 : vector<4x8x16xf32> to vector<4x8x16xbf16>
    %c0_24 = arith.constant 0 : index
    %c0_25 = arith.constant 0 : index
    %c0_26 = arith.constant 0 : index
    %60 = vector.load %arg20[%c0_24, %c0_25, %c0_26] : memref<4x16x8xbf16, #tpu.memory_space<vmem>>, vector<4x16x8xbf16>
    "tpu.trace_start"() <{level = 10 : i32, message = "hqk,hkd->hqd"}> : () -> ()
    %cst_27 = arith.constant dense<0.000000e+00> : vector<4x8x8xf32>
    %61 = tpu.matmul %59, %60, %cst_27 {dimension_numbers = #tpu.dot_dimension_numbers<[2], [1], [1], [2], [0, 0, 0, 1, 1, 2], [0], [0]>} : vector<4x8x16xbf16>, vector<4x16x8xbf16>, vector<4x8x8xf32> -> vector<4x8x8xf32>
    "tpu.trace_stop"() : () -> ()
    %62 = tpu.transpose %61, [1, 0, 2] : vector<4x8x8xf32> -> vector<8x4x8xf32>
    %63 = vector.shape_cast %62 : vector<8x4x8xf32> to vector<8x32xf32>
    %64 = arith.truncf %63 : vector<8x32xf32> to vector<8x32xbf16>
    %c0_28 = arith.constant 0 : index
    %c0_29 = arith.constant 0 : index
    %65 = vector.load %arg10[%c0_28, %c0_29] : memref<32x32xbf16, #tpu.memory_space<vmem>>, vector<32x32xbf16>
    %cst_30 = arith.constant dense<0.000000e+00> : vector<8x32xf32>
    %66 = tpu.matmul %64, %65, %cst_30 {dimension_numbers = #tpu.dot_dimension_numbers<[1], [0], [0], [1], [0, 0, 1, 1], [], []>} : vector<8x32xbf16>, vector<32x32xbf16>, vector<8x32xf32> -> vector<8x32xf32>
    %c0_31 = arith.constant 0 : index
    %c0_32 = arith.constant 0 : index
    %67 = vector.load %arg11[%c0_31, %c0_32] : memref<1x32xf32, #tpu.memory_space<vmem>>, vector<1x32xf32>
    %68 = vector.broadcast %67 : vector<1x32xf32> to vector<8x32xf32>
    %69 = arith.addf %66, %68 : vector<8x32xf32>
    %70 = arith.addf %7, %69 : vector<8x32xf32>
    %c0_33 = arith.constant 0 : index
    %c0_34 = arith.constant 0 : index
    %71 = vector.load %arg12[%c0_33, %c0_34] : memref<1x32xf32, #tpu.memory_space<vmem>>, vector<1x32xf32>
    %c0_35 = arith.constant 0 : index
    %c0_36 = arith.constant 0 : index
    %72 = vector.load %arg13[%c0_35, %c0_36] : memref<1x32xf32, #tpu.memory_space<vmem>>, vector<1x32xf32>
    %cst_37 = arith.constant dense<0.000000e+00> : vector<8xf32>
    %73 = vector.multi_reduction <add>, %70, %cst_37 [1] : vector<8x32xf32> to vector<8xf32>
    %74 = vector.shape_cast %73 : vector<8xf32> to vector<8x1xf32>
    %cst_38 = arith.constant 3.200000e+01 : f32
    %75 = vector.broadcast %cst_38 : f32 to vector<8x1xf32>
    %76 = arith.divf %74, %75 : vector<8x1xf32>
    %77 = vector.broadcast %76 : vector<8x1xf32> to vector<8x32xf32>
    %78 = arith.subf %70, %77 : vector<8x32xf32>
    %79 = arith.mulf %78, %78 : vector<8x32xf32>
    %cst_39 = arith.constant dense<0.000000e+00> : vector<8xf32>
    %80 = vector.multi_reduction <add>, %79, %cst_39 [1] : vector<8x32xf32> to vector<8xf32>
    %81 = vector.shape_cast %80 : vector<8xf32> to vector<8x1xf32>
    %cst_40 = arith.constant 3.200000e+01 : f32
    %82 = vector.broadcast %cst_40 : f32 to vector<8x1xf32>
    %83 = arith.divf %81, %82 : vector<8x1xf32>
    %84 = vector.broadcast %76 : vector<8x1xf32> to vector<8x32xf32>
    %85 = arith.subf %70, %84 : vector<8x32xf32>
    %cst_41 = arith.constant 9.99999974E-6 : f32
    %86 = vector.broadcast %cst_41 : f32 to vector<8x1xf32>
    %87 = arith.addf %83, %86 : vector<8x1xf32>
    %88 = math.rsqrt %87 : vector<8x1xf32>
    %89 = vector.broadcast %88 : vector<8x1xf32> to vector<8x32xf32>
    %90 = arith.mulf %85, %89 : vector<8x32xf32>
    %91 = vector.broadcast %71 : vector<1x32xf32> to vector<8x32xf32>
    %92 = arith.mulf %90, %91 : vector<8x32xf32>
    %93 = vector.broadcast %72 : vector<1x32xf32> to vector<8x32xf32>
    %94 = arith.addf %92, %93 : vector<8x32xf32>
    %95 = arith.truncf %94 : vector<8x32xf32> to vector<8x32xbf16>
    %c0_42 = arith.constant 0 : index
    %c0_43 = arith.constant 0 : index
    %96 = vector.load %arg14[%c0_42, %c0_43] : memref<32x64xbf16, #tpu.memory_space<vmem>>, vector<32x64xbf16>
    %cst_44 = arith.constant dense<0.000000e+00> : vector<8x64xf32>
    %97 = tpu.matmul %95, %96, %cst_44 {dimension_numbers = #tpu.dot_dimension_numbers<[1], [0], [0], [1], [0, 0, 1, 1], [], []>} : vector<8x32xbf16>, vector<32x64xbf16>, vector<8x64xf32> -> vector<8x64xf32>
    %c0_45 = arith.constant 0 : index
    %c0_46 = arith.constant 0 : index
    %98 = vector.load %arg15[%c0_45, %c0_46] : memref<1x64xf32, #tpu.memory_space<vmem>>, vector<1x64xf32>
    %99 = vector.broadcast %98 : vector<1x64xf32> to vector<8x64xf32>
    %100 = arith.addf %97, %99 : vector<8x64xf32>
    %cst_47 = arith.constant 0.000000e+00 : f32
    %101 = vector.broadcast %cst_47 : f32 to vector<8x64xf32>
    %102 = arith.maximumf %100, %101 : vector<8x64xf32>
    %103 = arith.truncf %102 : vector<8x64xf32> to vector<8x64xbf16>
    %c0_48 = arith.constant 0 : index
    %c0_49 = arith.constant 0 : index
    %104 = vector.load %arg16[%c0_48, %c0_49] : memref<64x32xbf16, #tpu.memory_space<vmem>>, vector<64x32xbf16>
    %cst_50 = arith.constant dense<0.000000e+00> : vector<8x32xf32>
    %105 = tpu.matmul %103, %104, %cst_50 {dimension_numbers = #tpu.dot_dimension_numbers<[1], [0], [0], [1], [0, 0, 1, 1], [], []>} : vector<8x64xbf16>, vector<64x32xbf16>, vector<8x32xf32> -> vector<8x32xf32>
    %c0_51 = arith.constant 0 : index
    %c0_52 = arith.constant 0 : index
    %106 = vector.load %arg17[%c0_51, %c0_52] : memref<1x32xf32, #tpu.memory_space<vmem>>, vector<1x32xf32>
    %107 = vector.broadcast %106 : vector<1x32xf32> to vector<8x32xf32>
    %108 = arith.addf %105, %107 : vector<8x32xf32>
    %109 = arith.addf %70, %108 : vector<8x32xf32>
    %c0_53 = arith.constant 0 : index
    %c0_54 = arith.constant 0 : index
    %c0_55 = arith.constant 0 : index
    %110 = vector.load %arg18[%c0_53, %c0_54, %c0_55] : memref<1x8x32xf32, #tpu.memory_space<vmem>>, vector<1x8x32xf32>
    %111 = vector.shape_cast %110 : vector<1x8x32xf32> to vector<8x32xf32>
    %112 = vector.shape_cast %109 : vector<8x32xf32> to vector<1x8x32xf32>
    tpu.vector_store %arg18[%c0_53, %c0_54, %c0_55], %112 {strides = array<i32>} : memref<1x8x32xf32, #tpu.memory_space<vmem>>, vector<1x8x32xf32>,
    return
  }
  func.func @transform_0(%arg0: i32, %arg1: i32) -> (i32, i32, i32) {
    %c0_i32 = arith.constant 0 : i32
    %c0_i32_0 = arith.constant 0 : i32
    %c0_i32_1 = arith.constant 0 : i32
    return %arg0, %c0_i32, %c0_i32_0 : i32, i32, i32
  }
  func.func @transform_1(%arg0: i32, %arg1: i32) -> (i32, i32) {
    %c0_i32 = arith.constant 0 : i32
    %c0_i32_0 = arith.constant 0 : i32
    return %arg1, %c0_i32 : i32, i32
  }
  func.func @transform_2(%arg0: i32, %arg1: i32) -> (i32, i32) {
    %c0_i32 = arith.constant 0 : i32
    %c0_i32_0 = arith.constant 0 : i32
    %c0_i32_1 = arith.constant 0 : i32
    return %c0_i32, %c0_i32_0 : i32, i32
  }
  func.func @transform_3(%arg0: i32, %arg1: i32) -> (i32, i32) {
    %c0_i32 = arith.constant 0 : i32
    %c0_i32_0 = arith.constant 0 : i32
    %c0_i32_1 = arith.constant 0 : i32
    return %c0_i32, %c0_i32_0 : i32, i32
  }
  func.func @transform_4(%arg0: i32, %arg1: i32) -> (i32, i32) {
    %c0_i32 = arith.constant 0 : i32
    %c0_i32_0 = arith.constant 0 : i32
    %c0_i32_1 = arith.constant 0 : i32
    return %c0_i32, %c0_i32_0 : i32, i32
  }
  func.func @transform_5(%arg0: i32, %arg1: i32) -> (i32, i32) {
    %c0_i32 = arith.constant 0 : i32
    %c0_i32_0 = arith.constant 0 : i32
    %c0_i32_1 = arith.constant 0 : i32
    return %c0_i32, %c0_i32_0 : i32, i32
  }
  func.func @transform_6(%arg0: i32, %arg1: i32) -> (i32, i32) {
    %c0_i32 = arith.constant 0 : i32
    %c0_i32_0 = arith.constant 0 : i32
    %c0_i32_1 = arith.constant 0 : i32
    return %c0_i32, %c0_i32_0 : i32, i32
  }
  func.func @transform_7(%arg0: i32, %arg1: i32) -> (i32, i32) {
    %c0_i32 = arith.constant 0 : i32
    %c0_i32_0 = arith.constant 0 : i32
    %c0_i32_1 = arith.constant 0 : i32
    return %c0_i32, %c0_i32_0 : i32, i32
  }
  func.func @transform_8(%arg0: i32, %arg1: i32) -> (i32, i32) {
    %c0_i32 = arith.constant 0 : i32
    %c0_i32_0 = arith.constant 0 : i32
    %c0_i32_1 = arith.constant 0 : i32
    return %c0_i32, %c0_i32_0 : i32, i32
  }
  func.func @transform_9(%arg0: i32, %arg1: i32) -> (i32, i32) {
    %c0_i32 = arith.constant 0 : i32
    %c0_i32_0 = arith.constant 0 : i32
    %c0_i32_1 = arith.constant 0 : i32
    return %c0_i32, %c0_i32_0 : i32, i32
  }
  func.func @transform_10(%arg0: i32, %arg1: i32) -> (i32, i32) {
    %c0_i32 = arith.constant 0 : i32
    %c0_i32_0 = arith.constant 0 : i32
    %c0_i32_1 = arith.constant 0 : i32
    return %c0_i32, %c0_i32_0 : i32, i32
  }
  func.func @transform_11(%arg0: i32, %arg1: i32) -> (i32, i32) {
    %c0_i32 = arith.constant 0 : i32
    %c0_i32_0 = arith.constant 0 : i32
    %c0_i32_1 = arith.constant 0 : i32
    return %c0_i32, %c0_i32_0 : i32, i32
  }
  func.func @transform_12(%arg0: i32, %arg1: i32) -> (i32, i32) {
    %c0_i32 = arith.constant 0 : i32
    %c0_i32_0 = arith.constant 0 : i32
    %c0_i32_1 = arith.constant 0 : i32
    return %c0_i32, %c0_i32_0 : i32, i32
  }
  func.func @transform_13(%arg0: i32, %arg1: i32) -> (i32, i32) {
    %c0_i32 = arith.constant 0 : i32
    %c0_i32_0 = arith.constant 0 : i32
    %c0_i32_1 = arith.constant 0 : i32
    return %c0_i32, %c0_i32_0 : i32, i32
  }
  func.func @transform_14(%arg0: i32, %arg1: i32) -> (i32, i32) {
    %c0_i32 = arith.constant 0 : i32
    %c0_i32_0 = arith.constant 0 : i32
    %c0_i32_1 = arith.constant 0 : i32
    return %c0_i32, %c0_i32_0 : i32, i32
  }
  func.func @transform_15(%arg0: i32, %arg1: i32) -> (i32, i32) {
    %c0_i32 = arith.constant 0 : i32
    %c0_i32_0 = arith.constant 0 : i32
    %c0_i32_1 = arith.constant 0 : i32
    return %c0_i32, %c0_i32_0 : i32, i32
  }
  func.func @transform_16(%arg0: i32, %arg1: i32) -> (i32, i32, i32) {
    %c0_i32 = arith.constant 0 : i32
    %c0_i32_0 = arith.constant 0 : i32
    return %arg0, %arg1, %c0_i32 : i32, i32, i32
  }
}

module attributes {stable_mosaic.version = 11 : i64} {
  func.func @_transformer_layer_kernel(%arg0: i32, %arg1: i32, %arg2: memref<1x16x32xf32, #tpu.memory_space<vmem>>, %arg3: memref<8x16xf32, #tpu.memory_space<vmem>>, %arg4: memref<1x32xf32, #tpu.memory_space<vmem>>, %arg5: memref<1x32xf32, #tpu.memory_space<vmem>>, %arg6: memref<32x32xbf16, #tpu.memory_space<vmem>>, %arg7: memref<1x32xf32, #tpu.memory_space<vmem>>, %arg8: memref<32x64xbf16, #tpu.memory_space<vmem>>, %arg9: memref<1x64xf32, #tpu.memory_space<vmem>>, %arg10: memref<32x32xbf16, #tpu.memory_space<vmem>>, %arg11: memref<1x32xf32, #tpu.memory_space<vmem>>, %arg12: memref<1x32xf32, #tpu.memory_space<vmem>>, %arg13: memref<1x32xf32, #tpu.memory_space<vmem>>, %arg14: memref<32x64xbf16, #tpu.memory_space<vmem>>, %arg15: memref<1x64xf32, #tpu.memory_space<vmem>>, %arg16: memref<64x32xbf16, #tpu.memory_space<vmem>>, %arg17: memref<1x32xf32, #tpu.memory_space<vmem>>, %arg18: memref<1x8x32xf32, #tpu.memory_space<vmem>>, %arg19: memref<4x16x8xbf16, #tpu.memory_space<vmem>>, %arg20: memref<4x16x8xbf16, #tpu.memory_space<vmem>>) attributes {dimension_semantics = [#tpu.dimension_semantics<parallel>, #tpu.dimension_semantics<arbitrary>], iteration_bounds = array<i64: 2, 2>, scalar_prefetch = 0 : i64, scratch_operands = 2 : i64, tpu.core_type = #tpu.core_type<tc>, window_params = [{transform_indices = @transform_0, window_bounds = array<i64: 1, 16, 32>}, {transform_indices = @transform_1, window_bounds = array<i64: 8, 16>}, {pipeline_mode = #tpu.pipeline_mode<synchronous>, transform_indices = @transform_2, window_bounds = array<i64: 1, 32>}, {pipeline_mode = #tpu.pipeline_mode<synchronous>, transform_indices = @transform_3, window_bounds = array<i64: 1, 32>}, {pipeline_mode = #tpu.pipeline_mode<synchronous>, transform_indices = @transform_4, window_bounds = array<i64: 32, 32>}, {pipeline_mode = #tpu.pipeline_mode<synchronous>, transform_indices = @transform_5, window_bounds = array<i64: 1, 32>}, {pipeline_mode = #tpu.pipeline_mode<synchronous>, transform_indices = @transform_6, window_bounds = array<i64: 32, 64>}, {pipeline_mode = #tpu.pipeline_mode<synchronous>, transform_indices = @transform_7, window_bounds = array<i64: 1, 64>}, {pipeline_mode = #tpu.pipeline_mode<synchronous>, transform_indices = @transform_8, window_bounds = array<i64: 32, 32>}, {pipeline_mode = #tpu.pipeline_mode<synchronous>, transform_indices = @transform_9, window_bounds = array<i64: 1, 32>}, {pipeline_mode = #tpu.pipeline_mode<synchronous>, transform_indices = @transform_10, window_bounds = array<i64: 1, 32>}, {pipeline_mode = #tpu.pipeline_mode<synchronous>, transform_indices = @transform_11, window_bounds = array<i64: 1, 32>}, {pipeline_mode = #tpu.pipeline_mode<synchronous>, transform_indices = @transform_12, window_bounds = array<i64: 32, 64>}, {pipeline_mode = #tpu.pipeline_mode<synchronous>, transform_indices = @transform_13, window_bounds = array<i64: 1, 64>}, {pipeline_mode = #tpu.pipeline_mode<synchronous>, transform_indices = @transform_14, window_bounds = array<i64: 64, 32>}, {pipeline_mode = #tpu.pipeline_mode<synchronous>, transform_indices = @transform_15, window_bounds = array<i64: 1, 32>}, {transform_indices = @transform_16, window_bounds = array<i64: 1, 8, 32>}]} {
    %c0_i32 = arith.constant 0 : i32
    %0 = arith.cmpi eq, %arg1, %c0_i32 : i32
    %1 = arith.extui %0 : i1 to i32
    %c0_i32_0 = arith.constant 0 : i32
    %2 = arith.cmpi ne, %1, %c0_i32_0 : i32
    scf.if %2 {
      %c0_56 = arith.constant 0 : index
      %c0_57 = arith.constant 0 : index
      %c0_58 = arith.constant 0 : index
      %113 = vector.load %arg2[%c0_56, %c0_57, %c0_58] : memref<1x16x32xf32, #tpu.memory_space<vmem>>, vector<1x16x32xf32>
      %114 = vector.shape_cast %113 : vector<1x16x32xf32> to vector<16x32xf32>
      %c0_59 = arith.constant 0 : index
      %c0_60 = arith.constant 0 : index
      %115 = vector.load %arg4[%c0_59, %c0_60] : memref<1x32xf32, #tpu.memory_space<vmem>>, vector<1x32xf32>
      %c0_61 = arith.constant 0 : index
      %c0_62 = arith.constant 0 : index
      %116 = vector.load %arg5[%c0_61, %c0_62] : memref<1x32xf32, #tpu.memory_space<vmem>>, vector<1x32xf32>
      %cst_63 = arith.constant dense<0.000000e+00> : vector<16xf32>
      %117 = vector.multi_reduction <add>, %114, %cst_63 [1] : vector<16x32xf32> to vector<16xf32>
      %118 = vector.shape_cast %117 : vector<16xf32> to vector<16x1xf32>
      %cst_64 = arith.constant 3.200000e+01 : f32
      %119 = vector.broadcast %cst_64 : f32 to vector<16x1xf32>
      %120 = arith.divf %118, %119 : vector<16x1xf32>
      %121 = vector.broadcast %120 : vector<16x1xf32> to vector<16x32xf32>
      %122 = arith.subf %114, %121 : vector<16x32xf32>
      %123 = arith.mulf %122, %122 : vector<16x32xf32>
      %cst_65 = arith.constant dense<0.000000e+00> : vector<16xf32>
      %124 = vector.multi_reduction <add>, %123, %cst_65 [1] : vector<16x32xf32> to vector<16xf32>
      %125 = vector.shape_cast %124 : vector<16xf32> to vector<16x1xf32>
      %cst_66 = arith.constant 3.200000e+01 : f32
      %126 = vector.broadcast %cst_66 : f32 to vector<16x1xf32>
      %127 = arith.divf %125, %126 : vector<16x1xf32>
      %128 = vector.broadcast %120 : vector<16x1xf32> to vector<16x32xf32>
      %129 = arith.subf %114, %128 : vector<16x32xf32>
      %cst_67 = arith.constant 9.99999974E-6 : f32
      %130 = vector.broadcast %cst_67 : f32 to vector<16x1xf32>
      %131 = arith.addf %127, %130 : vector<16x1xf32>
      %132 = math.rsqrt %131 : vector<16x1xf32>
      %133 = vector.broadcast %132 : vector<16x1xf32> to vector<16x32xf32>
      %134 = arith.mulf %129, %133 : vector<16x32xf32>
      %135 = vector.broadcast %115 : vector<1x32xf32> to vector<16x32xf32>
      %136 = arith.mulf %134, %135 : vector<16x32xf32>
      %137 = vector.broadcast %116 : vector<1x32xf32> to vector<16x32xf32>
      %138 = arith.addf %136, %137 : vector<16x32xf32>
      %139 = arith.truncf %138 : vector<16x32xf32> to vector<16x32xbf16>
      %c0_68 = arith.constant 0 : index
      %c0_69 = arith.constant 0 : index
      %140 = vector.load %arg8[%c0_68, %c0_69] : memref<32x64xbf16, #tpu.memory_space<vmem>>, vector<32x64xbf16>
      %cst_70 = arith.constant dense<0.000000e+00> : vector<16x64xf32>
      %141 = tpu.matmul %139, %140, %cst_70 {dimension_numbers = #tpu.dot_dimension_numbers<[1], [0], [0], [1], [0, 0, 1, 1], [], []>} : vector<16x32xbf16>, vector<32x64xbf16>, vector<16x64xf32> -> vector<16x64xf32>
      %c0_71 = arith.constant 0 : index
      %c0_72 = arith.constant 0 : index
      %142 = vector.load %arg9[%c0_71, %c0_72] : memref<1x64xf32, #tpu.memory_space<vmem>>, vector<1x64xf32>
      %143 = vector.broadcast %142 : vector<1x64xf32> to vector<16x64xf32>
      %144 = arith.addf %141, %143 : vector<16x64xf32>
      %145 = arith.truncf %144 : vector<16x64xf32> to vector<16x64xbf16>
      %146 = vector.extract_strided_slice %145 {offsets = [0, 0], sizes = [16, 32], strides = [1, 1]} : vector<16x64xbf16> to vector<16x32xbf16>
      %147 = vector.shape_cast %146 : vector<16x32xbf16> to vector<16x4x8xbf16>
      %148 = tpu.transpose %147, [1, 0, 2] : vector<16x4x8xbf16> -> vector<4x16x8xbf16>
      %c0_73 = arith.constant 0 : index
      %c0_74 = arith.constant 0 : index
      %c0_75 = arith.constant 0 : index
      %149 = vector.load %arg19[%c0_73, %c0_74, %c0_75] : memref<4x16x8xbf16, #tpu.memory_space<vmem>>, vector<4x16x8xbf16>
      tpu.vector_store %arg19[%c0_73, %c0_74, %c0_75], %148 {strides = array<i32>} : memref<4x16x8xbf16, #tpu.memory_space<vmem>>, vector<4x16x8xbf16>,
      %150 = vector.extract_strided_slice %145 {offsets = [0, 32], sizes = [16, 32], strides = [1, 1]} : vector<16x64xbf16> to vector<16x32xbf16>
      %151 = vector.shape_cast %150 : vector<16x32xbf16> to vector<16x4x8xbf16>
      %152 = tpu.transpose %151, [1, 0, 2] : vector<16x4x8xbf16> -> vector<4x16x8xbf16>
      %c0_76 = arith.constant 0 : index
      %c0_77 = arith.constant 0 : index
      %c0_78 = arith.constant 0 : index
      %153 = vector.load %arg20[%c0_76, %c0_77, %c0_78] : memref<4x16x8xbf16, #tpu.memory_space<vmem>>, vector<4x16x8xbf16>
      tpu.vector_store %arg20[%c0_76, %c0_77, %c0_78], %152 {strides = array<i32>} : memref<4x16x8xbf16, #tpu.memory_space<vmem>>, vector<4x16x8xbf16>,
    } else {
    }
    %c8_i32 = arith.constant 8 : i32
    %3 = arith.muli %arg1, %c8_i32 : i32
    %4 = tpu.assume_multiple %3, 8 : i32
    %c0 = arith.constant 0 : index
    %5 = arith.index_cast %4 : i32 to index
    %c0_1 = arith.constant 0 : index
    %6 = vector.load %arg2[%c0, %5, %c0_1] : memref<1x16x32xf32, #tpu.memory_space<vmem>>, vector<1x8x32xf32>
    %7 = vector.shape_cast %6 : vector<1x8x32xf32> to vector<8x32xf32>
    %c0_2 = arith.constant 0 : index
    %c0_3 = arith.constant 0 : index
    %8 = vector.load %arg4[%c0_2, %c0_3] : memref<1x32xf32, #tpu.memory_space<vmem>>, vector<1x32xf32>
    %c0_4 = arith.constant 0 : index
    %c0_5 = arith.constant 0 : index
    %9 = vector.load %arg5[%c0_4, %c0_5] : memref<1x32xf32, #tpu.memory_space<vmem>>, vector<1x32xf32>
    %cst = arith.constant dense<0.000000e+00> : vector<8xf32>
    %10 = vector.multi_reduction <add>, %7, %cst [1] : vector<8x32xf32> to vector<8xf32>
    %11 = vector.shape_cast %10 : vector<8xf32> to vector<8x1xf32>
    %cst_6 = arith.constant 3.200000e+01 : f32
    %12 = vector.broadcast %cst_6 : f32 to vector<8x1xf32>
    %13 = arith.divf %11, %12 : vector<8x1xf32>
    %14 = vector.broadcast %13 : vector<8x1xf32> to vector<8x32xf32>
    %15 = arith.subf %7, %14 : vector<8x32xf32>
    %16 = arith.mulf %15, %15 : vector<8x32xf32>
    %cst_7 = arith.constant dense<0.000000e+00> : vector<8xf32>
    %17 = vector.multi_reduction <add>, %16, %cst_7 [1] : vector<8x32xf32> to vector<8xf32>
    %18 = vector.shape_cast %17 : vector<8xf32> to vector<8x1xf32>
    %cst_8 = arith.constant 3.200000e+01 : f32
    %19 = vector.broadcast %cst_8 : f32 to vector<8x1xf32>
    %20 = arith.divf %18, %19 : vector<8x1xf32>
    %21 = vector.broadcast %13 : vector<8x1xf32> to vector<8x32xf32>
    %22 = arith.subf %7, %21 : vector<8x32xf32>
    %cst_9 = arith.constant 9.99999974E-6 : f32
    %23 = vector.broadcast %cst_9 : f32 to vector<8x1xf32>
    %24 = arith.addf %20, %23 : vector<8x1xf32>
    %25 = math.rsqrt %24 : vector<8x1xf32>
    %26 = vector.broadcast %25 : vector<8x1xf32> to vector<8x32xf32>
    %27 = arith.mulf %22, %26 : vector<8x32xf32>
    %28 = vector.broadcast %8 : vector<1x32xf32> to vector<8x32xf32>
    %29 = arith.mulf %27, %28 : vector<8x32xf32>
    %30 = vector.broadcast %9 : vector<1x32xf32> to vector<8x32xf32>
    %31 = arith.addf %29, %30 : vector<8x32xf32>
    %32 = arith.truncf %31 : vector<8x32xf32> to vector<8x32xbf16>
    %c0_10 = arith.constant 0 : index
    %c0_11 = arith.constant 0 : index
    %33 = vector.load %arg6[%c0_10, %c0_11] : memref<32x32xbf16, #tpu.memory_space<vmem>>, vector<32x32xbf16>
    %cst_12 = arith.constant dense<0.000000e+00> : vector<8x32xf32>
    %34 = tpu.matmul %32, %33, %cst_12 {dimension_numbers = #tpu.dot_dimension_numbers<[1], [0], [0], [1], [0, 0, 1, 1], [], []>} : vector<8x32xbf16>, vector<32x32xbf16>, vector<8x32xf32> -> vector<8x32xf32>
    %c0_13 = arith.constant 0 : index
    %c0_14 = arith.constant 0 : index
    %35 = vector.load %arg7[%c0_13, %c0_14] : memref<1x32xf32, #tpu.memory_space<vmem>>, vector<1x32xf32>
    %36 = vector.broadcast %35 : vector<1x32xf32> to vector<8x32xf32>
    %37 = arith.addf %34, %36 : vector<8x32xf32>
    %cst_15 = arith.constant 0.353553385 : f32
    %38 = vector.broadcast %cst_15 : f32 to vector<8x32xf32>
    %39 = arith.mulf %37, %38 : vector<8x32xf32>
    %40 = arith.truncf %39 : vector<8x32xf32> to vector<8x32xbf16>
    %41 = vector.shape_cast %40 : vector<8x32xbf16> to vector<8x4x8xbf16>
    %42 = tpu.transpose %41, [1, 0, 2] : vector<8x4x8xbf16> -> vector<4x8x8xbf16>
    %c0_16 = arith.constant 0 : index
    %c0_17 = arith.constant 0 : index
    %c0_18 = arith.constant 0 : index
    %43 = vector.load %arg19[%c0_16, %c0_17, %c0_18] : memref<4x16x8xbf16, #tpu.memory_space<vmem>>, vector<4x16x8xbf16>
    "tpu.trace_start"() <{level = 10 : i32, message = "hqd,hkd->hqk"}> : () -> ()
    %cst_19 = arith.constant dense<0.000000e+00> : vector<4x8x16xf32>
    %44 = tpu.matmul %42, %43, %cst_19 {dimension_numbers = #tpu.dot_dimension_numbers<[2], [2], [1], [1], [0, 0, 0, 1, 1, 1], [0], [0]>} : vector<4x8x8xbf16>, vector<4x16x8xbf16>, vector<4x8x16xf32> -> vector<4x8x16xf32>
    "tpu.trace_stop"() : () -> ()
    %c0_20 = arith.constant 0 : index
    %c0_21 = arith.constant 0 : index
    %45 = vector.load %arg3[%c0_20, %c0_21] : memref<8x16xf32, #tpu.memory_space<vmem>>, vector<8x16xf32>
    %46 = vector.shape_cast %45 : vector<8x16xf32> to vector<1x8x16xf32>
    %47 = vector.broadcast %46 : vector<1x8x16xf32> to vector<4x8x16xf32>
    %48 = arith.addf %44, %47 : vector<4x8x16xf32>
    %cst_22 = arith.constant dense<0xFF800000> : vector<4x8xf32>
    %49 = vector.multi_reduction <maximumf>, %48, %cst_22 [2] : vector<4x8x16xf32> to vector<4x8xf32>
    %50 = vector.shape_cast %49 : vector<4x8xf32> to vector<4x8x1xf32>
    %51 = vector.broadcast %50 : vector<4x8x1xf32> to vector<4x8x16xf32>
    %52 = arith.subf %48, %51 : vector<4x8x16xf32>
    %53 = math.exp %52 : vector<4x8x16xf32>
    %cst_23 = arith.constant dense<0.000000e+00> : vector<4x8xf32>
    %54 = vector.multi_reduction <add>, %53, %cst_23 [2] : vector<4x8x16xf32> to vector<4x8xf32>
    %55 = vector.shape_cast %54 : vector<4x8xf32> to vector<4x8x1xf32>
    %56 = tpu.reciprocal %55 {approx = true} : vector<4x8x1xf32> -> vector<4x8x1xf32>
    %57 = vector.broadcast %56 : vector<4x8x1xf32> to vector<4x8x16xf32>
    %58 = arith.mulf %53, %57 : vector<4x8x16xf32>
    %59 = arith.truncf %58 : vector<4x8x16xf32> to vector<4x8x16xbf16>
    %c0_24 = arith.constant 0 : index
    %c0_25 = arith.constant 0 : index
    %c0_26 = arith.constant 0 : index
    %60 = vector.load %arg20[%c0_24, %c0_25, %c0_26] : memref<4x16x8xbf16, #tpu.memory_space<vmem>>, vector<4x16x8xbf16>
    "tpu.trace_start"() <{level = 10 : i32, message = "hqk,hkd->hqd"}> : () -> ()
    %cst_27 = arith.constant dense<0.000000e+00> : vector<4x8x8xf32>
    %61 = tpu.matmul %59, %60, %cst_27 {dimension_numbers = #tpu.dot_dimension_numbers<[2], [1], [1], [2], [0, 0, 0, 1, 1, 2], [0], [0]>} : vector<4x8x16xbf16>, vector<4x16x8xbf16>, vector<4x8x8xf32> -> vector<4x8x8xf32>
    "tpu.trace_stop"() : () -> ()
    %62 = tpu.transpose %61, [1, 0, 2] : vector<4x8x8xf32> -> vector<8x4x8xf32>
    %63 = vector.shape_cast %62 : vector<8x4x8xf32> to vector<8x32xf32>
    %64 = arith.truncf %63 : vector<8x32xf32> to vector<8x32xbf16>
    %c0_28 = arith.constant 0 : index
    %c0_29 = arith.constant 0 : index
    %65 = vector.load %arg10[%c0_28, %c0_29] : memref<32x32xbf16, #tpu.memory_space<vmem>>, vector<32x32xbf16>
    %cst_30 = arith.constant dense<0.000000e+00> : vector<8x32xf32>
    %66 = tpu.matmul %64, %65, %cst_30 {dimension_numbers = #tpu.dot_dimension_numbers<[1], [0], [0], [1], [0, 0, 1, 1], [], []>} : vector<8x32xbf16>, vector<32x32xbf16>, vector<8x32xf32> -> vector<8x32xf32>
    %c0_31 = arith.constant 0 : index
    %c0_32 = arith.constant 0 : index
    %67 = vector.load %arg11[%c0_31, %c0_32] : memref<1x32xf32, #tpu.memory_space<vmem>>, vector<1x32xf32>
    %68 = vector.broadcast %67 : vector<1x32xf32> to vector<8x32xf32>
    %69 = arith.addf %66, %68 : vector<8x32xf32>
    %70 = arith.addf %7, %69 : vector<8x32xf32>
    %c0_33 = arith.constant 0 : index
    %c0_34 = arith.constant 0 : index
    %71 = vector.load %arg12[%c0_33, %c0_34] : memref<1x32xf32, #tpu.memory_space<vmem>>, vector<1x32xf32>
    %c0_35 = arith.constant 0 : index
    %c0_36 = arith.constant 0 : index
    %72 = vector.load %arg13[%c0_35, %c0_36] : memref<1x32xf32, #tpu.memory_space<vmem>>, vector<1x32xf32>
    %cst_37 = arith.constant dense<0.000000e+00> : vector<8xf32>
    %73 = vector.multi_reduction <add>, %70, %cst_37 [1] : vector<8x32xf32> to vector<8xf32>
    %74 = vector.shape_cast %73 : vector<8xf32> to vector<8x1xf32>
    %cst_38 = arith.constant 3.200000e+01 : f32
    %75 = vector.broadcast %cst_38 : f32 to vector<8x1xf32>
    %76 = arith.divf %74, %75 : vector<8x1xf32>
    %77 = vector.broadcast %76 : vector<8x1xf32> to vector<8x32xf32>
    %78 = arith.subf %70, %77 : vector<8x32xf32>
    %79 = arith.mulf %78, %78 : vector<8x32xf32>
    %cst_39 = arith.constant dense<0.000000e+00> : vector<8xf32>
    %80 = vector.multi_reduction <add>, %79, %cst_39 [1] : vector<8x32xf32> to vector<8xf32>
    %81 = vector.shape_cast %80 : vector<8xf32> to vector<8x1xf32>
    %cst_40 = arith.constant 3.200000e+01 : f32
    %82 = vector.broadcast %cst_40 : f32 to vector<8x1xf32>
    %83 = arith.divf %81, %82 : vector<8x1xf32>
    %84 = vector.broadcast %76 : vector<8x1xf32> to vector<8x32xf32>
    %85 = arith.subf %70, %84 : vector<8x32xf32>
    %cst_41 = arith.constant 9.99999974E-6 : f32
    %86 = vector.broadcast %cst_41 : f32 to vector<8x1xf32>
    %87 = arith.addf %83, %86 : vector<8x1xf32>
    %88 = math.rsqrt %87 : vector<8x1xf32>
    %89 = vector.broadcast %88 : vector<8x1xf32> to vector<8x32xf32>
    %90 = arith.mulf %85, %89 : vector<8x32xf32>
    %91 = vector.broadcast %71 : vector<1x32xf32> to vector<8x32xf32>
    %92 = arith.mulf %90, %91 : vector<8x32xf32>
    %93 = vector.broadcast %72 : vector<1x32xf32> to vector<8x32xf32>
    %94 = arith.addf %92, %93 : vector<8x32xf32>
    %95 = arith.truncf %94 : vector<8x32xf32> to vector<8x32xbf16>
    %c0_42 = arith.constant 0 : index
    %c0_43 = arith.constant 0 : index
    %96 = vector.load %arg14[%c0_42, %c0_43] : memref<32x64xbf16, #tpu.memory_space<vmem>>, vector<32x64xbf16>
    %cst_44 = arith.constant dense<0.000000e+00> : vector<8x64xf32>
    %97 = tpu.matmul %95, %96, %cst_44 {dimension_numbers = #tpu.dot_dimension_numbers<[1], [0], [0], [1], [0, 0, 1, 1], [], []>} : vector<8x32xbf16>, vector<32x64xbf16>, vector<8x64xf32> -> vector<8x64xf32>
    %c0_45 = arith.constant 0 : index
    %c0_46 = arith.constant 0 : index
    %98 = vector.load %arg15[%c0_45, %c0_46] : memref<1x64xf32, #tpu.memory_space<vmem>>, vector<1x64xf32>
    %99 = vector.broadcast %98 : vector<1x64xf32> to vector<8x64xf32>
    %100 = arith.addf %97, %99 : vector<8x64xf32>
    %cst_47 = arith.constant 0.000000e+00 : f32
    %101 = vector.broadcast %cst_47 : f32 to vector<8x64xf32>
    %102 = arith.maximumf %100, %101 : vector<8x64xf32>
    %103 = arith.truncf %102 : vector<8x64xf32> to vector<8x64xbf16>
    %c0_48 = arith.constant 0 : index
    %c0_49 = arith.constant 0 : index
    %104 = vector.load %arg16[%c0_48, %c0_49] : memref<64x32xbf16, #tpu.memory_space<vmem>>, vector<64x32xbf16>
    %cst_50 = arith.constant dense<0.000000e+00> : vector<8x32xf32>
    %105 = tpu.matmul %103, %104, %cst_50 {dimension_numbers = #tpu.dot_dimension_numbers<[1], [0], [0], [1], [0, 0, 1, 1], [], []>} : vector<8x64xbf16>, vector<64x32xbf16>, vector<8x32xf32> -> vector<8x32xf32>
    %c0_51 = arith.constant 0 : index
    %c0_52 = arith.constant 0 : index
    %106 = vector.load %arg17[%c0_51, %c0_52] : memref<1x32xf32, #tpu.memory_space<vmem>>, vector<1x32xf32>
    %107 = vector.broadcast %106 : vector<1x32xf32> to vector<8x32xf32>
    %108 = arith.addf %105, %107 : vector<8x32xf32>
    %109 = arith.addf %70, %108 : vector<8x32xf32>
    %c0_53 = arith.constant 0 : index
    %c0_54 = arith.constant 0 : index
    %c0_55 = arith.constant 0 : index
    %110 = vector.load %arg18[%c0_53, %c0_54, %c0_55] : memref<1x8x32xf32, #tpu.memory_space<vmem>>, vector<1x8x32xf32>
    %111 = vector.shape_cast %110 : vector<1x8x32xf32> to vector<8x32xf32>
    %112 = vector.shape_cast %109 : vector<8x32xf32> to vector<1x8x32xf32>
    tpu.vector_store %arg18[%c0_53, %c0_54, %c0_55], %112 {strides = array<i32>} : memref<1x8x32xf32, #tpu.memory_space<vmem>>, vector<1x8x32xf32>,
    return
  }
  func.func @transform_0(%arg0: i32, %arg1: i32) -> (i32, i32, i32) {
    %c0_i32 = arith.constant 0 : i32
    %c0_i32_0 = arith.constant 0 : i32
    %c0_i32_1 = arith.constant 0 : i32
    return %arg0, %c0_i32, %c0_i32_0 : i32, i32, i32
  }
  func.func @transform_1(%arg0: i32, %arg1: i32) -> (i32, i32) {
    %c0_i32 = arith.constant 0 : i32
    %c0_i32_0 = arith.constant 0 : i32
    return %arg1, %c0_i32 : i32, i32
  }
  func.func @transform_2(%arg0: i32, %arg1: i32) -> (i32, i32) {
    %c0_i32 = arith.constant 0 : i32
    %c0_i32_0 = arith.constant 0 : i32
    %c0_i32_1 = arith.constant 0 : i32
    return %c0_i32, %c0_i32_0 : i32, i32
  }
  func.func @transform_3(%arg0: i32, %arg1: i32) -> (i32, i32) {
    %c0_i32 = arith.constant 0 : i32
    %c0_i32_0 = arith.constant 0 : i32
    %c0_i32_1 = arith.constant 0 : i32
    return %c0_i32, %c0_i32_0 : i32, i32
  }
  func.func @transform_4(%arg0: i32, %arg1: i32) -> (i32, i32) {
    %c0_i32 = arith.constant 0 : i32
    %c0_i32_0 = arith.constant 0 : i32
    %c0_i32_1 = arith.constant 0 : i32
    return %c0_i32, %c0_i32_0 : i32, i32
  }
  func.func @transform_5(%arg0: i32, %arg1: i32) -> (i32, i32) {
    %c0_i32 = arith.constant 0 : i32
    %c0_i32_0 = arith.constant 0 : i32
    %c0_i32_1 = arith.constant 0 : i32
    return %c0_i32, %c0_i32_0 : i32, i32
  }
  func.func @transform_6(%arg0: i32, %arg1: i32) -> (i32, i32) {
    %c0_i32 = arith.constant 0 : i32
    %c0_i32_0 = arith.constant 0 : i32
    %c0_i32_1 = arith.constant 0 : i32
    return %c0_i32, %c0_i32_0 : i32, i32
  }
  func.func @transform_7(%arg0: i32, %arg1: i32) -> (i32, i32) {
    %c0_i32 = arith.constant 0 : i32
    %c0_i32_0 = arith.constant 0 : i32
    %c0_i32_1 = arith.constant 0 : i32
    return %c0_i32, %c0_i32_0 : i32, i32
  }
  func.func @transform_8(%arg0: i32, %arg1: i32) -> (i32, i32) {
    %c0_i32 = arith.constant 0 : i32
    %c0_i32_0 = arith.constant 0 : i32
    %c0_i32_1 = arith.constant 0 : i32
    return %c0_i32, %c0_i32_0 : i32, i32
  }
  func.func @transform_9(%arg0: i32, %arg1: i32) -> (i32, i32) {
    %c0_i32 = arith.constant 0 : i32
    %c0_i32_0 = arith.constant 0 : i32
    %c0_i32_1 = arith.constant 0 : i32
    return %c0_i32, %c0_i32_0 : i32, i32
  }
  func.func @transform_10(%arg0: i32, %arg1: i32) -> (i32, i32) {
    %c0_i32 = arith.constant 0 : i32
    %c0_i32_0 = arith.constant 0 : i32
    %c0_i32_1 = arith.constant 0 : i32
    return %c0_i32, %c0_i32_0 : i32, i32
  }
  func.func @transform_11(%arg0: i32, %arg1: i32) -> (i32, i32) {
    %c0_i32 = arith.constant 0 : i32
    %c0_i32_0 = arith.constant 0 : i32
    %c0_i32_1 = arith.constant 0 : i32
    return %c0_i32, %c0_i32_0 : i32, i32
  }
  func.func @transform_12(%arg0: i32, %arg1: i32) -> (i32, i32) {
    %c0_i32 = arith.constant 0 : i32
    %c0_i32_0 = arith.constant 0 : i32
    %c0_i32_1 = arith.constant 0 : i32
    return %c0_i32, %c0_i32_0 : i32, i32
  }
  func.func @transform_13(%arg0: i32, %arg1: i32) -> (i32, i32) {
    %c0_i32 = arith.constant 0 : i32
    %c0_i32_0 = arith.constant 0 : i32
    %c0_i32_1 = arith.constant 0 : i32
    return %c0_i32, %c0_i32_0 : i32, i32
  }
  func.func @transform_14(%arg0: i32, %arg1: i32) -> (i32, i32) {
    %c0_i32 = arith.constant 0 : i32
    %c0_i32_0 = arith.constant 0 : i32
    %c0_i32_1 = arith.constant 0 : i32
    return %c0_i32, %c0_i32_0 : i32, i32
  }
  func.func @transform_15(%arg0: i32, %arg1: i32) -> (i32, i32) {
    %c0_i32 = arith.constant 0 : i32
    %c0_i32_0 = arith.constant 0 : i32
    %c0_i32_1 = arith.constant 0 : i32
    return %c0_i32, %c0_i32_0 : i32, i32
  }
  func.func @transform_16(%arg0: i32, %arg1: i32) -> (i32, i32, i32) {
    %c0_i32 = arith.constant 0 : i32
    %c0_i32_0 = arith.constant 0 : i32
    return %arg0, %arg1, %c0_i32 : i32, i32, i32
  }
}

</mosaic_0001>

<llo_original>
// kernel: tpu_custom_call.1
$region0: #{tpu_custom_call.1}
  #allocation0 [shape = 'u32[]', space=smem, size = 0x4, offset = 0x4, fixed_abs, tag = 'smem constant byte address 0x4 - core index']
  #allocation1 [shape = 'u32[144,128]{1,0:T(1,128)}', space=vmem, size = 0x12000, scoped, tag = 'internal scratch']
  #allocation2 [shape = 'bf16[4,16,8]{2,1,0:T(16,128)(2,1)}', space=vmem, size = 0x4000, scoped, tag = 'scratch operand']
  #allocation3 [shape = 'bf16[4,16,8]{2,1,0:T(16,128)(2,1)}', space=vmem, size = 0x4000, scoped, tag = 'scratch operand']
  %s0 = inlined_call_operand.vmem [shape: f32[2,16,32], index: 0, kind: input, shape index: {}]
  %s1 = inlined_call_operand.vmem [shape: f32[16,16], index: 1, kind: input, shape index: {}]
  %s2 = inlined_call_operand.vmem [shape: f32[1,32], index: 2, kind: input, shape index: {}]
  %s3 = inlined_call_operand.vmem [shape: f32[1,32], index: 3, kind: input, shape index: {}]
  %s4 = inlined_call_operand.hbm [shape: bf16[32,32], index: 4, kind: input, shape index: {}]
  %s5 = inlined_call_operand.hbm [shape: f32[1,32], index: 5, kind: input, shape index: {}]
  %s6 = inlined_call_operand.hbm [shape: bf16[32,64], index: 6, kind: input, shape index: {}]
  %s7 = inlined_call_operand.hbm [shape: f32[1,64], index: 7, kind: input, shape index: {}]
  %s8 = inlined_call_operand.hbm [shape: bf16[32,32], index: 8, kind: input, shape index: {}]
  %s9 = inlined_call_operand.hbm [shape: f32[1,32], index: 9, kind: input, shape index: {}]
  %s10 = inlined_call_operand.vmem [shape: f32[1,32], index: 10, kind: input, shape index: {}]
  %s11 = inlined_call_operand.vmem [shape: f32[1,32], index: 11, kind: input, shape index: {}]
  %s12 = inlined_call_operand.vmem [shape: bf16[32,64], index: 12, kind: input, shape index: {}]
  %s13 = inlined_call_operand.vmem [shape: f32[1,64], index: 13, kind: input, shape index: {}]
  %s14 = inlined_call_operand.vmem [shape: bf16[64,32], index: 14, kind: input, shape index: {}]
  %s15 = inlined_call_operand.vmem [shape: f32[1,32], index: 15, kind: input, shape index: {}]
  %s16 = inlined_call_operand.hbm [shape: f32[2,16,32], index: 16, kind: output, shape index: {}]
  %s17 = sld [smem:[#allocation0]]
  $region125: #{tpu_custom_call.1} parent=0
    _
  %s19 = ssub.s32 1, %s17
  %s20 = scalar_select 0, %s19, %s17
  $region1: #{tpu_custom_call.1} parent=0
    #allocation4 [shape = 'u8[8192]{0}', space=vmem, size = 0x2000, scoped, tag = 'input window, operand 4, single buffered']
    #allocation5 [shape = 's32[2]{0}', space=sflag, size = 0x8, scoped, tag = 'scoped memory for tpu_custom_call.1']
    #allocation6 [shape = 's32[2]{0}', space=sflag, size = 0x8, scoped, tag = 'scoped memory for tpu_custom_call.1']
    #allocation7 [shape = 'u8[512]{0}', space=vmem, size = 0x400, scoped, tag = 'input window, operand 5, single buffered']
    #allocation8 [shape = 's32[1]{0}', space=sflag, size = 0x4, scoped, tag = 'scoped memory for tpu_custom_call.1']
    #allocation9 [shape = 'u8[8192]{0}', space=vmem, size = 0x2000, scoped, tag = 'input window, operand 6, single buffered']
    #allocation10 [shape = 'u8[512]{0}', space=vmem, size = 0x400, scoped, tag = 'input window, operand 7, single buffered']
    #allocation11 [shape = 's32[1]{0}', space=sflag, size = 0x4, scoped, tag = 'scoped memory for tpu_custom_call.1']
    #allocation12 [shape = 'u8[8192]{0}', space=vmem, size = 0x2000, scoped, tag = 'input window, operand 8, single buffered']
    #allocation13 [shape = 'u8[512]{0}', space=vmem, size = 0x400, scoped, tag = 'input window, operand 9, single buffered']
    #allocation14 [shape = 's32[1]{0}', space=sflag, size = 0x4, scoped, tag = 'scoped memory for tpu_custom_call.1']
    #allocation15 [shape = 'u8[8192]{0}', space=vmem, size = 0x2000, scoped, tag = 'output window, operand 0']
    %21 = vsyncpa [#allocation5], 0
    %22 = vsyncpa [#allocation8], 0
    %23 = vsyncpa [#allocation11], 0
    %24 = vsyncpa [#allocation14], 0
    %25 = vsyncpa [#allocation6], 0
    %s26 = scalar_lea.sflag [#allocation6], 1
    %27 = vsyncpa %s26, 0
    loop: start=0, step=1, limit=6
    $region2: #{tpu_custom_call.1} parent=1 // loop_pre_header
      _
    $region3: #{tpu_custom_call.1} parent=1 // loop_header
      %s29 = sphi 0, %s33
      %p30 = scmp.ge.s32.totalorder %s29, 6
      %s36 = sphi 0, %s48
      %s37 = sphi 0, %s44
      %s38 = sphi 0, %s36
      %s39 = sphi 0, %s37
      %s40 = sphi 0, %s38
      %s41 = sphi 0, %s39
      %s51 = sphi 0, %s53
      %s54 = sphi 0, %s51
      %s55 = sphi 0, %s54
      %s71 = sphi 0, %s55
      %s77 = sphi 0, %s79
      %s80 = sphi 0, %s77
      %s81 = sphi 0, %s80
      %s97 = sphi 0, %s81
      %s101 = sphi 0, %s101
      %s103 = sphi 0, %s101
      %s104 = sphi 0, %s103
      %s118 = sphi 0, %s104
      %s122 = sphi 0, %s122
      %s124 = sphi 0, %s122
      %s125 = sphi 0, %s124
      %s139 = sphi 0, %s125
      %s143 = sphi 0, %s143
      %s145 = sphi 0, %s143
      %s146 = sphi 0, %s145
      %s160 = sphi 0, %s146
      %s164 = sphi 0, %s164
      %s166 = sphi 0, %s164
      %s167 = sphi 0, %s166
      %s181 = sphi 0, %s167
      %s185 = sphi 0, %s185
      %s187 = sphi 0, %s185
      %s188 = sphi 0, %s187
      %s202 = sphi 0, %s188
      %s206 = sphi 0, %s206
      %s208 = sphi 0, %s206
      %s209 = sphi 0, %s208
      %s223 = sphi 0, %s209
      %s227 = sphi 0, %s227
      %s229 = sphi 0, %s227
      %s230 = sphi 0, %s229
      %s244 = sphi 0, %s230
      %s248 = sphi 0, %s248
      %s250 = sphi 0, %s248
      %s251 = sphi 0, %s250
      %s265 = sphi 0, %s251
      %s269 = sphi 0, %s269
      %s271 = sphi 0, %s269
      %s272 = sphi 0, %s271
      %s286 = sphi 0, %s272
      %s290 = sphi 0, %s290
      %s292 = sphi 0, %s290
      %s293 = sphi 0, %s292
      %s307 = sphi 0, %s293
      %s311 = sphi 0, %s311
      %s313 = sphi 0, %s311
      %s314 = sphi 0, %s313
      %s328 = sphi 0, %s314
      %s332 = sphi 0, %s332
      %s334 = sphi 0, %s332
      %s335 = sphi 0, %s334
      %s349 = sphi 0, %s335
      %s353 = sphi 0, %s353
      %s355 = sphi 0, %s353
      %s356 = sphi 0, %s355
      %s370 = sphi 0, %s356
      %s374 = sphi 0, %s374
      %s376 = sphi 0, %s374
      %s377 = sphi 0, %s376
      %s391 = sphi 0, %s377
      %s399 = sphi 0, %s401
      %s402 = sphi 0, %s399
      %s403 = sphi 0, %s402
      %s419 = sphi 0, %s403
    $region4: #{tpu_custom_call.1} parent=1 // loop_header_branch
      %32 = sbr.rel (%p30) target = $region8
    $region5: #{tpu_custom_call.1} parent=1 // loop_body
      %s34 = ssub.s32 %s29, 1
      %s35 = ssub.s32 %s29, 2
      %s42 = sadd.s32 1, %s37
      %p43 = scmp.ge.s32.totalorder %s42, 2
      %s44 = scalar_select %p43, 0, %s42
      %s45 = sadd.s32 1, %s36
      %s46 = scalar_select %p43, %s45, %s36
      %p47 = scmp.ge.s32.totalorder %s46, 2
      %s48 = scalar_select %p47, 0, %s46
      %s49 = ssub.s32 %s36, %s48
      %p50 = scmp.eq.s32.totalorder %s49, 0
      %s52 = sadd.s32 %s51, 1
      %s53 = scalar_select %p50, %s51, %s52
      %p56 = pneg %p50
      %p57 = scmp.eq.s32.totalorder %s29, 3
      %p58 = por %p56, %p57
      %p59 = scmp.ne.s32.totalorder %s51, %s54
      %p60 = scmp.eq.s32.totalorder %s29, 0
      %p61 = por %p59, %p60
      %p62 = scmp.ne.s32.totalorder %s51, %s54
      %p63 = scmp.eq.s32.totalorder %s34, 3
      %p64 = por %p62, %p63
      %p65 = scmp.ne.s32.totalorder %s54, %s55
      %p66 = scmp.eq.s32.totalorder %s34, 0
      %p67 = por %p65, %p66
      %p68 = scmp.ne.s32.totalorder %s54, %s55
      %p69 = scmp.eq.s32.totalorder %s35, 3
      %p70 = por %p68, %p69
      %p72 = scmp.ne.s32.totalorder %s55, %s71
      %p73 = scmp.eq.s32.totalorder %s35, 0
      %p74 = por %p72, %p73
      %s75 = ssub.s32 %s37, %s44
      %p76 = scmp.eq.s32.totalorder %s75, 0
      %s78 = sadd.s32 %s77, 1
      %s79 = scalar_select %p76, %s77, %s78
      %p82 = pneg %p76
      %p83 = scmp.eq.s32.totalorder %s29, 3
      %p84 = por %p82, %p83
      %p85 = scmp.ne.s32.totalorder %s77, %s80
      %p86 = scmp.eq.s32.totalorder %s29, 0
      %p87 = por %p85, %p86
      %p88 = scmp.ne.s32.totalorder %s77, %s80
      %p89 = scmp.eq.s32.totalorder %s34, 3
      %p90 = por %p88, %p89
      %p91 = scmp.ne.s32.totalorder %s80, %s81
      %p92 = scmp.eq.s32.totalorder %s34, 0
      %p93 = por %p91, %p92
      %p94 = scmp.ne.s32.totalorder %s80, %s81
      %p95 = scmp.eq.s32.totalorder %s35, 3
      %p96 = por %p94, %p95
      %p98 = scmp.ne.s32.totalorder %s81, %s97
      %p99 = scmp.eq.s32.totalorder %s35, 0
      %p100 = por %p98, %p99
      %s102 = sadd.s32 %s101, 1
      %p105 = scmp.eq.s32.totalorder %s29, 3
      %p106 = scmp.ne.s32.totalorder %s101, %s103
      %p107 = scmp.eq.s32.totalorder %s29, 0
      %p108 = por %p106, %p107
      %p109 = scmp.ne.s32.totalorder %s101, %s103
      %p110 = scmp.eq.s32.totalorder %s34, 3
      %p111 = por %p109, %p110
      %p112 = scmp.ne.s32.totalorder %s103, %s104
      %p113 = scmp.eq.s32.totalorder %s34, 0
      %p114 = por %p112, %p113
      %p115 = scmp.ne.s32.totalorder %s103, %s104
      %p116 = scmp.eq.s32.totalorder %s35, 3
      %p117 = por %p115, %p116
      %p119 = scmp.ne.s32.totalorder %s104, %s118
      %p120 = scmp.eq.s32.totalorder %s35, 0
      %p121 = por %p119, %p120
      %s123 = sadd.s32 %s122, 1
      %p126 = scmp.eq.s32.totalorder %s29, 3
      %p127 = scmp.ne.s32.totalorder %s122, %s124
      %p128 = scmp.eq.s32.totalorder %s29, 0
      %p129 = por %p127, %p128
      %p130 = scmp.ne.s32.totalorder %s122, %s124
      %p131 = scmp.eq.s32.totalorder %s34, 3
      %p132 = por %p130, %p131
      %p133 = scmp.ne.s32.totalorder %s124, %s125
      %p134 = scmp.eq.s32.totalorder %s34, 0
      %p135 = por %p133, %p134
      %p136 = scmp.ne.s32.totalorder %s124, %s125
      %p137 = scmp.eq.s32.totalorder %s35, 3
      %p138 = por %p136, %p137
      %p140 = scmp.ne.s32.totalorder %s125, %s139
      %p141 = scmp.eq.s32.totalorder %s35, 0
      %p142 = por %p140, %p141
      %s144 = sadd.s32 %s143, 1
      %p147 = scmp.eq.s32.totalorder %s29, 3
      %p148 = scmp.ne.s32.totalorder %s143, %s145
      %p149 = scmp.eq.s32.totalorder %s29, 0
      %p150 = por %p148, %p149
      %p151 = scmp.ne.s32.totalorder %s143, %s145
      %p152 = scmp.eq.s32.totalorder %s34, 3
      %p153 = por %p151, %p152
      %p154 = scmp.ne.s32.totalorder %s145, %s146
      %p155 = scmp.eq.s32.totalorder %s34, 0
      %p156 = por %p154, %p155
      %p157 = scmp.ne.s32.totalorder %s145, %s146
      %p158 = scmp.eq.s32.totalorder %s35, 3
      %p159 = por %p157, %p158
      %p161 = scmp.ne.s32.totalorder %s146, %s160
      %p162 = scmp.eq.s32.totalorder %s35, 0
      %p163 = por %p161, %p162
      %s165 = sadd.s32 %s164, 1
      %p168 = scmp.eq.s32.totalorder %s29, 3
      %p169 = scmp.ne.s32.totalorder %s164, %s166
      %p170 = scmp.eq.s32.totalorder %s29, 0
      %p171 = por %p169, %p170
      %p172 = scmp.ne.s32.totalorder %s164, %s166
      %p173 = scmp.eq.s32.totalorder %s34, 3
      %p174 = por %p172, %p173
      %p175 = scmp.ne.s32.totalorder %s166, %s167
      %p176 = scmp.eq.s32.totalorder %s34, 0
      %p177 = por %p175, %p176
      %p178 = scmp.ne.s32.totalorder %s166, %s167
      %p179 = scmp.eq.s32.totalorder %s35, 3
      %p180 = por %p178, %p179
      %p182 = scmp.ne.s32.totalorder %s167, %s181
      %p183 = scmp.eq.s32.totalorder %s35, 0
      %p184 = por %p182, %p183
      %s186 = sadd.s32 %s185, 1
      %p189 = scmp.eq.s32.totalorder %s29, 3
      %p190 = scmp.ne.s32.totalorder %s185, %s187
      %p191 = scmp.eq.s32.totalorder %s29, 0
      %p192 = por %p190, %p191
      %p193 = scmp.ne.s32.totalorder %s185, %s187
      %p194 = scmp.eq.s32.totalorder %s34, 3
      %p195 = por %p193, %p194
      %p196 = scmp.ne.s32.totalorder %s187, %s188
      %p197 = scmp.eq.s32.totalorder %s34, 0
      %p198 = por %p196, %p197
      %p199 = scmp.ne.s32.totalorder %s187, %s188
      %p200 = scmp.eq.s32.totalorder %s35, 3
      %p201 = por %p199, %p200
      %p203 = scmp.ne.s32.totalorder %s188, %s202
      %p204 = scmp.eq.s32.totalorder %s35, 0
      %p205 = por %p203, %p204
      %s207 = sadd.s32 %s206, 1
      %p210 = scmp.eq.s32.totalorder %s29, 3
      %p211 = scmp.ne.s32.totalorder %s206, %s208
      %p212 = scmp.eq.s32.totalorder %s29, 0
      %p213 = por %p211, %p212
      %p214 = scmp.ne.s32.totalorder %s206, %s208
      %p215 = scmp.eq.s32.totalorder %s34, 3
      %p216 = por %p214, %p215
      %p217 = scmp.ne.s32.totalorder %s208, %s209
      %p218 = scmp.eq.s32.totalorder %s34, 0
      %p219 = por %p217, %p218
      %p220 = scmp.ne.s32.totalorder %s208, %s209
      %p221 = scmp.eq.s32.totalorder %s35, 3
      %p222 = por %p220, %p221
      %p224 = scmp.ne.s32.totalorder %s209, %s223
      %p225 = scmp.eq.s32.totalorder %s35, 0
      %p226 = por %p224, %p225
      %s228 = sadd.s32 %s227, 1
      %p231 = scmp.eq.s32.totalorder %s29, 3
      %p232 = scmp.ne.s32.totalorder %s227, %s229
      %p233 = scmp.eq.s32.totalorder %s29, 0
      %p234 = por %p232, %p233
      %p235 = scmp.ne.s32.totalorder %s227, %s229
      %p236 = scmp.eq.s32.totalorder %s34, 3
      %p237 = por %p235, %p236
      %p238 = scmp.ne.s32.totalorder %s229, %s230
      %p239 = scmp.eq.s32.totalorder %s34, 0
      %p240 = por %p238, %p239
      %p241 = scmp.ne.s32.totalorder %s229, %s230
      %p242 = scmp.eq.s32.totalorder %s35, 3
      %p243 = por %p241, %p242
      %p245 = scmp.ne.s32.totalorder %s230, %s244
      %p246 = scmp.eq.s32.totalorder %s35, 0
      %p247 = por %p245, %p246
      %s249 = sadd.s32 %s248, 1
      %p252 = scmp.eq.s32.totalorder %s29, 3
      %p253 = scmp.ne.s32.totalorder %s248, %s250
      %p254 = scmp.eq.s32.totalorder %s29, 0
      %p255 = por %p253, %p254
      %p256 = scmp.ne.s32.totalorder %s248, %s250
      %p257 = scmp.eq.s32.totalorder %s34, 3
      %p258 = por %p256, %p257
      %p259 = scmp.ne.s32.totalorder %s250, %s251
      %p260 = scmp.eq.s32.totalorder %s34, 0
      %p261 = por %p259, %p260
      %p262 = scmp.ne.s32.totalorder %s250, %s251
      %p263 = scmp.eq.s32.totalorder %s35, 3
      %p264 = por %p262, %p263
      %p266 = scmp.ne.s32.totalorder %s251, %s265
      %p267 = scmp.eq.s32.totalorder %s35, 0
      %p268 = por %p266, %p267
      %s270 = sadd.s32 %s269, 1
      %p273 = scmp.eq.s32.totalorder %s29, 3
      %p274 = scmp.ne.s32.totalorder %s269, %s271
      %p275 = scmp.eq.s32.totalorder %s29, 0
      %p276 = por %p274, %p275
      %p277 = scmp.ne.s32.totalorder %s269, %s271
      %p278 = scmp.eq.s32.totalorder %s34, 3
      %p279 = por %p277, %p278
      %p280 = scmp.ne.s32.totalorder %s271, %s272
      %p281 = scmp.eq.s32.totalorder %s34, 0
      %p282 = por %p280, %p281
      %p283 = scmp.ne.s32.totalorder %s271, %s272
      %p284 = scmp.eq.s32.totalorder %s35, 3
      %p285 = por %p283, %p284
      %p287 = scmp.ne.s32.totalorder %s272, %s286
      %p288 = scmp.eq.s32.totalorder %s35, 0
      %p289 = por %p287, %p288
      %s291 = sadd.s32 %s290, 1
      %p294 = scmp.eq.s32.totalorder %s29, 3
      %p295 = scmp.ne.s32.totalorder %s290, %s292
      %p296 = scmp.eq.s32.totalorder %s29, 0
      %p297 = por %p295, %p296
      %p298 = scmp.ne.s32.totalorder %s290, %s292
      %p299 = scmp.eq.s32.totalorder %s34, 3
      %p300 = por %p298, %p299
      %p301 = scmp.ne.s32.totalorder %s292, %s293
      %p302 = scmp.eq.s32.totalorder %s34, 0
      %p303 = por %p301, %p302
      %p304 = scmp.ne.s32.totalorder %s292, %s293
      %p305 = scmp.eq.s32.totalorder %s35, 3
      %p306 = por %p304, %p305
      %p308 = scmp.ne.s32.totalorder %s293, %s307
      %p309 = scmp.eq.s32.totalorder %s35, 0
      %p310 = por %p308, %p309
      %s312 = sadd.s32 %s311, 1
      %p315 = scmp.eq.s32.totalorder %s29, 3
      %p316 = scmp.ne.s32.totalorder %s311, %s313
      %p317 = scmp.eq.s32.totalorder %s29, 0
      %p318 = por %p316, %p317
      %p319 = scmp.ne.s32.totalorder %s311, %s313
      %p320 = scmp.eq.s32.totalorder %s34, 3
      %p321 = por %p319, %p320
      %p322 = scmp.ne.s32.totalorder %s313, %s314
      %p323 = scmp.eq.s32.totalorder %s34, 0
      %p324 = por %p322, %p323
      %p325 = scmp.ne.s32.totalorder %s313, %s314
      %p326 = scmp.eq.s32.totalorder %s35, 3
      %p327 = por %p325, %p326
      %p329 = scmp.ne.s32.totalorder %s314, %s328
      %p330 = scmp.eq.s32.totalorder %s35, 0
      %p331 = por %p329, %p330
      %s333 = sadd.s32 %s332, 1
      %p336 = scmp.eq.s32.totalorder %s29, 3
      %p337 = scmp.ne.s32.totalorder %s332, %s334
      %p338 = scmp.eq.s32.totalorder %s29, 0
      %p339 = por %p337, %p338
      %p340 = scmp.ne.s32.totalorder %s332, %s334
      %p341 = scmp.eq.s32.totalorder %s34, 3
      %p342 = por %p340, %p341
      %p343 = scmp.ne.s32.totalorder %s334, %s335
      %p344 = scmp.eq.s32.totalorder %s34, 0
      %p345 = por %p343, %p344
      %p346 = scmp.ne.s32.totalorder %s334, %s335
      %p347 = scmp.eq.s32.totalorder %s35, 3
      %p348 = por %p346, %p347
      %p350 = scmp.ne.s32.totalorder %s335, %s349
      %p351 = scmp.eq.s32.totalorder %s35, 0
      %p352 = por %p350, %p351
      %s354 = sadd.s32 %s353, 1
      %p357 = scmp.eq.s32.totalorder %s29, 3
      %p358 = scmp.ne.s32.totalorder %s353, %s355
      %p359 = scmp.eq.s32.totalorder %s29, 0
      %p360 = por %p358, %p359
      %p361 = scmp.ne.s32.totalorder %s353, %s355
      %p362 = scmp.eq.s32.totalorder %s34, 3
      %p363 = por %p361, %p362
      %p364 = scmp.ne.s32.totalorder %s355, %s356
      %p365 = scmp.eq.s32.totalorder %s34, 0
      %p366 = por %p364, %p365
      %p367 = scmp.ne.s32.totalorder %s355, %s356
      %p368 = scmp.eq.s32.totalorder %s35, 3
      %p369 = por %p367, %p368
      %p371 = scmp.ne.s32.totalorder %s356, %s370
      %p372 = scmp.eq.s32.totalorder %s35, 0
      %p373 = por %p371, %p372
      %s375 = sadd.s32 %s374, 1
      %p378 = scmp.eq.s32.totalorder %s29, 3
      %p379 = scmp.ne.s32.totalorder %s374, %s376
      %p380 = scmp.eq.s32.totalorder %s29, 0
      %p381 = por %p379, %p380
      %p382 = scmp.ne.s32.totalorder %s374, %s376
      %p383 = scmp.eq.s32.totalorder %s34, 3
      %p384 = por %p382, %p383
      %p385 = scmp.ne.s32.totalorder %s376, %s377
      %p386 = scmp.eq.s32.totalorder %s34, 0
      %p387 = por %p385, %p386
      %p388 = scmp.ne.s32.totalorder %s376, %s377
      %p389 = scmp.eq.s32.totalorder %s35, 3
      %p390 = por %p388, %p389
      %p392 = scmp.ne.s32.totalorder %s377, %s391
      %p393 = scmp.eq.s32.totalorder %s35, 0
      %p394 = por %p392, %p393
      %s395 = ssub.s32 %s36, %s48
      %s396 = ssub.s32 %s37, %s44
      %s397 = sor.u32 %s395, %s396
      %p398 = scmp.eq.s32.totalorder %s397, 0
      %s400 = sadd.s32 %s399, 1
      %s401 = scalar_select %p398, %s399, %s400
      %p404 = pneg %p398
      %p405 = scmp.eq.s32.totalorder %s29, 3
      %p406 = por %p404, %p405
      %p407 = scmp.ne.s32.totalorder %s399, %s402
      %p408 = scmp.eq.s32.totalorder %s29, 0
      %p409 = por %p407, %p408
      %p410 = scmp.ne.s32.totalorder %s399, %s402
      %p411 = scmp.eq.s32.totalorder %s34, 3
      %p412 = por %p410, %p411
      %p413 = scmp.ne.s32.totalorder %s402, %s403
      %p414 = scmp.eq.s32.totalorder %s34, 0
      %p415 = por %p413, %p414
      %p416 = scmp.ne.s32.totalorder %s402, %s403
      %p417 = scmp.eq.s32.totalorder %s35, 3
      %p418 = por %p416, %p417
      %p420 = scmp.ne.s32.totalorder %s403, %s419
      %p421 = scmp.eq.s32.totalorder %s35, 0
      %p422 = por %p420, %p421
      %p423 = scmp.le.s32.totalorder 1, %s29
      %p424 = scmp.lt.s32.totalorder %s29, 5
      %p425 = pnand %p423, %p424
      %p426 = pneg %p425
      // Predicated region
      $region9: #{tpu_custom_call.1} parent=5 // pred_check
        _
      $region10: #{tpu_custom_call.1} parent=5 // pred_check_branch
        %428 = sbr.rel (%p425) target = $region12
      $region11: #{tpu_custom_call.1} parent=5 // pred_region
        %s429 = ssub.s32 %s29, 1
        // Predicated region
        $region13: #{tpu_custom_call.1} parent=11 // pred_check
          %p430 = pneg %p114
        $region14: #{tpu_custom_call.1} parent=11 // pred_check_branch
          %432 = sbr.rel (%p430) target = $region16
        $region15: #{tpu_custom_call.1} parent=11 // pred_region
          _
        $region16: #{tpu_custom_call.1} parent=11 // pred_fallthru
          _
        // Predicated region
        $region17: #{tpu_custom_call.1} parent=11 // pred_check
          %p433 = pneg %p135
        $region18: #{tpu_custom_call.1} parent=11 // pred_check_branch
          %435 = sbr.rel (%p433) target = $region20
        $region19: #{tpu_custom_call.1} parent=11 // pred_region
          _
        $region20: #{tpu_custom_call.1} parent=11 // pred_fallthru
          _
        // Predicated region
        $region21: #{tpu_custom_call.1} parent=11 // pred_check
          %p436 = pneg %p156
        $region22: #{tpu_custom_call.1} parent=11 // pred_check_branch
          %438 = sbr.rel (%p436) target = $region24
        $region23: #{tpu_custom_call.1} parent=11 // pred_region
          %s440 = ssub.s32 256, 256
          %441 = vsyncadd [#allocation5], %s440
          %s442 = sshll.u32 [#allocation4], 4
          %s443 = int_to_ptr.vmem [resolvable:$true] %s442
          %448 = dma.hbm_to_vmem [thread:$0]  %s4, 256, %s443, [#allocation5], 64, 64, 4
        $region24: #{tpu_custom_call.1} parent=11 // pred_fallthru
          _
        // Predicated region
        $region25: #{tpu_custom_call.1} parent=11 // pred_check
          %p449 = pneg %p177
        $region26: #{tpu_custom_call.1} parent=11 // pred_check_branch
          %451 = sbr.rel (%p449) target = $region28
        $region27: #{tpu_custom_call.1} parent=11 // pred_region
          %s453 = ssub.s32 16, 16
          %454 = vsyncadd [#allocation8], %s453
          %s456 = sshll.u32 [#allocation7], 4
          %s457 = int_to_ptr.vmem [resolvable:$true] %s456
          %459 = dma.hbm_to_vmem [thread:$0]  %s5, 16, %s457, [#allocation8]
        $region28: #{tpu_custom_call.1} parent=11 // pred_fallthru
          _
        // Predicated region
        $region29: #{tpu_custom_call.1} parent=11 // pred_check
          %p460 = pneg %p198
        $region30: #{tpu_custom_call.1} parent=11 // pred_check_branch
          %462 = sbr.rel (%p460) target = $region32
        $region31: #{tpu_custom_call.1} parent=11 // pred_region
          %s464 = ssub.s32 256, 256
          %465 = vsyncadd [#allocation8], %s464
          %s466 = sshll.u32 [#allocation9], 4
          %s467 = int_to_ptr.vmem [resolvable:$true] %s466
          %472 = dma.hbm_to_vmem [thread:$0]  %s6, 256, %s467, [#allocation8], 64, 64, 4
        $region32: #{tpu_custom_call.1} parent=11 // pred_fallthru
          _
        // Predicated region
        $region33: #{tpu_custom_call.1} parent=11 // pred_check
          %p473 = pneg %p219
        $region34: #{tpu_custom_call.1} parent=11 // pred_check_branch
          %475 = sbr.rel (%p473) target = $region36
        $region35: #{tpu_custom_call.1} parent=11 // pred_region
          %s477 = ssub.s32 16, 16
          %478 = vsyncadd [#allocation11], %s477
          %s480 = sshll.u32 [#allocation10], 4
          %s481 = int_to_ptr.vmem [resolvable:$true] %s480
          %483 = dma.hbm_to_vmem [thread:$0]  %s7, 16, %s481, [#allocation11]
        $region36: #{tpu_custom_call.1} parent=11 // pred_fallthru
          _
        // Predicated region
        $region37: #{tpu_custom_call.1} parent=11 // pred_check
          %p484 = pneg %p240
        $region38: #{tpu_custom_call.1} parent=11 // pred_check_branch
          %486 = sbr.rel (%p484) target = $region40
        $region39: #{tpu_custom_call.1} parent=11 // pred_region
          %s488 = ssub.s32 256, 256
          %489 = vsyncadd [#allocation11], %s488
          %s490 = sshll.u32 [#allocation12], 4
          %s491 = int_to_ptr.vmem [resolvable:$true] %s490
          %496 = dma.hbm_to_vmem [thread:$0]  %s8, 256, %s491, [#allocation11], 64, 64, 4
        $region40: #{tpu_custom_call.1} parent=11 // pred_fallthru
          _
        // Predicated region
        $region41: #{tpu_custom_call.1} parent=11 // pred_check
          %p497 = pneg %p261
        $region42: #{tpu_custom_call.1} parent=11 // pred_check_branch
          %499 = sbr.rel (%p497) target = $region44
        $region43: #{tpu_custom_call.1} parent=11 // pred_region
          %s501 = ssub.s32 16, 16
          %502 = vsyncadd [#allocation14], %s501
          %s504 = sshll.u32 [#allocation13], 4
          %s505 = int_to_ptr.vmem [resolvable:$true] %s504
          %507 = dma.hbm_to_vmem [thread:$0]  %s9, 16, %s505, [#allocation14]
        $region44: #{tpu_custom_call.1} parent=11 // pred_fallthru
          _
        // Predicated region
        $region45: #{tpu_custom_call.1} parent=11 // pred_check
          %p508 = pneg %p282
        $region46: #{tpu_custom_call.1} parent=11 // pred_check_branch
          %510 = sbr.rel (%p508) target = $region48
        $region47: #{tpu_custom_call.1} parent=11 // pred_region
          _
        $region48: #{tpu_custom_call.1} parent=11 // pred_fallthru
          _
        // Predicated region
        $region49: #{tpu_custom_call.1} parent=11 // pred_check
          %p511 = pneg %p303
        $region50: #{tpu_custom_call.1} parent=11 // pred_check_branch
          %513 = sbr.rel (%p511) target = $region52
        $region51: #{tpu_custom_call.1} parent=11 // pred_region
          _
        $region52: #{tpu_custom_call.1} parent=11 // pred_fallthru
          _
        // Predicated region
        $region53: #{tpu_custom_call.1} parent=11 // pred_check
          %p514 = pneg %p324
        $region54: #{tpu_custom_call.1} parent=11 // pred_check_branch
          %516 = sbr.rel (%p514) target = $region56
        $region55: #{tpu_custom_call.1} parent=11 // pred_region
          _
        $region56: #{tpu_custom_call.1} parent=11 // pred_fallthru
          _
        // Predicated region
        $region57: #{tpu_custom_call.1} parent=11 // pred_check
          %p517 = pneg %p345
        $region58: #{tpu_custom_call.1} parent=11 // pred_check_branch
          %519 = sbr.rel (%p517) target = $region60
        $region59: #{tpu_custom_call.1} parent=11 // pred_region
          _
        $region60: #{tpu_custom_call.1} parent=11 // pred_fallthru
          _
        // Predicated region
        $region61: #{tpu_custom_call.1} parent=11 // pred_check
          %p520 = pneg %p366
        $region62: #{tpu_custom_call.1} parent=11 // pred_check_branch
          %522 = sbr.rel (%p520) target = $region64
        $region63: #{tpu_custom_call.1} parent=11 // pred_region
          _
        $region64: #{tpu_custom_call.1} parent=11 // pred_fallthru
          _
        // Predicated region
        $region65: #{tpu_custom_call.1} parent=11 // pred_check
          %p523 = pneg %p387
        $region66: #{tpu_custom_call.1} parent=11 // pred_check_branch
          %525 = sbr.rel (%p523) target = $region68
        $region67: #{tpu_custom_call.1} parent=11 // pred_region
          _
        $region68: #{tpu_custom_call.1} parent=11 // pred_fallthru
          _
      $region12: #{tpu_custom_call.1} parent=5 // pred_fallthru
        _
      %p526 = scmp.lt.s32.totalorder %s29, 4
      // Predicated region
      $region69: #{tpu_custom_call.1} parent=5 // pred_check
        %p527 = pneg %p526
      $region70: #{tpu_custom_call.1} parent=5 // pred_check_branch
        %529 = sbr.rel (%p527) target = $region72
      $region71: #{tpu_custom_call.1} parent=5 // pred_region
        // Predicated region
        $region73: #{tpu_custom_call.1} parent=71 // pred_check
          %p530 = pneg %p61
        $region74: #{tpu_custom_call.1} parent=71 // pred_check_branch
          %532 = sbr.rel (%p530) target = $region76
        $region75: #{tpu_custom_call.1} parent=71 // pred_region
          %p533 = scmp.lt.s32.totalorder %s36, 1
          %s534 = scalar_select %p533, %s36, 1
          %s535 = smul.addr %s534, 2
          %s536 = smul.addr %s535, 8
          %s537 = scalar_lea.vmem %s0, %s536
        $region76: #{tpu_custom_call.1} parent=71 // pred_fallthru
          _
        // Predicated region
        $region77: #{tpu_custom_call.1} parent=71 // pred_check
          %p538 = pneg %p87
        $region78: #{tpu_custom_call.1} parent=71 // pred_check_branch
          %540 = sbr.rel (%p538) target = $region80
        $region79: #{tpu_custom_call.1} parent=71 // pred_region
          %p541 = scmp.lt.s32.totalorder %s37, 1
          %s542 = scalar_select %p541, %s37, 1
          %s543 = smul.addr %s542, 8
          %s544 = scalar_lea.vmem %s1, %s543
        $region80: #{tpu_custom_call.1} parent=71 // pred_fallthru
          _
      $region72: #{tpu_custom_call.1} parent=5 // pred_fallthru
        _
      %p545 = scmp.le.s32.totalorder 1, %s29
      %p546 = scmp.lt.s32.totalorder %s29, 5
      %p547 = pnand %p545, %p546
      %p548 = pneg %p547
      // Predicated region
      $region81: #{tpu_custom_call.1} parent=5 // pred_check
        _
      $region82: #{tpu_custom_call.1} parent=5 // pred_check_branch
        %550 = sbr.rel (%p547) target = $region84
      $region83: #{tpu_custom_call.1} parent=5 // pred_region
        %s551 = ssub.s32 %s29, 1
        // Predicated region
        $region85: #{tpu_custom_call.1} parent=83 // pred_check
          %p552 = pneg %p156
        $region86: #{tpu_custom_call.1} parent=83 // pred_check_branch
          %554 = sbr.rel (%p552) target = $region88
        $region87: #{tpu_custom_call.1} parent=83 // pred_region
          %555 = dma.done [#allocation5], 256
        $region88: #{tpu_custom_call.1} parent=83 // pred_fallthru
          _
        // Predicated region
        $region89: #{tpu_custom_call.1} parent=83 // pred_check
          %p556 = pneg %p177
        $region90: #{tpu_custom_call.1} parent=83 // pred_check_branch
          %558 = sbr.rel (%p556) target = $region92
        $region91: #{tpu_custom_call.1} parent=83 // pred_region
          %559 = dma.done [#allocation8], 16
        $region92: #{tpu_custom_call.1} parent=83 // pred_fallthru
          _
        // Predicated region
        $region93: #{tpu_custom_call.1} parent=83 // pred_check
          %p560 = pneg %p198
        $region94: #{tpu_custom_call.1} parent=83 // pred_check_branch
          %562 = sbr.rel (%p560) target = $region96
        $region95: #{tpu_custom_call.1} parent=83 // pred_region
          %563 = dma.done [#allocation8], 256
        $region96: #{tpu_custom_call.1} parent=83 // pred_fallthru
          _
        // Predicated region
        $region97: #{tpu_custom_call.1} parent=83 // pred_check
          %p564 = pneg %p219
        $region98: #{tpu_custom_call.1} parent=83 // pred_check_branch
          %566 = sbr.rel (%p564) target = $region100
        $region99: #{tpu_custom_call.1} parent=83 // pred_region
          %567 = dma.done [#allocation11], 16
        $region100: #{tpu_custom_call.1} parent=83 // pred_fallthru
          _
        // Predicated region
        $region101: #{tpu_custom_call.1} parent=83 // pred_check
          %p568 = pneg %p240
        $region102: #{tpu_custom_call.1} parent=83 // pred_check_branch
          %570 = sbr.rel (%p568) target = $region104
        $region103: #{tpu_custom_call.1} parent=83 // pred_region
          %571 = dma.done [#allocation11], 256
        $region104: #{tpu_custom_call.1} parent=83 // pred_fallthru
          _
        // Predicated region
        $region105: #{tpu_custom_call.1} parent=83 // pred_check
          %p572 = pneg %p261
        $region106: #{tpu_custom_call.1} parent=83 // pred_check_branch
          %574 = sbr.rel (%p572) target = $region108
        $region107: #{tpu_custom_call.1} parent=83 // pred_region
          %575 = dma.done [#allocation14], 16
        $region108: #{tpu_custom_call.1} parent=83 // pred_fallthru
          _
        %p576 = scmp.lt.s32.totalorder %s38, 1
        %s577 = scalar_select %p576, %s38, 1
        %s578 = smul.addr %s577, 2
        %s579 = smul.addr %s578, 8
        %s580 = scalar_lea.vmem %s0, %s579
        %p581 = pneg %p67
        %p582 = pneg %p64
        %p583 = scmp.lt.s32.totalorder %s39, 1
        %s584 = scalar_select %p583, %s39, 1
        %s585 = smul.addr %s584, 8
        %s586 = scalar_lea.vmem %s1, %s585
        %p587 = pneg %p93
        %p588 = pneg %p90
        %p589 = pneg %p114
        %p590 = pneg %p111
        %p591 = pneg %p135
        %p592 = pneg %p132
        %p593 = pneg %p156
        %p594 = pneg %p153
        %p595 = pneg %p177
        %p596 = pneg %p174
        %p597 = pneg %p198
        %p598 = pneg %p195
        %p599 = pneg %p219
        %p600 = pneg %p216
        %p601 = pneg %p240
        %p602 = pneg %p237
        %p603 = pneg %p261
        %p604 = pneg %p258
        %p605 = pneg %p282
        %p606 = pneg %p279
        %p607 = pneg %p303
        %p608 = pneg %p300
        %p609 = pneg %p324
        %p610 = pneg %p321
        %p611 = pneg %p345
        %p612 = pneg %p342
        %p613 = pneg %p366
        %p614 = pneg %p363
        %p615 = pneg %p387
        %p616 = pneg %p384
        %p617 = pneg %p415
        %p618 = pneg %p412
        %s619 = sand.u32 %s402, 1
        %s620 = scalar_lea.sflag [#allocation6], %s619
        %s621 = sand.u32 %s402, 1
        %s622 = smul.addr %s621, 8
        %s623 = scalar_lea.vmem [#allocation15], %s622
        %p624 = scmp.lt.s32.totalorder %s38, 1
        %s625 = scalar_select %p624, %s38, 1
        %s626 = smul.addr %s625, 2
        %s627 = smul.addr %s626, 8
        %s628 = scalar_lea.vmem %s0, %s627
        %p629 = scmp.lt.s32.totalorder %s39, 1
        %s630 = scalar_select %p629, %s39, 1
        %s631 = smul.addr %s630, 8
        %s632 = scalar_lea.vmem %s1, %s631
        %p634 = scmp.eq.s32.totalorder %s39, 0
        // Predicated region
        $region109: #{tpu_custom_call.1} parent=83 // pred_check
          %p635 = pneg %p634
        $region110: #{tpu_custom_call.1} parent=83 // pred_check_branch
          %637 = sbr.rel (%p635) target = $region112
        $region111: #{tpu_custom_call.1} parent=83 // pred_region
          %v638 = vld [vmem:[%s628] sm:$0xff]
          %v639 = vld [vmem:[%s628 + $0x8] sm:$0xff]
          %v640 = vld [vmem:[%s2] sm:$0x1]
          %v641 = vld [vmem:[%s3] sm:$0x1]
          %vm642 = vcmask 261120
          %v643 = vsel %vm642, %v638, 0.0
          %644 = vadd.xlane.f32.xlu0 %v643
          %v645 = vpop.xlane.xlu0 %644
          %v646 = vsel %vm642, %v639, 0.0
          %647 = vadd.xlane.f32.xlu0 %v646
          %v648 = vpop.xlane.xlu0 %647
          %v649 = vrcp.pop 32.0
          %v650 = vmul.f32 %v645, %v649
          %v651 = vmul.f32 %v648, %v649
          %v652 = vsub.f32 %v638, %v650
          %v653 = vsub.f32 %v639, %v651
          %v654 = vmul.f32 %v652, %v652
          %v655 = vmul.f32 %v653, %v653
          %v656 = vsel %vm642, %v654, 0.0
          %657 = vadd.xlane.f32.xlu0 %v656
          %v658 = vpop.xlane.xlu0 %657
          %v659 = vsel %vm642, %v655, 0.0
          %660 = vadd.xlane.f32.xlu0 %v659
          %v661 = vpop.xlane.xlu0 %660
          %v662 = vmul.f32 %v658, %v649
          %v663 = vmul.f32 %v661, %v649
          %v664 = vadd.f32 %v662, 1e-05
          %v665 = vadd.f32 %v663, 1e-05
          %v666 = vrsqrt.pop %v664
          %v667 = vrsqrt.pop %v665
          %v668 = vmul.f32 %v652, %v666
          %v669 = vmul.f32 %v653, %v667
          %v671 = vlaneseq
          %v672 = vshrl.u32 %v671, 7
          %v673 = vsub.s32 0, %v672
          %v674 = vrot.slane %v640, %v673
          %v676 = vmul.f32 %v668, %v674
          %v677 = vmul.f32 %v669, %v674
          %v679 = vlaneseq
          %v680 = vshrl.u32 %v679, 7
          %v681 = vsub.s32 0, %v680
          %v682 = vrot.slane %v641, %v681
          %v684 = vadd.f32 %v676, %v682
          %v685 = vadd.f32 %v677, %v682
          %v686 = vpack.c.bf16 %v685, %v684
          %v687 = vld [vmem:[#allocation9] sm:$0xf]
          %v688 = vld [vmem:[#allocation9 + $0x4] sm:$0xf]
          %v689 = vld [vmem:[#allocation9 + $0x8] sm:$0xf]
          %v690 = vld [vmem:[#allocation9 + $0xc] sm:$0xf]
          %v691 = vld [vmem:[#allocation10] sm:$0x1]
          %v693 = vlaneseq
          %v694 = vshrl.u32 %v693, 7
          %v695 = vsub.s32 0, %v694
          %v696 = vrot.slane %v691, %v695
          %v702 = vunpack.c.l.b16 %v687
          %v703 = vunpack.c.l.b16 %v688
          %v704 = vunpack.c.l.b16 %v689
          %v705 = vunpack.c.l.b16 %v690
          %v706 = vpack.c.b16 %v703, %v702
          %v707 = vpack.c.b16 %v705, %v704
          %v711 = vsel %vm642, %v686, 0
          %713 = vmatprep.subr.bf16.mxu0 0
          %714 = vmatpush1.bf16.msra.mxu0 %v706
          %715 = vmatprep.subr.bf16.mxu0 0
          %716 = vmatpush1.bf16.msra.mxu0 %v707
          %717 = vmatprep.subr.bf16.mxu0 0
          %718 = vmatpush1.bf16.msra.mxu0 0
          %719 = vmatprep.subr.bf16.mxu0 0
          %720 = vmatpush1.bf16.msra.mxu0 0
          %721 = vmatprep.subr.bf16.mxu0 0
          %722 = vmatpush1.bf16.msra.mxu0 0
          %723 = vmatprep.subr.bf16.mxu0 0
          %724 = vmatpush1.bf16.msra.mxu0 0
          %725 = vmatprep.subr.bf16.mxu0 0
          %726 = vmatpush1.bf16.msra.mxu0 0
          %727 = vmatprep.subr.bf16.mxu0 0
          %728 = vmatpush1.bf16.msra.mxu0 0
          %729 = vmatprep.subr.bf16.mxu0 0
          %730 = vmatpush1.bf16.msra.mxu0 0
          %731 = vmatprep.subr.bf16.mxu0 0
          %732 = vmatpush1.bf16.msra.mxu0 0
          %733 = vmatprep.subr.bf16.mxu0 0
          %734 = vmatpush1.bf16.msra.mxu0 0
          %735 = vmatprep.subr.bf16.mxu0 0
          %736 = vmatpush1.bf16.msra.mxu0 0
          %737 = vmatprep.subr.bf16.mxu0 0
          %738 = vmatpush1.bf16.msra.mxu0 0
          %739 = vmatprep.subr.bf16.mxu0 0
          %740 = vmatpush1.bf16.msra.mxu0 0
          %741 = vmatprep.subr.bf16.mxu0 0
          %742 = vmatpush1.bf16.msra.mxu0 0
          %743 = vmatprep.subr.bf16.mxu0 0
          %744 = vmatpush1.bf16.msra.mxu0 0
          %745 = vmatprep.mubr.bf16.mxu0 0
          %746 = vmatmul.mubr.bf16.gmra.mrb[0].mxu0 %v711
          %v747 = vpop.f32.mrb[0].mxu0
          %v748 = vadd.f32 %v696, %v747
          %v749 = vpop.f32.mrb[0].mxu0
          %v750 = vpop.f32.mrb[0].mxu0
          %v751 = vadd.f32 %v696, %v750
          %v752 = vpop.f32.mrb[0].mxu0
          %753 = vdwg.mxu0
          %v754 = vpack.c.bf16 %v751, %v748
          %756 = vrot.lane.b32.xlu0 %v754, 120
          %v757 = vpop.permute.xlu0 %756
          %758 = vrot.lane.b32.xlu0 %v754, 112
          %v759 = vpop.permute.xlu0 %758
          %760 = vrot.lane.b32.xlu0 %v754, 104
          %v761 = vpop.permute.xlu0 %760
          %v764 = vpack.i.b16 %v757, %v754
          %v766 = vshrl.u32 %v754, 16
          %v767 = vshrl.u32 %v757, 16
          %v768 = vpack.i.b16 %v767, %v766
          %v772 = vpack.i.b16 %v761, %v759
          %v774 = vshrl.u32 %v759, 16
          %v775 = vshrl.u32 %v761, 16
          %v776 = vpack.i.b16 %v775, %v774
          %v779 = vpack.i.b16 0, 0
          %v781 = vshrl.u32 0, 16
          %v782 = vpack.i.b16 %v781, %v781
          %v784 = vcombine.high %v764, %v779
          %v786 = vunpack.c.l.s4 1983009808
          %v787 = vunpack.c.0.s8 %v786
          %v788 = vlaneseq
          %v789 = vshrl.u32 %v788, 7
          %v790 = vsub.s32 %v787, %v789
          %v791 = vrot.slane %v764, %v790
          %v793 = vunpack.c.l.s4 1983009808
          %v794 = vunpack.c.0.s8 %v793
          %v795 = vlaneseq
          %v796 = vshrl.u32 %v795, 7
          %v797 = vsub.s32 %v794, %v796
          %v798 = vrot.slane %v784, %v797
          %v799 = vcombine.high %v772, %v779
          %v801 = vunpack.c.l.s4 1983009808
          %v802 = vunpack.c.0.s8 %v801
          %v803 = vlaneseq
          %v804 = vshrl.u32 %v803, 7
          %v805 = vsub.s32 %v802, %v804
          %v806 = vrot.slane %v772, %v805
          %v808 = vunpack.c.l.s4 1983009808
          %v809 = vunpack.c.0.s8 %v808
          %v810 = vlaneseq
          %v811 = vshrl.u32 %v810, 7
          %v812 = vsub.s32 %v809, %v811
          %v813 = vrot.slane %v799, %v812
          %v814 = vcombine.low %v791, %v806
          %v815 = vcombine.high %v791, %v806
          %v817 = vunpack.c.l.s4 1934713408
          %v818 = vunpack.c.0.s8 %v817
          %v819 = vlaneseq
          %v820 = vshrl.u32 %v819, 7
          %v821 = vsub.s32 %v818, %v820
          %v822 = vrot.slane %v814, %v821
          %v824 = vunpack.c.l.s4 1934713408
          %v825 = vunpack.c.0.s8 %v824
          %v826 = vlaneseq
          %v827 = vshrl.u32 %v826, 7
          %v828 = vsub.s32 %v825, %v827
          %v829 = vrot.slane %v815, %v828
          %v830 = vcombine.low %v798, %v813
          %v831 = vcombine.high %v798, %v813
          %v833 = vunpack.c.l.s4 1934713408
          %v834 = vunpack.c.0.s8 %v833
          %v835 = vlaneseq
          %v836 = vshrl.u32 %v835, 7
          %v837 = vsub.s32 %v834, %v836
          %v838 = vrot.slane %v830, %v837
          %v840 = vunpack.c.l.s4 1934713408
          %v841 = vunpack.c.0.s8 %v840
          %v842 = vlaneseq
          %v843 = vshrl.u32 %v842, 7
          %v844 = vsub.s32 %v841, %v843
          %v845 = vrot.slane %v831, %v844
          %v846 = vcombine.high %v822, 0
          %v847 = vcombine.high %v829, 0
          %v848 = vcombine.high %v838, 0
          %v849 = vcombine.high %v845, 0
          %v850 = vcombine.high %v768, %v782
          %v852 = vunpack.c.l.s4 1983009808
          %v853 = vunpack.c.0.s8 %v852
          %v854 = vlaneseq
          %v855 = vshrl.u32 %v854, 7
          %v856 = vsub.s32 %v853, %v855
          %v857 = vrot.slane %v768, %v856
          %v859 = vunpack.c.l.s4 1983009808
          %v860 = vunpack.c.0.s8 %v859
          %v861 = vlaneseq
          %v862 = vshrl.u32 %v861, 7
          %v863 = vsub.s32 %v860, %v862
          %v864 = vrot.slane %v850, %v863
          %v865 = vcombine.high %v776, %v782
          %v867 = vunpack.c.l.s4 1983009808
          %v868 = vunpack.c.0.s8 %v867
          %v869 = vlaneseq
          %v870 = vshrl.u32 %v869, 7
          %v871 = vsub.s32 %v868, %v870
          %v872 = vrot.slane %v776, %v871
          %v874 = vunpack.c.l.s4 1983009808
          %v875 = vunpack.c.0.s8 %v874
          %v876 = vlaneseq
          %v877 = vshrl.u32 %v876, 7
          %v878 = vsub.s32 %v875, %v877
          %v879 = vrot.slane %v865, %v878
          %v880 = vcombine.low %v857, %v872
          %v881 = vcombine.high %v857, %v872
          %v883 = vunpack.c.l.s4 1934713408
          %v884 = vunpack.c.0.s8 %v883
          %v885 = vlaneseq
          %v886 = vshrl.u32 %v885, 7
          %v887 = vsub.s32 %v884, %v886
          %v888 = vrot.slane %v880, %v887
          %v890 = vunpack.c.l.s4 1934713408
          %v891 = vunpack.c.0.s8 %v890
          %v892 = vlaneseq
          %v893 = vshrl.u32 %v892, 7
          %v894 = vsub.s32 %v891, %v893
          %v895 = vrot.slane %v881, %v894
          %v896 = vcombine.low %v864, %v879
          %v897 = vcombine.high %v864, %v879
          %v899 = vunpack.c.l.s4 1934713408
          %v900 = vunpack.c.0.s8 %v899
          %v901 = vlaneseq
          %v902 = vshrl.u32 %v901, 7
          %v903 = vsub.s32 %v900, %v902
          %v904 = vrot.slane %v896, %v903
          %v906 = vunpack.c.l.s4 1934713408
          %v907 = vunpack.c.0.s8 %v906
          %v908 = vlaneseq
          %v909 = vshrl.u32 %v908, 7
          %v910 = vsub.s32 %v907, %v909
          %v911 = vrot.slane %v897, %v910
          %v912 = vcombine.high %v888, 0
          %v913 = vcombine.high %v895, 0
          %v914 = vcombine.high %v904, 0
          %v915 = vcombine.high %v911, 0
          %v916 = vcombine.low %v822, %v829
          %v918 = vunpack.c.l.s4 1983009808
          %v919 = vunpack.c.0.s8 %v918
          %v920 = vlaneseq
          %v921 = vshrl.u32 %v920, 7
          %v922 = vsub.s32 %v919, %v921
          %v923 = vrot.slane %v916, %v922
          %v924 = vcombine.low %v846, %v847
          %v926 = vunpack.c.l.s4 1983009808
          %v927 = vunpack.c.0.s8 %v926
          %v928 = vlaneseq
          %v929 = vshrl.u32 %v928, 7
          %v930 = vsub.s32 %v927, %v929
          %v931 = vrot.slane %v924, %v930
          %v932 = vcombine.low %v838, %v845
          %v934 = vunpack.c.l.s4 1983009808
          %v935 = vunpack.c.0.s8 %v934
          %v936 = vlaneseq
          %v937 = vshrl.u32 %v936, 7
          %v938 = vsub.s32 %v935, %v937
          %v939 = vrot.slane %v932, %v938
          %v940 = vcombine.low %v848, %v849
          %v942 = vunpack.c.l.s4 1983009808
          %v943 = vunpack.c.0.s8 %v942
          %v944 = vlaneseq
          %v945 = vshrl.u32 %v944, 7
          %v946 = vsub.s32 %v943, %v945
          %v947 = vrot.slane %v940, %v946
          %v948 = vcombine.low %v923, %v931
          %v950 = vunpack.c.l.s4 1934713408
          %v951 = vunpack.c.0.s8 %v950
          %v952 = vlaneseq
          %v953 = vshrl.u32 %v952, 7
          %v954 = vsub.s32 %v951, %v953
          %v955 = vrot.slane %v948, %v954
          %v956 = vcombine.low %v939, %v947
          %v958 = vunpack.c.l.s4 1934713408
          %v959 = vunpack.c.0.s8 %v958
          %v960 = vlaneseq
          %v961 = vshrl.u32 %v960, 7
          %v962 = vsub.s32 %v959, %v961
          %v963 = vrot.slane %v956, %v962
          %v964 = vcombine.low %v955, %v963
          %v965 = vcombine.high %v955, %v963
          %v966 = vcombine.low %v888, %v895
          %v968 = vunpack.c.l.s4 1983009808
          %v969 = vunpack.c.0.s8 %v968
          %v970 = vlaneseq
          %v971 = vshrl.u32 %v970, 7
          %v972 = vsub.s32 %v969, %v971
          %v973 = vrot.slane %v966, %v972
          %v974 = vcombine.low %v912, %v913
          %v976 = vunpack.c.l.s4 1983009808
          %v977 = vunpack.c.0.s8 %v976
          %v978 = vlaneseq
          %v979 = vshrl.u32 %v978, 7
          %v980 = vsub.s32 %v977, %v979
          %v981 = vrot.slane %v974, %v980
          %v982 = vcombine.low %v904, %v911
          %v984 = vunpack.c.l.s4 1983009808
          %v985 = vunpack.c.0.s8 %v984
          %v986 = vlaneseq
          %v987 = vshrl.u32 %v986, 7
          %v988 = vsub.s32 %v985, %v987
          %v989 = vrot.slane %v982, %v988
          %v990 = vcombine.low %v914, %v915
          %v992 = vunpack.c.l.s4 1983009808
          %v993 = vunpack.c.0.s8 %v992
          %v994 = vlaneseq
          %v995 = vshrl.u32 %v994, 7
          %v996 = vsub.s32 %v993, %v995
          %v997 = vrot.slane %v990, %v996
          %v998 = vcombine.low %v973, %v981
          %v1000 = vunpack.c.l.s4 1934713408
          %v1001 = vunpack.c.0.s8 %v1000
          %v1002 = vlaneseq
          %v1003 = vshrl.u32 %v1002, 7
          %v1004 = vsub.s32 %v1001, %v1003
          %v1005 = vrot.slane %v998, %v1004
          %v1006 = vcombine.low %v989, %v997
          %v1008 = vunpack.c.l.s4 1934713408
          %v1009 = vunpack.c.0.s8 %v1008
          %v1010 = vlaneseq
          %v1011 = vshrl.u32 %v1010, 7
          %v1012 = vsub.s32 %v1009, %v1011
          %v1013 = vrot.slane %v1006, %v1012
          %v1014 = vcombine.low %v1005, %v1013
          %v1015 = vcombine.high %v1005, %v1013
          %v1018 = vpack.i.b16 %v1014, %v964
          %v1020 = vshrl.u32 %v964, 16
          %v1021 = vshrl.u32 %v1014, 16
          %v1022 = vpack.i.b16 %v1021, %v1020
          %v1026 = vpack.i.b16 %v1015, %v965
          %v1028 = vshrl.u32 %v965, 16
          %v1029 = vshrl.u32 %v1015, 16
          %v1030 = vpack.i.b16 %v1029, %v1028
          %vm1032 = vcmask 64512
          %1033 = vst.msk [vmem:[#allocation2] sm:$0xff] %vm1032, %v1018
          %1034 = vst.msk [vmem:[#allocation2 + $0x8] sm:$0xff] %vm1032, %v1022
          %1035 = vst.msk [vmem:[#allocation2 + $0x10] sm:$0xff] %vm1032, %v1026
          %1036 = vst.msk [vmem:[#allocation2 + $0x18] sm:$0xff] %vm1032, %v1030
          %1037 = vrot.lane.b32.xlu0 %v754, 96
          %v1038 = vpop.permute.xlu0 %1037
          %1039 = vrot.lane.b32.xlu0 %v757, 96
          %v1040 = vpop.permute.xlu0 %1039
          %1041 = vrot.lane.b32.xlu0 %v759, 96
          %v1042 = vpop.permute.xlu0 %1041
          %1043 = vrot.lane.b32.xlu0 %v761, 96
          %v1044 = vpop.permute.xlu0 %1043
          %v1047 = vpack.i.b16 %v1040, %v1038
          %v1049 = vshrl.u32 %v1038, 16
          %v1050 = vshrl.u32 %v1040, 16
          %v1051 = vpack.i.b16 %v1050, %v1049
          %v1055 = vpack.i.b16 %v1044, %v1042
          %v1057 = vshrl.u32 %v1042, 16
          %v1058 = vshrl.u32 %v1044, 16
          %v1059 = vpack.i.b16 %v1058, %v1057
          %v1061 = vcombine.high %v1047, %v779
          %v1063 = vunpack.c.l.s4 1983009808
          %v1064 = vunpack.c.0.s8 %v1063
          %v1065 = vlaneseq
          %v1066 = vshrl.u32 %v1065, 7
          %v1067 = vsub.s32 %v1064, %v1066
          %v1068 = vrot.slane %v1047, %v1067
          %v1070 = vunpack.c.l.s4 1983009808
          %v1071 = vunpack.c.0.s8 %v1070
          %v1072 = vlaneseq
          %v1073 = vshrl.u32 %v1072, 7
          %v1074 = vsub.s32 %v1071, %v1073
          %v1075 = vrot.slane %v1061, %v1074
          %v1076 = vcombine.high %v1055, %v779
          %v1078 = vunpack.c.l.s4 1983009808
          %v1079 = vunpack.c.0.s8 %v1078
          %v1080 = vlaneseq
          %v1081 = vshrl.u32 %v1080, 7
          %v1082 = vsub.s32 %v1079, %v1081
          %v1083 = vrot.slane %v1055, %v1082
          %v1085 = vunpack.c.l.s4 1983009808
          %v1086 = vunpack.c.0.s8 %v1085
          %v1087 = vlaneseq
          %v1088 = vshrl.u32 %v1087, 7
          %v1089 = vsub.s32 %v1086, %v1088
          %v1090 = vrot.slane %v1076, %v1089
          %v1091 = vcombine.low %v1068, %v1083
          %v1092 = vcombine.high %v1068, %v1083
          %v1094 = vunpack.c.l.s4 1934713408
          %v1095 = vunpack.c.0.s8 %v1094
          %v1096 = vlaneseq
          %v1097 = vshrl.u32 %v1096, 7
          %v1098 = vsub.s32 %v1095, %v1097
          %v1099 = vrot.slane %v1091, %v1098
          %v1101 = vunpack.c.l.s4 1934713408
          %v1102 = vunpack.c.0.s8 %v1101
          %v1103 = vlaneseq
          %v1104 = vshrl.u32 %v1103, 7
          %v1105 = vsub.s32 %v1102, %v1104
          %v1106 = vrot.slane %v1092, %v1105
          %v1107 = vcombine.low %v1075, %v1090
          %v1108 = vcombine.high %v1075, %v1090
          %v1110 = vunpack.c.l.s4 1934713408
          %v1111 = vunpack.c.0.s8 %v1110
          %v1112 = vlaneseq
          %v1113 = vshrl.u32 %v1112, 7
          %v1114 = vsub.s32 %v1111, %v1113
          %v1115 = vrot.slane %v1107, %v1114
          %v1117 = vunpack.c.l.s4 1934713408
          %v1118 = vunpack.c.0.s8 %v1117
          %v1119 = vlaneseq
          %v1120 = vshrl.u32 %v1119, 7
          %v1121 = vsub.s32 %v1118, %v1120
          %v1122 = vrot.slane %v1108, %v1121
          %v1123 = vcombine.high %v1099, 0
          %v1124 = vcombine.high %v1106, 0
          %v1125 = vcombine.high %v1115, 0
          %v1126 = vcombine.high %v1122, 0
          %v1127 = vcombine.high %v1051, %v782
          %v1129 = vunpack.c.l.s4 1983009808
          %v1130 = vunpack.c.0.s8 %v1129
          %v1131 = vlaneseq
          %v1132 = vshrl.u32 %v1131, 7
          %v1133 = vsub.s32 %v1130, %v1132
          %v1134 = vrot.slane %v1051, %v1133
          %v1136 = vunpack.c.l.s4 1983009808
          %v1137 = vunpack.c.0.s8 %v1136
          %v1138 = vlaneseq
          %v1139 = vshrl.u32 %v1138, 7
          %v1140 = vsub.s32 %v1137, %v1139
          %v1141 = vrot.slane %v1127, %v1140
          %v1142 = vcombine.high %v1059, %v782
          %v1144 = vunpack.c.l.s4 1983009808
          %v1145 = vunpack.c.0.s8 %v1144
          %v1146 = vlaneseq
          %v1147 = vshrl.u32 %v1146, 7
          %v1148 = vsub.s32 %v1145, %v1147
          %v1149 = vrot.slane %v1059, %v1148
          %v1151 = vunpack.c.l.s4 1983009808
          %v1152 = vunpack.c.0.s8 %v1151
          %v1153 = vlaneseq
          %v1154 = vshrl.u32 %v1153, 7
          %v1155 = vsub.s32 %v1152, %v1154
          %v1156 = vrot.slane %v1142, %v1155
          %v1157 = vcombine.low %v1134, %v1149
          %v1158 = vcombine.high %v1134, %v1149
          %v1160 = vunpack.c.l.s4 1934713408
          %v1161 = vunpack.c.0.s8 %v1160
          %v1162 = vlaneseq
          %v1163 = vshrl.u32 %v1162, 7
          %v1164 = vsub.s32 %v1161, %v1163
          %v1165 = vrot.slane %v1157, %v1164
          %v1167 = vunpack.c.l.s4 1934713408
          %v1168 = vunpack.c.0.s8 %v1167
          %v1169 = vlaneseq
          %v1170 = vshrl.u32 %v1169, 7
          %v1171 = vsub.s32 %v1168, %v1170
          %v1172 = vrot.slane %v1158, %v1171
          %v1173 = vcombine.low %v1141, %v1156
          %v1174 = vcombine.high %v1141, %v1156
          %v1176 = vunpack.c.l.s4 1934713408
          %v1177 = vunpack.c.0.s8 %v1176
          %v1178 = vlaneseq
          %v1179 = vshrl.u32 %v1178, 7
          %v1180 = vsub.s32 %v1177, %v1179
          %v1181 = vrot.slane %v1173, %v1180
          %v1183 = vunpack.c.l.s4 1934713408
          %v1184 = vunpack.c.0.s8 %v1183
          %v1185 = vlaneseq
          %v1186 = vshrl.u32 %v1185, 7
          %v1187 = vsub.s32 %v1184, %v1186
          %v1188 = vrot.slane %v1174, %v1187
          %v1189 = vcombine.high %v1165, 0
          %v1190 = vcombine.high %v1172, 0
          %v1191 = vcombine.high %v1181, 0
          %v1192 = vcombine.high %v1188, 0
          %v1193 = vcombine.low %v1099, %v1106
          %v1195 = vunpack.c.l.s4 1983009808
          %v1196 = vunpack.c.0.s8 %v1195
          %v1197 = vlaneseq
          %v1198 = vshrl.u32 %v1197, 7
          %v1199 = vsub.s32 %v1196, %v1198
          %v1200 = vrot.slane %v1193, %v1199
          %v1201 = vcombine.low %v1123, %v1124
          %v1203 = vunpack.c.l.s4 1983009808
          %v1204 = vunpack.c.0.s8 %v1203
          %v1205 = vlaneseq
          %v1206 = vshrl.u32 %v1205, 7
          %v1207 = vsub.s32 %v1204, %v1206
          %v1208 = vrot.slane %v1201, %v1207
          %v1209 = vcombine.low %v1115, %v1122
          %v1211 = vunpack.c.l.s4 1983009808
          %v1212 = vunpack.c.0.s8 %v1211
          %v1213 = vlaneseq
          %v1214 = vshrl.u32 %v1213, 7
          %v1215 = vsub.s32 %v1212, %v1214
          %v1216 = vrot.slane %v1209, %v1215
          %v1217 = vcombine.low %v1125, %v1126
          %v1219 = vunpack.c.l.s4 1983009808
          %v1220 = vunpack.c.0.s8 %v1219
          %v1221 = vlaneseq
          %v1222 = vshrl.u32 %v1221, 7
          %v1223 = vsub.s32 %v1220, %v1222
          %v1224 = vrot.slane %v1217, %v1223
          %v1225 = vcombine.low %v1200, %v1208
          %v1227 = vunpack.c.l.s4 1934713408
          %v1228 = vunpack.c.0.s8 %v1227
          %v1229 = vlaneseq
          %v1230 = vshrl.u32 %v1229, 7
          %v1231 = vsub.s32 %v1228, %v1230
          %v1232 = vrot.slane %v1225, %v1231
          %v1233 = vcombine.low %v1216, %v1224
          %v1235 = vunpack.c.l.s4 1934713408
          %v1236 = vunpack.c.0.s8 %v1235
          %v1237 = vlaneseq
          %v1238 = vshrl.u32 %v1237, 7
          %v1239 = vsub.s32 %v1236, %v1238
          %v1240 = vrot.slane %v1233, %v1239
          %v1241 = vcombine.low %v1232, %v1240
          %v1242 = vcombine.high %v1232, %v1240
          %v1243 = vcombine.low %v1165, %v1172
          %v1245 = vunpack.c.l.s4 1983009808
          %v1246 = vunpack.c.0.s8 %v1245
          %v1247 = vlaneseq
          %v1248 = vshrl.u32 %v1247, 7
          %v1249 = vsub.s32 %v1246, %v1248
          %v1250 = vrot.slane %v1243, %v1249
          %v1251 = vcombine.low %v1189, %v1190
          %v1253 = vunpack.c.l.s4 1983009808
          %v1254 = vunpack.c.0.s8 %v1253
          %v1255 = vlaneseq
          %v1256 = vshrl.u32 %v1255, 7
          %v1257 = vsub.s32 %v1254, %v1256
          %v1258 = vrot.slane %v1251, %v1257
          %v1259 = vcombine.low %v1181, %v1188
          %v1261 = vunpack.c.l.s4 1983009808
          %v1262 = vunpack.c.0.s8 %v1261
          %v1263 = vlaneseq
          %v1264 = vshrl.u32 %v1263, 7
          %v1265 = vsub.s32 %v1262, %v1264
          %v1266 = vrot.slane %v1259, %v1265
          %v1267 = vcombine.low %v1191, %v1192
          %v1269 = vunpack.c.l.s4 1983009808
          %v1270 = vunpack.c.0.s8 %v1269
          %v1271 = vlaneseq
          %v1272 = vshrl.u32 %v1271, 7
          %v1273 = vsub.s32 %v1270, %v1272
          %v1274 = vrot.slane %v1267, %v1273
          %v1275 = vcombine.low %v1250, %v1258
          %v1277 = vunpack.c.l.s4 1934713408
          %v1278 = vunpack.c.0.s8 %v1277
          %v1279 = vlaneseq
          %v1280 = vshrl.u32 %v1279, 7
          %v1281 = vsub.s32 %v1278, %v1280
          %v1282 = vrot.slane %v1275, %v1281
          %v1283 = vcombine.low %v1266, %v1274
          %v1285 = vunpack.c.l.s4 1934713408
          %v1286 = vunpack.c.0.s8 %v1285
          %v1287 = vlaneseq
          %v1288 = vshrl.u32 %v1287, 7
          %v1289 = vsub.s32 %v1286, %v1288
          %v1290 = vrot.slane %v1283, %v1289
          %v1291 = vcombine.low %v1282, %v1290
          %v1292 = vcombine.high %v1282, %v1290
          %v1295 = vpack.i.b16 %v1291, %v1241
          %v1297 = vshrl.u32 %v1241, 16
          %v1298 = vshrl.u32 %v1291, 16
          %v1299 = vpack.i.b16 %v1298, %v1297
          %v1303 = vpack.i.b16 %v1292, %v1242
          %v1305 = vshrl.u32 %v1242, 16
          %v1306 = vshrl.u32 %v1292, 16
          %v1307 = vpack.i.b16 %v1306, %v1305
          %1309 = vst.msk [vmem:[#allocation3] sm:$0xff] %vm1032, %v1295
          %1310 = vst.msk [vmem:[#allocation3 + $0x8] sm:$0xff] %vm1032, %v1299
          %1311 = vst.msk [vmem:[#allocation3 + $0x10] sm:$0xff] %vm1032, %v1303
          %1312 = vst.msk [vmem:[#allocation3 + $0x18] sm:$0xff] %vm1032, %v1307
        $region112: #{tpu_custom_call.1} parent=83 // pred_fallthru
          _
        %s1313 = smul.u32 %s39, 8
        %s1314 = scalar_lea.vmem %s628, %s1313
        %v1315 = vld [vmem:[%s1314] sm:$0xff]
        %v1316 = vld [vmem:[%s2] sm:$0x1]
        %v1317 = vld [vmem:[%s3] sm:$0x1]
        %vm1318 = vcmask 261120
        %v1319 = vsel %vm1318, %v1315, 0.0
        %1320 = vadd.xlane.f32.xlu0 %v1319
        %v1321 = vpop.xlane.xlu0 %1320
        %v1322 = vrcp.pop 32.0
        %v1323 = vmul.f32 %v1321, %v1322
        %v1324 = vsub.f32 %v1315, %v1323
        %v1325 = vmul.f32 %v1324, %v1324
        %v1326 = vsel %vm1318, %v1325, 0.0
        %1327 = vadd.xlane.f32.xlu0 %v1326
        %v1328 = vpop.xlane.xlu0 %1327
        %v1329 = vmul.f32 %v1328, %v1322
        %v1330 = vadd.f32 %v1329, 1e-05
        %v1331 = vrsqrt.pop %v1330
        %v1332 = vmul.f32 %v1324, %v1331
        %v1334 = vlaneseq
        %v1335 = vshrl.u32 %v1334, 7
        %v1336 = vsub.s32 0, %v1335
        %v1337 = vrot.slane %v1316, %v1336
        %v1339 = vmul.f32 %v1332, %v1337
        %v1341 = vlaneseq
        %v1342 = vshrl.u32 %v1341, 7
        %v1343 = vsub.s32 0, %v1342
        %v1344 = vrot.slane %v1317, %v1343
        %v1346 = vadd.f32 %v1339, %v1344
        %v1347 = vpack.c.bf16 %v1346, %v1346
        %v1348 = vld [vmem:[#allocation4] sm:$0xf]
        %v1349 = vld [vmem:[#allocation4 + $0x4] sm:$0xf]
        %v1350 = vld [vmem:[#allocation4 + $0x8] sm:$0xf]
        %v1351 = vld [vmem:[#allocation4 + $0xc] sm:$0xf]
        %v1352 = vld [vmem:[#allocation7] sm:$0x1]
        %v1354 = vlaneseq
        %v1355 = vshrl.u32 %v1354, 7
        %v1356 = vsub.s32 0, %v1355
        %v1357 = vrot.slane %v1352, %v1356
        %v1363 = vunpack.c.l.b16 %v1348
        %v1364 = vunpack.c.l.b16 %v1349
        %v1365 = vunpack.c.l.b16 %v1350
        %v1366 = vunpack.c.l.b16 %v1351
        %v1367 = vpack.c.b16 %v1364, %v1363
        %v1368 = vpack.c.b16 %v1366, %v1365
        %v1372 = vsel %vm1318, %v1347, 0
        %1374 = vmatprep.subr.bf16.mxu0 0
        %1375 = vmatpush1.bf16.msra.mxu0 %v1367
        %1376 = vmatprep.subr.bf16.mxu0 0
        %1377 = vmatpush1.bf16.msra.mxu0 %v1368
        %1378 = vmatprep.subr.bf16.mxu0 0
        %1379 = vmatpush1.bf16.msra.mxu0 0
        %1380 = vmatprep.subr.bf16.mxu0 0
        %1381 = vmatpush1.bf16.msra.mxu0 0
        %1382 = vmatprep.subr.bf16.mxu0 0
        %1383 = vmatpush1.bf16.msra.mxu0 0
        %1384 = vmatprep.subr.bf16.mxu0 0
        %1385 = vmatpush1.bf16.msra.mxu0 0
        %1386 = vmatprep.subr.bf16.mxu0 0
        %1387 = vmatpush1.bf16.msra.mxu0 0
        %1388 = vmatprep.subr.bf16.mxu0 0
        %1389 = vmatpush1.bf16.msra.mxu0 0
        %1390 = vmatprep.subr.bf16.mxu0 0
        %1391 = vmatpush1.bf16.msra.mxu0 0
        %1392 = vmatprep.subr.bf16.mxu0 0
        %1393 = vmatpush1.bf16.msra.mxu0 0
        %1394 = vmatprep.subr.bf16.mxu0 0
        %1395 = vmatpush1.bf16.msra.mxu0 0
        %1396 = vmatprep.subr.bf16.mxu0 0
        %1397 = vmatpush1.bf16.msra.mxu0 0
        %1398 = vmatprep.subr.bf16.mxu0 0
        %1399 = vmatpush1.bf16.msra.mxu0 0
        %1400 = vmatprep.subr.bf16.mxu0 0
        %1401 = vmatpush1.bf16.msra.mxu0 0
        %1402 = vmatprep.subr.bf16.mxu0 0
        %1403 = vmatpush1.bf16.msra.mxu0 0
        %1404 = vmatprep.subr.bf16.mxu0 0
        %1405 = vmatpush1.bf16.msra.mxu0 0
        %1406 = vmatprep.mubr.bf16.mxu0 0
        %1407 = vmatmul.mubr.bf16.gmra.mrb[0].mxu0 %v1372
        %v1408 = vpop.f32.mrb[0].mxu0
        %v1409 = vadd.f32 %v1357, %v1408
        %v1410 = vpop.f32.mrb[0].mxu0
        %v1411 = vpop.f32.mrb[0].mxu0
        %v1412 = vpop.f32.mrb[0].mxu0
        %1413 = vdwg.mxu0
        %v1414 = vmul.f32 %v1409, 0.35355338
        %v1415 = vpack.c.bf16 %v1414, %v1414
        %1417 = vrot.lane.b32.xlu0 %v1415, 120
        %v1418 = vpop.permute.xlu0 %1417
        %1419 = vrot.lane.b32.xlu0 %v1415, 112
        %v1420 = vpop.permute.xlu0 %1419
        %1421 = vrot.lane.b32.xlu0 %v1415, 104
        %v1422 = vpop.permute.xlu0 %1421
        %v1424 = vunpack.c.l.s4 1983009808
        %v1425 = vunpack.c.0.s8 %v1424
        %v1426 = vlaneseq
        %v1427 = vshrl.u32 %v1426, 7
        %v1428 = vsub.s32 %v1425, %v1427
        %v1429 = vrot.slane %v1415, %v1428
        %v1432 = vunpack.c.l.s4 1983009808
        %v1433 = vunpack.c.0.s8 %v1432
        %v1434 = vlaneseq
        %v1435 = vshrl.u32 %v1434, 7
        %v1436 = vsub.s32 %v1433, %v1435
        %v1437 = vrot.slane %v1420, %v1436
        %v1438 = vcombine.low %v1429, %v1437
        %v1439 = vcombine.high %v1429, %v1437
        %v1441 = vunpack.c.l.s4 1934713408
        %v1442 = vunpack.c.0.s8 %v1441
        %v1443 = vlaneseq
        %v1444 = vshrl.u32 %v1443, 7
        %v1445 = vsub.s32 %v1442, %v1444
        %v1446 = vrot.slane %v1438, %v1445
        %v1448 = vunpack.c.l.s4 1934713408
        %v1449 = vunpack.c.0.s8 %v1448
        %v1450 = vlaneseq
        %v1451 = vshrl.u32 %v1450, 7
        %v1452 = vsub.s32 %v1449, %v1451
        %v1453 = vrot.slane %v1439, %v1452
        %v1454 = vcombine.high %v1446, 0
        %v1455 = vcombine.high %v1453, 0
        %v1458 = vunpack.c.l.s4 1983009808
        %v1459 = vunpack.c.0.s8 %v1458
        %v1460 = vlaneseq
        %v1461 = vshrl.u32 %v1460, 7
        %v1462 = vsub.s32 %v1459, %v1461
        %v1463 = vrot.slane %v1418, %v1462
        %v1466 = vunpack.c.l.s4 1983009808
        %v1467 = vunpack.c.0.s8 %v1466
        %v1468 = vlaneseq
        %v1469 = vshrl.u32 %v1468, 7
        %v1470 = vsub.s32 %v1467, %v1469
        %v1471 = vrot.slane %v1422, %v1470
        %v1472 = vcombine.low %v1463, %v1471
        %v1473 = vcombine.high %v1463, %v1471
        %v1475 = vunpack.c.l.s4 1934713408
        %v1476 = vunpack.c.0.s8 %v1475
        %v1477 = vlaneseq
        %v1478 = vshrl.u32 %v1477, 7
        %v1479 = vsub.s32 %v1476, %v1478
        %v1480 = vrot.slane %v1472, %v1479
        %v1482 = vunpack.c.l.s4 1934713408
        %v1483 = vunpack.c.0.s8 %v1482
        %v1484 = vlaneseq
        %v1485 = vshrl.u32 %v1484, 7
        %v1486 = vsub.s32 %v1483, %v1485
        %v1487 = vrot.slane %v1473, %v1486
        %v1488 = vcombine.high %v1480, 0
        %v1489 = vcombine.high %v1487, 0
        %v1492 = vpack.i.b16 %v1480, %v1446
        %v1494 = vshrl.u32 %v1446, 16
        %v1495 = vshrl.u32 %v1480, 16
        %v1496 = vpack.i.b16 %v1495, %v1494
        %v1500 = vpack.i.b16 %v1488, %v1454
        %v1502 = vshrl.u32 %v1454, 16
        %v1503 = vshrl.u32 %v1488, 16
        %v1504 = vpack.i.b16 %v1503, %v1502
        %v1508 = vpack.i.b16 %v1487, %v1453
        %v1510 = vshrl.u32 %v1453, 16
        %v1511 = vshrl.u32 %v1487, 16
        %v1512 = vpack.i.b16 %v1511, %v1510
        %v1516 = vpack.i.b16 %v1489, %v1455
        %v1518 = vshrl.u32 %v1455, 16
        %v1519 = vshrl.u32 %v1489, 16
        %v1520 = vpack.i.b16 %v1519, %v1518
        %v1522 = vcombine.low %v1492, %v1508
        %v1524 = vunpack.c.l.s4 1983009808
        %v1525 = vunpack.c.0.s8 %v1524
        %v1526 = vlaneseq
        %v1527 = vshrl.u32 %v1526, 7
        %v1528 = vsub.s32 %v1525, %v1527
        %v1529 = vrot.slane %v1522, %v1528
        %v1530 = vcombine.low %v1500, %v1516
        %v1532 = vunpack.c.l.s4 1983009808
        %v1533 = vunpack.c.0.s8 %v1532
        %v1534 = vlaneseq
        %v1535 = vshrl.u32 %v1534, 7
        %v1536 = vsub.s32 %v1533, %v1535
        %v1537 = vrot.slane %v1530, %v1536
        %v1538 = vcombine.low %v1529, %v1537
        %v1540 = vunpack.c.l.s4 1934713408
        %v1541 = vunpack.c.0.s8 %v1540
        %v1542 = vlaneseq
        %v1543 = vshrl.u32 %v1542, 7
        %v1544 = vsub.s32 %v1541, %v1543
        %v1545 = vrot.slane %v1538, %v1544
        %v1546 = vcombine.high %v1545, 0
        %v1547 = vcombine.low %v1496, %v1512
        %v1549 = vunpack.c.l.s4 1983009808
        %v1550 = vunpack.c.0.s8 %v1549
        %v1551 = vlaneseq
        %v1552 = vshrl.u32 %v1551, 7
        %v1553 = vsub.s32 %v1550, %v1552
        %v1554 = vrot.slane %v1547, %v1553
        %v1555 = vcombine.low %v1504, %v1520
        %v1557 = vunpack.c.l.s4 1983009808
        %v1558 = vunpack.c.0.s8 %v1557
        %v1559 = vlaneseq
        %v1560 = vshrl.u32 %v1559, 7
        %v1561 = vsub.s32 %v1558, %v1560
        %v1562 = vrot.slane %v1555, %v1561
        %v1563 = vcombine.low %v1554, %v1562
        %v1565 = vunpack.c.l.s4 1934713408
        %v1566 = vunpack.c.0.s8 %v1565
        %v1567 = vlaneseq
        %v1568 = vshrl.u32 %v1567, 7
        %v1569 = vsub.s32 %v1566, %v1568
        %v1570 = vrot.slane %v1563, %v1569
        %v1571 = vcombine.high %v1570, 0
        %v1574 = vpack.i.b16 %v1570, %v1545
        %v1575 = vshrl.u32 %v1545, 16
        %v1576 = vshrl.u32 %v1570, 16
        %v1577 = vpack.i.b16 %v1576, %v1575
        %v1580 = vpack.i.b16 %v1571, %v1546
        %v1581 = vshrl.u32 %v1546, 16
        %v1582 = vshrl.u32 %v1571, 16
        %v1583 = vpack.i.b16 %v1582, %v1581
        %v1584 = vld [vmem:[#allocation2] sm:$0xff]
        %v1585 = vld [vmem:[#allocation2 + $0x8] sm:$0xff]
        %v1586 = vld [vmem:[#allocation2 + $0x10] sm:$0xff]
        %v1587 = vld [vmem:[#allocation2 + $0x18] sm:$0xff]
        %v1588 = vld [vmem:[%s632] sm:$0xff]
        %vm1589 = vcmask 64512
        %v1591 = vsel %vm1589, %v1574, 0
        %v1594 = vsel %vm1589, %v1584, 0
        %1596 = vmatprep.subr.bf16.mxu0 0
        %1597 = vmatpush1.bf16.xpose.msra.mxu0 %v1594
        %1598 = vmatprep.subr.bf16.mxu0 0
        %1599 = vmatpush1.bf16.xpose.msra.mxu0 0
        %1600 = vmatprep.subr.bf16.mxu0 0
        %1601 = vmatpush1.bf16.xpose.msra.mxu0 0
        %1602 = vmatprep.subr.bf16.mxu0 0
        %1603 = vmatpush1.bf16.xpose.msra.mxu0 0
        %1604 = vmatprep.subr.bf16.mxu0 0
        %1605 = vmatpush1.bf16.xpose.msra.mxu0 0
        %1606 = vmatprep.subr.bf16.mxu0 0
        %1607 = vmatpush1.bf16.xpose.msra.mxu0 0
        %1608 = vmatprep.subr.bf16.mxu0 0
        %1609 = vmatpush1.bf16.xpose.msra.mxu0 0
        %1610 = vmatprep.subr.bf16.mxu0 0
        %1611 = vmatpush1.bf16.xpose.msra.mxu0 0
        %1612 = vmatprep.subr.bf16.mxu0 0
        %1613 = vmatpush1.bf16.xpose.msra.mxu0 0
        %1614 = vmatprep.subr.bf16.mxu0 0
        %1615 = vmatpush1.bf16.xpose.msra.mxu0 0
        %1616 = vmatprep.subr.bf16.mxu0 0
        %1617 = vmatpush1.bf16.xpose.msra.mxu0 0
        %1618 = vmatprep.subr.bf16.mxu0 0
        %1619 = vmatpush1.bf16.xpose.msra.mxu0 0
        %1620 = vmatprep.subr.bf16.mxu0 0
        %1621 = vmatpush1.bf16.xpose.msra.mxu0 0
        %1622 = vmatprep.subr.bf16.mxu0 0
        %1623 = vmatpush1.bf16.xpose.msra.mxu0 0
        %1624 = vmatprep.subr.bf16.mxu0 0
        %1625 = vmatpush1.bf16.xpose.msra.mxu0 0
        %1626 = vmatprep.subr.bf16.mxu0 0
        %1627 = vmatpush1.bf16.xpose.msra.mxu0 0
        %1628 = vmatprep.mubr.bf16.mxu0 0
        %1629 = vmatmul.mubr.bf16.gmra.mrb[0].mxu0 %v1591
        %v1630 = vpop.f32.mrb[0].mxu0
        %v1631 = vadd.f32 %v1588, %v1630
        %v1632 = vpop.f32.mrb[0].mxu0
        %v1633 = vpop.f32.mrb[0].mxu0
        %v1634 = vpop.f32.mrb[0].mxu0
        %1635 = vdwg.mxu0
        %v1637 = vsel %vm1589, %v1577, 0
        %v1640 = vsel %vm1589, %v1585, 0
        %1642 = vmatprep.subr.bf16.mxu0 0
        %1643 = vmatpush1.bf16.xpose.msra.mxu0 %v1640
        %1644 = vmatprep.subr.bf16.mxu0 0
        %1645 = vmatpush1.bf16.xpose.msra.mxu0 0
        %1646 = vmatprep.subr.bf16.mxu0 0
        %1647 = vmatpush1.bf16.xpose.msra.mxu0 0
        %1648 = vmatprep.subr.bf16.mxu0 0
        %1649 = vmatpush1.bf16.xpose.msra.mxu0 0
        %1650 = vmatprep.subr.bf16.mxu0 0
        %1651 = vmatpush1.bf16.xpose.msra.mxu0 0
        %1652 = vmatprep.subr.bf16.mxu0 0
        %1653 = vmatpush1.bf16.xpose.msra.mxu0 0
        %1654 = vmatprep.subr.bf16.mxu0 0
        %1655 = vmatpush1.bf16.xpose.msra.mxu0 0
        %1656 = vmatprep.subr.bf16.mxu0 0
        %1657 = vmatpush1.bf16.xpose.msra.mxu0 0
        %1658 = vmatprep.subr.bf16.mxu0 0
        %1659 = vmatpush1.bf16.xpose.msra.mxu0 0
        %1660 = vmatprep.subr.bf16.mxu0 0
        %1661 = vmatpush1.bf16.xpose.msra.mxu0 0
        %1662 = vmatprep.subr.bf16.mxu0 0
        %1663 = vmatpush1.bf16.xpose.msra.mxu0 0
        %1664 = vmatprep.subr.bf16.mxu0 0
        %1665 = vmatpush1.bf16.xpose.msra.mxu0 0
        %1666 = vmatprep.subr.bf16.mxu0 0
        %1667 = vmatpush1.bf16.xpose.msra.mxu0 0
        %1668 = vmatprep.subr.bf16.mxu0 0
        %1669 = vmatpush1.bf16.xpose.msra.mxu0 0
        %1670 = vmatprep.subr.bf16.mxu0 0
        %1671 = vmatpush1.bf16.xpose.msra.mxu0 0
        %1672 = vmatprep.subr.bf16.mxu0 0
        %1673 = vmatpush1.bf16.xpose.msra.mxu0 0
        %1674 = vmatprep.mubr.bf16.mxu0 0
        %1675 = vmatmul.mubr.bf16.gmra.mrb[0].mxu0 %v1637
        %v1676 = vpop.f32.mrb[0].mxu0
        %v1677 = vadd.f32 %v1588, %v1676
        %v1678 = vpop.f32.mrb[0].mxu0
        %v1679 = vpop.f32.mrb[0].mxu0
        %v1680 = vpop.f32.mrb[0].mxu0
        %1681 = vdwg.mxu0
        %v1683 = vsel %vm1589, %v1580, 0
        %v1686 = vsel %vm1589, %v1586, 0
        %1688 = vmatprep.subr.bf16.mxu0 0
        %1689 = vmatpush1.bf16.xpose.msra.mxu0 %v1686
        %1690 = vmatprep.subr.bf16.mxu0 0
        %1691 = vmatpush1.bf16.xpose.msra.mxu0 0
        %1692 = vmatprep.subr.bf16.mxu0 0
        %1693 = vmatpush1.bf16.xpose.msra.mxu0 0
        %1694 = vmatprep.subr.bf16.mxu0 0
        %1695 = vmatpush1.bf16.xpose.msra.mxu0 0
        %1696 = vmatprep.subr.bf16.mxu0 0
        %1697 = vmatpush1.bf16.xpose.msra.mxu0 0
        %1698 = vmatprep.subr.bf16.mxu0 0
        %1699 = vmatpush1.bf16.xpose.msra.mxu0 0
        %1700 = vmatprep.subr.bf16.mxu0 0
        %1701 = vmatpush1.bf16.xpose.msra.mxu0 0
        %1702 = vmatprep.subr.bf16.mxu0 0
        %1703 = vmatpush1.bf16.xpose.msra.mxu0 0
        %1704 = vmatprep.subr.bf16.mxu0 0
        %1705 = vmatpush1.bf16.xpose.msra.mxu0 0
        %1706 = vmatprep.subr.bf16.mxu0 0
        %1707 = vmatpush1.bf16.xpose.msra.mxu0 0
        %1708 = vmatprep.subr.bf16.mxu0 0
        %1709 = vmatpush1.bf16.xpose.msra.mxu0 0
        %1710 = vmatprep.subr.bf16.mxu0 0
        %1711 = vmatpush1.bf16.xpose.msra.mxu0 0
        %1712 = vmatprep.subr.bf16.mxu0 0
        %1713 = vmatpush1.bf16.xpose.msra.mxu0 0
        %1714 = vmatprep.subr.bf16.mxu0 0
        %1715 = vmatpush1.bf16.xpose.msra.mxu0 0
        %1716 = vmatprep.subr.bf16.mxu0 0
        %1717 = vmatpush1.bf16.xpose.msra.mxu0 0
        %1718 = vmatprep.subr.bf16.mxu0 0
        %1719 = vmatpush1.bf16.xpose.msra.mxu0 0
        %1720 = vmatprep.mubr.bf16.mxu0 0
        %1721 = vmatmul.mubr.bf16.gmra.mrb[0].mxu0 %v1683
        %v1722 = vpop.f32.mrb[0].mxu0
        %v1723 = vadd.f32 %v1588, %v1722
        %v1724 = vpop.f32.mrb[0].mxu0
        %v1725 = vpop.f32.mrb[0].mxu0
        %v1726 = vpop.f32.mrb[0].mxu0
        %1727 = vdwg.mxu0
        %v1729 = vsel %vm1589, %v1583, 0
        %v1732 = vsel %vm1589, %v1587, 0
        %1734 = vmatprep.subr.bf16.mxu0 0
        %1735 = vmatpush1.bf16.xpose.msra.mxu0 %v1732
        %1736 = vmatprep.subr.bf16.mxu0 0
        %1737 = vmatpush1.bf16.xpose.msra.mxu0 0
        %1738 = vmatprep.subr.bf16.mxu0 0
        %1739 = vmatpush1.bf16.xpose.msra.mxu0 0
        %1740 = vmatprep.subr.bf16.mxu0 0
        %1741 = vmatpush1.bf16.xpose.msra.mxu0 0
        %1742 = vmatprep.subr.bf16.mxu0 0
        %1743 = vmatpush1.bf16.xpose.msra.mxu0 0
        %1744 = vmatprep.subr.bf16.mxu0 0
        %1745 = vmatpush1.bf16.xpose.msra.mxu0 0
        %1746 = vmatprep.subr.bf16.mxu0 0
        %1747 = vmatpush1.bf16.xpose.msra.mxu0 0
        %1748 = vmatprep.subr.bf16.mxu0 0
        %1749 = vmatpush1.bf16.xpose.msra.mxu0 0
        %1750 = vmatprep.subr.bf16.mxu0 0
        %1751 = vmatpush1.bf16.xpose.msra.mxu0 0
        %1752 = vmatprep.subr.bf16.mxu0 0
        %1753 = vmatpush1.bf16.xpose.msra.mxu0 0
        %1754 = vmatprep.subr.bf16.mxu0 0
        %1755 = vmatpush1.bf16.xpose.msra.mxu0 0
        %1756 = vmatprep.subr.bf16.mxu0 0
        %1757 = vmatpush1.bf16.xpose.msra.mxu0 0
        %1758 = vmatprep.subr.bf16.mxu0 0
        %1759 = vmatpush1.bf16.xpose.msra.mxu0 0
        %1760 = vmatprep.subr.bf16.mxu0 0
        %1761 = vmatpush1.bf16.xpose.msra.mxu0 0
        %1762 = vmatprep.subr.bf16.mxu0 0
        %1763 = vmatpush1.bf16.xpose.msra.mxu0 0
        %1764 = vmatprep.subr.bf16.mxu0 0
        %1765 = vmatpush1.bf16.xpose.msra.mxu0 0
        %1766 = vmatprep.mubr.bf16.mxu0 0
        %1767 = vmatmul.mubr.bf16.gmra.mrb[0].mxu0 %v1729
        %v1768 = vpop.f32.mrb[0].mxu0
        %v1769 = vadd.f32 %v1588, %v1768
        %v1770 = vpop.f32.mrb[0].mxu0
        %v1771 = vpop.f32.mrb[0].mxu0
        %v1772 = vpop.f32.mrb[0].mxu0
        %1773 = vdwg.mxu0
        %vm1774 = vcmask 130048
        %v1775 = vsel %vm1774, %v1631, -inf
        %1776 = vmax.xlane.f32.xlu0 %v1775
        %v1777 = vpop.xlane.xlu0 %1776
        %v1778 = vsel %vm1774, %v1677, -inf
        %1779 = vmax.xlane.f32.xlu0 %v1778
        %v1780 = vpop.xlane.xlu0 %1779
        %v1781 = vsel %vm1774, %v1723, -inf
        %1782 = vmax.xlane.f32.xlu0 %v1781
        %v1783 = vpop.xlane.xlu0 %1782
        %v1784 = vsel %vm1774, %v1769, -inf
        %1785 = vmax.xlane.f32.xlu0 %v1784
        %v1786 = vpop.xlane.xlu0 %1785
        %v1787 = vsub.f32 %v1631, %v1777
        %v1788 = vsub.f32 %v1677, %v1780
        %v1789 = vsub.f32 %v1723, %v1783
        %v1790 = vsub.f32 %v1769, %v1786
        %v1791 = vmul.f32 %v1787, 1.442695
        %v1792 = vpow.pop %v1791
        %v1793 = vmul.f32 %v1788, 1.442695
        %v1794 = vpow.pop %v1793
        %v1795 = vmul.f32 %v1789, 1.442695
        %v1796 = vpow.pop %v1795
        %v1797 = vmul.f32 %v1790, 1.442695
        %v1798 = vpow.pop %v1797
        %v1799 = vsel %vm1774, %v1792, 0.0
        %1800 = vadd.xlane.f32.xlu0 %v1799
        %v1801 = vpop.xlane.xlu0 %1800
        %v1802 = vsel %vm1774, %v1794, 0.0
        %1803 = vadd.xlane.f32.xlu0 %v1802
        %v1804 = vpop.xlane.xlu0 %1803
        %v1805 = vsel %vm1774, %v1796, 0.0
        %1806 = vadd.xlane.f32.xlu0 %v1805
        %v1807 = vpop.xlane.xlu0 %1806
        %v1808 = vsel %vm1774, %v1798, 0.0
        %1809 = vadd.xlane.f32.xlu0 %v1808
        %v1810 = vpop.xlane.xlu0 %1809
        %v1811 = vrcp.pop %v1801
        %v1812 = vrcp.pop %v1804
        %v1813 = vrcp.pop %v1807
        %v1814 = vrcp.pop %v1810
        %v1815 = vmul.f32 %v1792, %v1811
        %v1816 = vmul.f32 %v1794, %v1812
        %v1817 = vmul.f32 %v1796, %v1813
        %v1818 = vmul.f32 %v1798, %v1814
        %v1819 = vpack.c.bf16 %v1815, %v1815
        %v1820 = vpack.c.bf16 %v1816, %v1816
        %v1821 = vpack.c.bf16 %v1817, %v1817
        %v1822 = vpack.c.bf16 %v1818, %v1818
        %v1823 = vld [vmem:[#allocation3] sm:$0xff]
        %v1824 = vld [vmem:[#allocation3 + $0x8] sm:$0xff]
        %v1825 = vld [vmem:[#allocation3 + $0x10] sm:$0xff]
        %v1826 = vld [vmem:[#allocation3 + $0x18] sm:$0xff]
        %v1828 = vsel %vm1774, %v1819, 0
        %1830 = vmatprep.subr.bf16.mxu0 0
        %1831 = vmatpush1.bf16.msra.mxu0 %v1823
        %1832 = vmatprep.subr.bf16.mxu0 0
        %1833 = vmatpush1.bf16.msra.mxu0 0
        %1834 = vmatprep.subr.bf16.mxu0 0
        %1835 = vmatpush1.bf16.msra.mxu0 0
        %1836 = vmatprep.subr.bf16.mxu0 0
        %1837 = vmatpush1.bf16.msra.mxu0 0
        %1838 = vmatprep.subr.bf16.mxu0 0
        %1839 = vmatpush1.bf16.msra.mxu0 0
        %1840 = vmatprep.subr.bf16.mxu0 0
        %1841 = vmatpush1.bf16.msra.mxu0 0
        %1842 = vmatprep.subr.bf16.mxu0 0
        %1843 = vmatpush1.bf16.msra.mxu0 0
        %1844 = vmatprep.subr.bf16.mxu0 0
        %1845 = vmatpush1.bf16.msra.mxu0 0
        %1846 = vmatprep.subr.bf16.mxu0 0
        %1847 = vmatpush1.bf16.msra.mxu0 0
        %1848 = vmatprep.subr.bf16.mxu0 0
        %1849 = vmatpush1.bf16.msra.mxu0 0
        %1850 = vmatprep.subr.bf16.mxu0 0
        %1851 = vmatpush1.bf16.msra.mxu0 0
        %1852 = vmatprep.subr.bf16.mxu0 0
        %1853 = vmatpush1.bf16.msra.mxu0 0
        %1854 = vmatprep.subr.bf16.mxu0 0
        %1855 = vmatpush1.bf16.msra.mxu0 0
        %1856 = vmatprep.subr.bf16.mxu0 0
        %1857 = vmatpush1.bf16.msra.mxu0 0
        %1858 = vmatprep.subr.bf16.mxu0 0
        %1859 = vmatpush1.bf16.msra.mxu0 0
        %1860 = vmatprep.subr.bf16.mxu0 0
        %1861 = vmatpush1.bf16.msra.mxu0 0
        %1862 = vmatprep.mubr.bf16.mxu0 0
        %1863 = vmatmul.mubr.bf16.gmra.mrb[0].mxu0 %v1828
        %v1864 = vpop.f32.mrb[0].mxu0
        %v1865 = vadd.f32 0.0, %v1864
        %v1866 = vpop.f32.mrb[0].mxu0
        %v1867 = vpop.f32.mrb[0].mxu0
        %v1868 = vpop.f32.mrb[0].mxu0
        %1869 = vdwg.mxu0
        %v1871 = vsel %vm1774, %v1820, 0
        %1873 = vmatprep.subr.bf16.mxu0 0
        %1874 = vmatpush1.bf16.msra.mxu0 %v1824
        %1875 = vmatprep.subr.bf16.mxu0 0
        %1876 = vmatpush1.bf16.msra.mxu0 0
        %1877 = vmatprep.subr.bf16.mxu0 0
        %1878 = vmatpush1.bf16.msra.mxu0 0
        %1879 = vmatprep.subr.bf16.mxu0 0
        %1880 = vmatpush1.bf16.msra.mxu0 0
        %1881 = vmatprep.subr.bf16.mxu0 0
        %1882 = vmatpush1.bf16.msra.mxu0 0
        %1883 = vmatprep.subr.bf16.mxu0 0
        %1884 = vmatpush1.bf16.msra.mxu0 0
        %1885 = vmatprep.subr.bf16.mxu0 0
        %1886 = vmatpush1.bf16.msra.mxu0 0
        %1887 = vmatprep.subr.bf16.mxu0 0
        %1888 = vmatpush1.bf16.msra.mxu0 0
        %1889 = vmatprep.subr.bf16.mxu0 0
        %1890 = vmatpush1.bf16.msra.mxu0 0
        %1891 = vmatprep.subr.bf16.mxu0 0
        %1892 = vmatpush1.bf16.msra.mxu0 0
        %1893 = vmatprep.subr.bf16.mxu0 0
        %1894 = vmatpush1.bf16.msra.mxu0 0
        %1895 = vmatprep.subr.bf16.mxu0 0
        %1896 = vmatpush1.bf16.msra.mxu0 0
        %1897 = vmatprep.subr.bf16.mxu0 0
        %1898 = vmatpush1.bf16.msra.mxu0 0
        %1899 = vmatprep.subr.bf16.mxu0 0
        %1900 = vmatpush1.bf16.msra.mxu0 0
        %1901 = vmatprep.subr.bf16.mxu0 0
        %1902 = vmatpush1.bf16.msra.mxu0 0
        %1903 = vmatprep.subr.bf16.mxu0 0
        %1904 = vmatpush1.bf16.msra.mxu0 0
        %1905 = vmatprep.mubr.bf16.mxu0 0
        %1906 = vmatmul.mubr.bf16.gmra.mrb[0].mxu0 %v1871
        %v1907 = vpop.f32.mrb[0].mxu0
        %v1908 = vadd.f32 0.0, %v1907
        %v1909 = vpop.f32.mrb[0].mxu0
        %v1910 = vpop.f32.mrb[0].mxu0
        %v1911 = vpop.f32.mrb[0].mxu0
        %1912 = vdwg.mxu0
        %v1914 = vsel %vm1774, %v1821, 0
        %1916 = vmatprep.subr.bf16.mxu0 0
        %1917 = vmatpush1.bf16.msra.mxu0 %v1825
        %1918 = vmatprep.subr.bf16.mxu0 0
        %1919 = vmatpush1.bf16.msra.mxu0 0
        %1920 = vmatprep.subr.bf16.mxu0 0
        %1921 = vmatpush1.bf16.msra.mxu0 0
        %1922 = vmatprep.subr.bf16.mxu0 0
        %1923 = vmatpush1.bf16.msra.mxu0 0
        %1924 = vmatprep.subr.bf16.mxu0 0
        %1925 = vmatpush1.bf16.msra.mxu0 0
        %1926 = vmatprep.subr.bf16.mxu0 0
        %1927 = vmatpush1.bf16.msra.mxu0 0
        %1928 = vmatprep.subr.bf16.mxu0 0
        %1929 = vmatpush1.bf16.msra.mxu0 0
        %1930 = vmatprep.subr.bf16.mxu0 0
        %1931 = vmatpush1.bf16.msra.mxu0 0
        %1932 = vmatprep.subr.bf16.mxu0 0
        %1933 = vmatpush1.bf16.msra.mxu0 0
        %1934 = vmatprep.subr.bf16.mxu0 0
        %1935 = vmatpush1.bf16.msra.mxu0 0
        %1936 = vmatprep.subr.bf16.mxu0 0
        %1937 = vmatpush1.bf16.msra.mxu0 0
        %1938 = vmatprep.subr.bf16.mxu0 0
        %1939 = vmatpush1.bf16.msra.mxu0 0
        %1940 = vmatprep.subr.bf16.mxu0 0
        %1941 = vmatpush1.bf16.msra.mxu0 0
        %1942 = vmatprep.subr.bf16.mxu0 0
        %1943 = vmatpush1.bf16.msra.mxu0 0
        %1944 = vmatprep.subr.bf16.mxu0 0
        %1945 = vmatpush1.bf16.msra.mxu0 0
        %1946 = vmatprep.subr.bf16.mxu0 0
        %1947 = vmatpush1.bf16.msra.mxu0 0
        %1948 = vmatprep.mubr.bf16.mxu0 0
        %1949 = vmatmul.mubr.bf16.gmra.mrb[0].mxu0 %v1914
        %v1950 = vpop.f32.mrb[0].mxu0
        %v1951 = vadd.f32 0.0, %v1950
        %v1952 = vpop.f32.mrb[0].mxu0
        %v1953 = vpop.f32.mrb[0].mxu0
        %v1954 = vpop.f32.mrb[0].mxu0
        %1955 = vdwg.mxu0
        %v1957 = vsel %vm1774, %v1822, 0
        %1959 = vmatprep.subr.bf16.mxu0 0
        %1960 = vmatpush1.bf16.msra.mxu0 %v1826
        %1961 = vmatprep.subr.bf16.mxu0 0
        %1962 = vmatpush1.bf16.msra.mxu0 0
        %1963 = vmatprep.subr.bf16.mxu0 0
        %1964 = vmatpush1.bf16.msra.mxu0 0
        %1965 = vmatprep.subr.bf16.mxu0 0
        %1966 = vmatpush1.bf16.msra.mxu0 0
        %1967 = vmatprep.subr.bf16.mxu0 0
        %1968 = vmatpush1.bf16.msra.mxu0 0
        %1969 = vmatprep.subr.bf16.mxu0 0
        %1970 = vmatpush1.bf16.msra.mxu0 0
        %1971 = vmatprep.subr.bf16.mxu0 0
        %1972 = vmatpush1.bf16.msra.mxu0 0
        %1973 = vmatprep.subr.bf16.mxu0 0
        %1974 = vmatpush1.bf16.msra.mxu0 0
        %1975 = vmatprep.subr.bf16.mxu0 0
        %1976 = vmatpush1.bf16.msra.mxu0 0
        %1977 = vmatprep.subr.bf16.mxu0 0
        %1978 = vmatpush1.bf16.msra.mxu0 0
        %1979 = vmatprep.subr.bf16.mxu0 0
        %1980 = vmatpush1.bf16.msra.mxu0 0
        %1981 = vmatprep.subr.bf16.mxu0 0
        %1982 = vmatpush1.bf16.msra.mxu0 0
        %1983 = vmatprep.subr.bf16.mxu0 0
        %1984 = vmatpush1.bf16.msra.mxu0 0
        %1985 = vmatprep.subr.bf16.mxu0 0
        %1986 = vmatpush1.bf16.msra.mxu0 0
        %1987 = vmatprep.subr.bf16.mxu0 0
        %1988 = vmatpush1.bf16.msra.mxu0 0
        %1989 = vmatprep.subr.bf16.mxu0 0
        %1990 = vmatpush1.bf16.msra.mxu0 0
        %1991 = vmatprep.mubr.bf16.mxu0 0
        %1992 = vmatmul.mubr.bf16.gmra.mrb[0].mxu0 %v1957
        %v1993 = vpop.f32.mrb[0].mxu0
        %v1994 = vadd.f32 0.0, %v1993
        %v1995 = vpop.f32.mrb[0].mxu0
        %v1996 = vpop.f32.mrb[0].mxu0
        %v1997 = vpop.f32.mrb[0].mxu0
        %1998 = vdwg.mxu0
        %v1999 = vcombine.low %v1865, %v1951
        %v2000 = vcombine.high %v1865, %v1951
        %v2002 = vunpack.c.l.s4 1983009808
        %v2003 = vunpack.c.0.s8 %v2002
        %v2004 = vlaneseq
        %v2005 = vshrl.u32 %v2004, 7
        %v2006 = vsub.s32 %v2003, %v2005
        %v2007 = vrot.slane %v1999, %v2006
        %v2009 = vunpack.c.l.s4 1983009808
        %v2010 = vunpack.c.0.s8 %v2009
        %v2011 = vlaneseq
        %v2012 = vshrl.u32 %v2011, 7
        %v2013 = vsub.s32 %v2010, %v2012
        %v2014 = vrot.slane %v2000, %v2013
        %v2015 = vcombine.low %v1908, %v1994
        %v2016 = vcombine.high %v1908, %v1994
        %v2018 = vunpack.c.l.s4 1983009808
        %v2019 = vunpack.c.0.s8 %v2018
        %v2020 = vlaneseq
        %v2021 = vshrl.u32 %v2020, 7
        %v2022 = vsub.s32 %v2019, %v2021
        %v2023 = vrot.slane %v2015, %v2022
        %v2025 = vunpack.c.l.s4 1983009808
        %v2026 = vunpack.c.0.s8 %v2025
        %v2027 = vlaneseq
        %v2028 = vshrl.u32 %v2027, 7
        %v2029 = vsub.s32 %v2026, %v2028
        %v2030 = vrot.slane %v2016, %v2029
        %v2031 = vcombine.low %v2007, %v2023
        %v2032 = vcombine.high %v2007, %v2023
        %v2034 = vunpack.c.l.s4 1934713408
        %v2035 = vunpack.c.0.s8 %v2034
        %v2036 = vlaneseq
        %v2037 = vshrl.u32 %v2036, 7
        %v2038 = vsub.s32 %v2035, %v2037
        %v2039 = vrot.slane %v2031, %v2038
        %v2041 = vunpack.c.l.s4 1934713408
        %v2042 = vunpack.c.0.s8 %v2041
        %v2043 = vlaneseq
        %v2044 = vshrl.u32 %v2043, 7
        %v2045 = vsub.s32 %v2042, %v2044
        %v2046 = vrot.slane %v2032, %v2045
        %v2047 = vcombine.low %v2014, %v2030
        %v2048 = vcombine.high %v2014, %v2030
        %v2050 = vunpack.c.l.s4 1934713408
        %v2051 = vunpack.c.0.s8 %v2050
        %v2052 = vlaneseq
        %v2053 = vshrl.u32 %v2052, 7
        %v2054 = vsub.s32 %v2051, %v2053
        %v2055 = vrot.slane %v2047, %v2054
        %v2057 = vunpack.c.l.s4 1934713408
        %v2058 = vunpack.c.0.s8 %v2057
        %v2059 = vlaneseq
        %v2060 = vshrl.u32 %v2059, 7
        %v2061 = vsub.s32 %v2058, %v2060
        %v2062 = vrot.slane %v2048, %v2061
        %v2063 = vcombine.high %v2039, 0.0
        %v2064 = vcombine.high %v2046, 0.0
        %v2065 = vcombine.high %v2055, 0.0
        %v2066 = vcombine.high %v2062, 0.0
        %v2067 = vcombine.low %v2039, %v2046
        %v2069 = vunpack.c.l.s4 1983009808
        %v2070 = vunpack.c.0.s8 %v2069
        %v2071 = vlaneseq
        %v2072 = vshrl.u32 %v2071, 7
        %v2073 = vsub.s32 %v2070, %v2072
        %v2074 = vrot.slane %v2067, %v2073
        %v2075 = vcombine.low %v2063, %v2064
        %v2077 = vunpack.c.l.s4 1983009808
        %v2078 = vunpack.c.0.s8 %v2077
        %v2079 = vlaneseq
        %v2080 = vshrl.u32 %v2079, 7
        %v2081 = vsub.s32 %v2078, %v2080
        %v2082 = vrot.slane %v2075, %v2081
        %v2083 = vcombine.low %v2055, %v2062
        %v2085 = vunpack.c.l.s4 1983009808
        %v2086 = vunpack.c.0.s8 %v2085
        %v2087 = vlaneseq
        %v2088 = vshrl.u32 %v2087, 7
        %v2089 = vsub.s32 %v2086, %v2088
        %v2090 = vrot.slane %v2083, %v2089
        %v2091 = vcombine.low %v2065, %v2066
        %v2093 = vunpack.c.l.s4 1983009808
        %v2094 = vunpack.c.0.s8 %v2093
        %v2095 = vlaneseq
        %v2096 = vshrl.u32 %v2095, 7
        %v2097 = vsub.s32 %v2094, %v2096
        %v2098 = vrot.slane %v2091, %v2097
        %v2099 = vcombine.low %v2074, %v2082
        %v2100 = vcombine.high %v2074, %v2082
        %v2102 = vunpack.c.l.s4 1934713408
        %v2103 = vunpack.c.0.s8 %v2102
        %v2104 = vlaneseq
        %v2105 = vshrl.u32 %v2104, 7
        %v2106 = vsub.s32 %v2103, %v2105
        %v2107 = vrot.slane %v2099, %v2106
        %v2109 = vunpack.c.l.s4 1934713408
        %v2110 = vunpack.c.0.s8 %v2109
        %v2111 = vlaneseq
        %v2112 = vshrl.u32 %v2111, 7
        %v2113 = vsub.s32 %v2110, %v2112
        %v2114 = vrot.slane %v2100, %v2113
        %v2115 = vcombine.low %v2090, %v2098
        %v2116 = vcombine.high %v2090, %v2098
        %v2118 = vunpack.c.l.s4 1934713408
        %v2119 = vunpack.c.0.s8 %v2118
        %v2120 = vlaneseq
        %v2121 = vshrl.u32 %v2120, 7
        %v2122 = vsub.s32 %v2119, %v2121
        %v2123 = vrot.slane %v2115, %v2122
        %v2125 = vunpack.c.l.s4 1934713408
        %v2126 = vunpack.c.0.s8 %v2125
        %v2127 = vlaneseq
        %v2128 = vshrl.u32 %v2127, 7
        %v2129 = vsub.s32 %v2126, %v2128
        %v2130 = vrot.slane %v2116, %v2129
        %v2131 = vcombine.low %v2107, %v2123
        %v2132 = vcombine.high %v2107, %v2123
        %v2133 = vcombine.low %v2114, %v2130
        %v2134 = vcombine.high %v2114, %v2130
        %2136 = vrot.lane.b32.xlu0 %v2132, 8
        %v2137 = vpop.permute.xlu0 %2136
        %2140 = vrot.lane.b32.xlu0 %v2133, 16
        %v2141 = vpop.permute.xlu0 %2140
        %2144 = vrot.lane.b32.xlu0 %v2134, 24
        %v2145 = vpop.permute.xlu0 %2144
        %v2147 = vsel %vm1589, %v2131, %v2137
        %v2148 = vsel %vm1774, %v2147, %v2141
        %vm2149 = vcmask 195584
        %v2150 = vsel %vm2149, %v2148, %v2145
        %v2151 = vpack.c.bf16 %v2150, %v2150
        %v2152 = vld [vmem:[#allocation12] sm:$0xf]
        %v2153 = vld [vmem:[#allocation12 + $0x4] sm:$0xf]
        %v2154 = vld [vmem:[#allocation12 + $0x8] sm:$0xf]
        %v2155 = vld [vmem:[#allocation12 + $0xc] sm:$0xf]
        %v2156 = vld [vmem:[#allocation13] sm:$0x1]
        %v2158 = vlaneseq
        %v2159 = vshrl.u32 %v2158, 7
        %v2160 = vsub.s32 0, %v2159
        %v2161 = vrot.slane %v2156, %v2160
        %v2167 = vunpack.c.l.b16 %v2152
        %v2168 = vunpack.c.l.b16 %v2153
        %v2169 = vunpack.c.l.b16 %v2154
        %v2170 = vunpack.c.l.b16 %v2155
        %v2171 = vpack.c.b16 %v2168, %v2167
        %v2172 = vpack.c.b16 %v2170, %v2169
        %v2176 = vsel %vm1318, %v2151, 0
        %2178 = vmatprep.subr.bf16.mxu0 0
        %2179 = vmatpush1.bf16.msra.mxu0 %v2171
        %2180 = vmatprep.subr.bf16.mxu0 0
        %2181 = vmatpush1.bf16.msra.mxu0 %v2172
        %2182 = vmatprep.subr.bf16.mxu0 0
        %2183 = vmatpush1.bf16.msra.mxu0 0
        %2184 = vmatprep.subr.bf16.mxu0 0
        %2185 = vmatpush1.bf16.msra.mxu0 0
        %2186 = vmatprep.subr.bf16.mxu0 0
        %2187 = vmatpush1.bf16.msra.mxu0 0
        %2188 = vmatprep.subr.bf16.mxu0 0
        %2189 = vmatpush1.bf16.msra.mxu0 0
        %2190 = vmatprep.subr.bf16.mxu0 0
        %2191 = vmatpush1.bf16.msra.mxu0 0
        %2192 = vmatprep.subr.bf16.mxu0 0
        %2193 = vmatpush1.bf16.msra.mxu0 0
        %2194 = vmatprep.subr.bf16.mxu0 0
        %2195 = vmatpush1.bf16.msra.mxu0 0
        %2196 = vmatprep.subr.bf16.mxu0 0
        %2197 = vmatpush1.bf16.msra.mxu0 0
        %2198 = vmatprep.subr.bf16.mxu0 0
        %2199 = vmatpush1.bf16.msra.mxu0 0
        %2200 = vmatprep.subr.bf16.mxu0 0
        %2201 = vmatpush1.bf16.msra.mxu0 0
        %2202 = vmatprep.subr.bf16.mxu0 0
        %2203 = vmatpush1.bf16.msra.mxu0 0
        %2204 = vmatprep.subr.bf16.mxu0 0
        %2205 = vmatpush1.bf16.msra.mxu0 0
        %2206 = vmatprep.subr.bf16.mxu0 0
        %2207 = vmatpush1.bf16.msra.mxu0 0
        %2208 = vmatprep.subr.bf16.mxu0 0
        %2209 = vmatpush1.bf16.msra.mxu0 0
        %2210 = vmatprep.mubr.bf16.mxu0 0
        %2211 = vmatmul.mubr.bf16.gmra.mrb[0].mxu0 %v2176
        %v2212 = vpop.f32.mrb[0].mxu0
        %v2213 = vadd.f32 %v2161, %v2212
        %v2214 = vpop.f32.mrb[0].mxu0
        %v2215 = vpop.f32.mrb[0].mxu0
        %v2216 = vpop.f32.mrb[0].mxu0
        %2217 = vdwg.mxu0
        %v2218 = vadd.f32 %v1315, %v2213
        %v2219 = vld [vmem:[%s10] sm:$0x1]
        %v2220 = vld [vmem:[%s11] sm:$0x1]
        %v2221 = vsel %vm1318, %v2218, 0.0
        %2222 = vadd.xlane.f32.xlu0 %v2221
        %v2223 = vpop.xlane.xlu0 %2222
        %v2224 = vmul.f32 %v2223, %v1322
        %v2225 = vsub.f32 %v2218, %v2224
        %v2226 = vmul.f32 %v2225, %v2225
        %v2227 = vsel %vm1318, %v2226, 0.0
        %2228 = vadd.xlane.f32.xlu0 %v2227
        %v2229 = vpop.xlane.xlu0 %2228
        %v2230 = vmul.f32 %v2229, %v1322
        %v2231 = vadd.f32 %v2230, 1e-05
        %v2232 = vrsqrt.pop %v2231
        %v2233 = vmul.f32 %v2225, %v2232
        %v2235 = vlaneseq
        %v2236 = vshrl.u32 %v2235, 7
        %v2237 = vsub.s32 0, %v2236
        %v2238 = vrot.slane %v2219, %v2237
        %v2240 = vmul.f32 %v2233, %v2238
        %v2242 = vlaneseq
        %v2243 = vshrl.u32 %v2242, 7
        %v2244 = vsub.s32 0, %v2243
        %v2245 = vrot.slane %v2220, %v2244
        %v2247 = vadd.f32 %v2240, %v2245
        %v2248 = vpack.c.bf16 %v2247, %v2247
        %v2249 = vld [vmem:[%s12] sm:$0xf]
        %v2250 = vld [vmem:[%s12 + $0x4] sm:$0xf]
        %v2251 = vld [vmem:[%s12 + $0x8] sm:$0xf]
        %v2252 = vld [vmem:[%s12 + $0xc] sm:$0xf]
        %v2253 = vld [vmem:[%s13] sm:$0x1]
        %v2255 = vlaneseq
        %v2256 = vshrl.u32 %v2255, 7
        %v2257 = vsub.s32 0, %v2256
        %v2258 = vrot.slane %v2253, %v2257
        %v2264 = vunpack.c.l.b16 %v2249
        %v2265 = vunpack.c.l.b16 %v2250
        %v2266 = vunpack.c.l.b16 %v2251
        %v2267 = vunpack.c.l.b16 %v2252
        %v2268 = vpack.c.b16 %v2265, %v2264
        %v2269 = vpack.c.b16 %v2267, %v2266
        %v2273 = vsel %vm1318, %v2248, 0
        %2275 = vmatprep.subr.bf16.mxu0 0
        %2276 = vmatpush1.bf16.msra.mxu0 %v2268
        %2277 = vmatprep.subr.bf16.mxu0 0
        %2278 = vmatpush1.bf16.msra.mxu0 %v2269
        %2279 = vmatprep.subr.bf16.mxu0 0
        %2280 = vmatpush1.bf16.msra.mxu0 0
        %2281 = vmatprep.subr.bf16.mxu0 0
        %2282 = vmatpush1.bf16.msra.mxu0 0
        %2283 = vmatprep.subr.bf16.mxu0 0
        %2284 = vmatpush1.bf16.msra.mxu0 0
        %2285 = vmatprep.subr.bf16.mxu0 0
        %2286 = vmatpush1.bf16.msra.mxu0 0
        %2287 = vmatprep.subr.bf16.mxu0 0
        %2288 = vmatpush1.bf16.msra.mxu0 0
        %2289 = vmatprep.subr.bf16.mxu0 0
        %2290 = vmatpush1.bf16.msra.mxu0 0
        %2291 = vmatprep.subr.bf16.mxu0 0
        %2292 = vmatpush1.bf16.msra.mxu0 0
        %2293 = vmatprep.subr.bf16.mxu0 0
        %2294 = vmatpush1.bf16.msra.mxu0 0
        %2295 = vmatprep.subr.bf16.mxu0 0
        %2296 = vmatpush1.bf16.msra.mxu0 0
        %2297 = vmatprep.subr.bf16.mxu0 0
        %2298 = vmatpush1.bf16.msra.mxu0 0
        %2299 = vmatprep.subr.bf16.mxu0 0
        %2300 = vmatpush1.bf16.msra.mxu0 0
        %2301 = vmatprep.subr.bf16.mxu0 0
        %2302 = vmatpush1.bf16.msra.mxu0 0
        %2303 = vmatprep.subr.bf16.mxu0 0
        %2304 = vmatpush1.bf16.msra.mxu0 0
        %2305 = vmatprep.subr.bf16.mxu0 0
        %2306 = vmatpush1.bf16.msra.mxu0 0
        %2307 = vmatprep.mubr.bf16.mxu0 0
        %2308 = vmatmul.mubr.bf16.gmra.mrb[0].mxu0 %v2273
        %v2309 = vpop.f32.mrb[0].mxu0
        %v2310 = vadd.f32 %v2258, %v2309
        %v2311 = vpop.f32.mrb[0].mxu0
        %v2312 = vpop.f32.mrb[0].mxu0
        %v2313 = vpop.f32.mrb[0].mxu0
        %2314 = vdwg.mxu0
        %v2315 = vmax.f32 %v2310, 0.0
        %v2316 = vpack.c.bf16 %v2315, %v2315
        %v2317 = vld [vmem:[%s14] sm:$0xf]
        %v2318 = vld [vmem:[%s14 + $0x4] sm:$0xf]
        %v2319 = vld [vmem:[%s14 + $0x8] sm:$0xf]
        %v2320 = vld [vmem:[%s14 + $0xc] sm:$0xf]
        %v2321 = vld [vmem:[%s14 + $0x10] sm:$0xf]
        %v2322 = vld [vmem:[%s14 + $0x14] sm:$0xf]
        %v2323 = vld [vmem:[%s14 + $0x18] sm:$0xf]
        %v2324 = vld [vmem:[%s14 + $0x1c] sm:$0xf]
        %v2325 = vld [vmem:[%s15] sm:$0x1]
        %v2327 = vlaneseq
        %v2328 = vshrl.u32 %v2327, 7
        %v2329 = vsub.s32 0, %v2328
        %v2330 = vrot.slane %v2325, %v2329
        %v2340 = vunpack.c.l.b16 %v2317
        %v2341 = vunpack.c.l.b16 %v2318
        %v2342 = vunpack.c.l.b16 %v2319
        %v2343 = vunpack.c.l.b16 %v2320
        %v2344 = vunpack.c.l.b16 %v2321
        %v2345 = vunpack.c.l.b16 %v2322
        %v2346 = vunpack.c.l.b16 %v2323
        %v2347 = vunpack.c.l.b16 %v2324
        %v2348 = vpack.c.b16 %v2341, %v2340
        %v2349 = vpack.c.b16 %v2343, %v2342
        %v2350 = vpack.c.b16 %v2345, %v2344
        %v2351 = vpack.c.b16 %v2347, %v2346
        %vm2356 = vcmask 523264
        %v2358 = vsel %vm2356, %v2316, 0
        %2360 = vmatprep.subr.bf16.mxu0 0
        %2361 = vmatpush1.bf16.msra.mxu0 %v2348
        %2362 = vmatprep.subr.bf16.mxu0 0
        %2363 = vmatpush1.bf16.msra.mxu0 %v2349
        %2364 = vmatprep.subr.bf16.mxu0 0
        %2365 = vmatpush1.bf16.msra.mxu0 %v2350
        %2366 = vmatprep.subr.bf16.mxu0 0
        %2367 = vmatpush1.bf16.msra.mxu0 %v2351
        %2368 = vmatprep.subr.bf16.mxu0 0
        %2369 = vmatpush1.bf16.msra.mxu0 0
        %2370 = vmatprep.subr.bf16.mxu0 0
        %2371 = vmatpush1.bf16.msra.mxu0 0
        %2372 = vmatprep.subr.bf16.mxu0 0
        %2373 = vmatpush1.bf16.msra.mxu0 0
        %2374 = vmatprep.subr.bf16.mxu0 0
        %2375 = vmatpush1.bf16.msra.mxu0 0
        %2376 = vmatprep.subr.bf16.mxu0 0
        %2377 = vmatpush1.bf16.msra.mxu0 0
        %2378 = vmatprep.subr.bf16.mxu0 0
        %2379 = vmatpush1.bf16.msra.mxu0 0
        %2380 = vmatprep.subr.bf16.mxu0 0
        %2381 = vmatpush1.bf16.msra.mxu0 0
        %2382 = vmatprep.subr.bf16.mxu0 0
        %2383 = vmatpush1.bf16.msra.mxu0 0
        %2384 = vmatprep.subr.bf16.mxu0 0
        %2385 = vmatpush1.bf16.msra.mxu0 0
        %2386 = vmatprep.subr.bf16.mxu0 0
        %2387 = vmatpush1.bf16.msra.mxu0 0
        %2388 = vmatprep.subr.bf16.mxu0 0
        %2389 = vmatpush1.bf16.msra.mxu0 0
        %2390 = vmatprep.subr.bf16.mxu0 0
        %2391 = vmatpush1.bf16.msra.mxu0 0
        %2392 = vmatprep.mubr.bf16.mxu0 0
        %2393 = vmatmul.mubr.bf16.gmra.mrb[0].mxu0 %v2358
        %v2394 = vpop.f32.mrb[0].mxu0
        %v2395 = vadd.f32 %v2330, %v2394
        %v2396 = vpop.f32.mrb[0].mxu0
        %v2397 = vpop.f32.mrb[0].mxu0
        %v2398 = vpop.f32.mrb[0].mxu0
        %2399 = vdwg.mxu0
        %v2400 = vadd.f32 %v2218, %v2395
        %2401 = vst.msk [vmem:[%s623] sm:$0xff] %vm1318, %v2400
        %s2402 = sand.u32 %s402, 1
        %s2403 = scalar_lea.sflag [#allocation6], %s2402
        %s2404 = sand.u32 %s402, 1
        %s2405 = smul.addr %s2404, 8
        %s2406 = scalar_lea.vmem [#allocation15], %s2405
        // Predicated region
        $region113: #{tpu_custom_call.1} parent=83 // pred_check
          %p2407 = pneg %p412
        $region114: #{tpu_custom_call.1} parent=83 // pred_check_branch
          %2409 = sbr.rel (%p2407) target = $region116
        $region115: #{tpu_custom_call.1} parent=83 // pred_region
          %s2411 = ssub.s32 128, 128
          %2412 = vsyncadd %s2403, %s2411
          %s2413 = smul.addr %s38, 2
          %s2414 = sadd.s32 %s39, %s2413
          %s2415 = smul.addr %s2414, 128
          %s2416 = scalar_lea.hbm %s16, %s2415
          %s2418 = sshll.u32 %s2406, 4
          %s2419 = int_to_ptr.vmem [resolvable:$true] %s2418
          %2421 = dma.vmem_to_hbm [thread:$0]  %s2419, 128, %s2416, %s2403
        $region116: #{tpu_custom_call.1} parent=83 // pred_fallthru
          _
      $region84: #{tpu_custom_call.1} parent=5 // pred_fallthru
        _
      %p2422 = scmp.le.s32.totalorder 2, %s29
      // Predicated region
      $region117: #{tpu_custom_call.1} parent=5 // pred_check
        %p2423 = pneg %p2422
      $region118: #{tpu_custom_call.1} parent=5 // pred_check_branch
        %2425 = sbr.rel (%p2423) target = $region120
      $region119: #{tpu_custom_call.1} parent=5 // pred_region
        %s2426 = ssub.s32 %s29, 2
        // Predicated region
        $region121: #{tpu_custom_call.1} parent=119 // pred_check
          %p2427 = pneg %p418
        $region122: #{tpu_custom_call.1} parent=119 // pred_check_branch
          %2429 = sbr.rel (%p2427) target = $region124
        $region123: #{tpu_custom_call.1} parent=119 // pred_region
          %s2430 = sand.u32 %s403, 1
          %s2431 = scalar_lea.sflag [#allocation6], %s2430
          %s2432 = sand.u32 %s403, 1
          %s2433 = smul.addr %s2432, 8
          %s2434 = scalar_lea.vmem [#allocation15], %s2433
          %2435 = dma.done %s2431, 128
        $region124: #{tpu_custom_call.1} parent=119 // pred_fallthru
          _
      $region120: #{tpu_custom_call.1} parent=5 // pred_fallthru
        _
    $region6: #{tpu_custom_call.1} parent=1 // loop_footer
      %s33 = sadd.s32 1, %s29
    $region7: #{tpu_custom_call.1} parent=1 // loop_footer_branch
      %28 = sbr.rel target = $region3
    $region8: #{tpu_custom_call.1} parent=1 // loop_exit
      _
    %2436 = vsyncpa [#allocation5], 1
    %s2437 = scalar_lea.sflag [#allocation5], 1
    %2438 = vsyncpa %s2437, 1
    %2439 = vsyncpa [#allocation8], 1
    %2440 = vsyncpa [#allocation11], 1
    %2441 = vsyncpa [#allocation14], 1
    %2442 = vsyncpa [#allocation6], 1
    %s2443 = scalar_lea.sflag [#allocation6], 1
    %2444 = vsyncpa %s2443, 1

// kernel: tpu_custom_call.1
$region0: #{tpu_custom_call.1}
  #allocation0 [shape = 'u32[]', space=smem, size = 0x4, offset = 0x4, fixed_abs, tag = 'smem constant byte address 0x4 - core index']
  #allocation1 [shape = 'u32[144,128]{1,0:T(1,128)}', space=vmem, size = 0x12000, scoped, tag = 'internal scratch']
  #allocation2 [shape = 'bf16[4,16,8]{2,1,0:T(16,128)(2,1)}', space=vmem, size = 0x4000, scoped, tag = 'scratch operand']
  #allocation3 [shape = 'bf16[4,16,8]{2,1,0:T(16,128)(2,1)}', space=vmem, size = 0x4000, scoped, tag = 'scratch operand']
  %s0 = inlined_call_operand.vmem [shape: f32[2,16,32], index: 0, kind: input, shape index: {}]
  %s1 = inlined_call_operand.vmem [shape: f32[16,16], index: 1, kind: input, shape index: {}]
  %s2 = inlined_call_operand.vmem [shape: f32[1,32], index: 2, kind: input, shape index: {}]
  %s3 = inlined_call_operand.vmem [shape: f32[1,32], index: 3, kind: input, shape index: {}]
  %s4 = inlined_call_operand.hbm [shape: bf16[32,32], index: 4, kind: input, shape index: {}]
  %s5 = inlined_call_operand.hbm [shape: f32[1,32], index: 5, kind: input, shape index: {}]
  %s6 = inlined_call_operand.hbm [shape: bf16[32,64], index: 6, kind: input, shape index: {}]
  %s7 = inlined_call_operand.hbm [shape: f32[1,64], index: 7, kind: input, shape index: {}]
  %s8 = inlined_call_operand.hbm [shape: bf16[32,32], index: 8, kind: input, shape index: {}]
  %s9 = inlined_call_operand.hbm [shape: f32[1,32], index: 9, kind: input, shape index: {}]
  %s10 = inlined_call_operand.vmem [shape: f32[1,32], index: 10, kind: input, shape index: {}]
  %s11 = inlined_call_operand.vmem [shape: f32[1,32], index: 11, kind: input, shape index: {}]
  %s12 = inlined_call_operand.vmem [shape: bf16[32,64], index: 12, kind: input, shape index: {}]
  %s13 = inlined_call_operand.vmem [shape: f32[1,64], index: 13, kind: input, shape index: {}]
  %s14 = inlined_call_operand.vmem [shape: bf16[64,32], index: 14, kind: input, shape index: {}]
  %s15 = inlined_call_operand.vmem [shape: f32[1,32], index: 15, kind: input, shape index: {}]
  %s16 = inlined_call_operand.hbm [shape: f32[2,16,32], index: 16, kind: output, shape index: {}]
  %s17 = sld [smem:[#allocation0]]
  $region125: #{tpu_custom_call.1} parent=0
    _
  %s19 = ssub.s32 1, %s17
  %s20 = scalar_select 0, %s19, %s17
  $region1: #{tpu_custom_call.1} parent=0
    #allocation4 [shape = 'u8[8192]{0}', space=vmem, size = 0x2000, scoped, tag = 'input window, operand 4, single buffered']
    #allocation5 [shape = 's32[2]{0}', space=sflag, size = 0x8, scoped, tag = 'scoped memory for tpu_custom_call.1']
    #allocation6 [shape = 's32[2]{0}', space=sflag, size = 0x8, scoped, tag = 'scoped memory for tpu_custom_call.1']
    #allocation7 [shape = 'u8[512]{0}', space=vmem, size = 0x400, scoped, tag = 'input window, operand 5, single buffered']
    #allocation8 [shape = 's32[1]{0}', space=sflag, size = 0x4, scoped, tag = 'scoped memory for tpu_custom_call.1']
    #allocation9 [shape = 'u8[8192]{0}', space=vmem, size = 0x2000, scoped, tag = 'input window, operand 6, single buffered']
    #allocation10 [shape = 'u8[512]{0}', space=vmem, size = 0x400, scoped, tag = 'input window, operand 7, single buffered']
    #allocation11 [shape = 's32[1]{0}', space=sflag, size = 0x4, scoped, tag = 'scoped memory for tpu_custom_call.1']
    #allocation12 [shape = 'u8[8192]{0}', space=vmem, size = 0x2000, scoped, tag = 'input window, operand 8, single buffered']
    #allocation13 [shape = 'u8[512]{0}', space=vmem, size = 0x400, scoped, tag = 'input window, operand 9, single buffered']
    #allocation14 [shape = 's32[1]{0}', space=sflag, size = 0x4, scoped, tag = 'scoped memory for tpu_custom_call.1']
    #allocation15 [shape = 'u8[8192]{0}', space=vmem, size = 0x2000, scoped, tag = 'output window, operand 0']
    %21 = vsyncpa [#allocation5], 0
    %22 = vsyncpa [#allocation8], 0
    %23 = vsyncpa [#allocation11], 0
    %24 = vsyncpa [#allocation14], 0
    %25 = vsyncpa [#allocation6], 0
    %s26 = scalar_lea.sflag [#allocation6], 1
    %27 = vsyncpa %s26, 0
    loop: start=0, step=1, limit=6
    $region2: #{tpu_custom_call.1} parent=1 // loop_pre_header
      _
    $region3: #{tpu_custom_call.1} parent=1 // loop_header
      %s29 = sphi 0, %s33
      %p30 = scmp.ge.s32.totalorder %s29, 6
      %s36 = sphi 0, %s48
      %s37 = sphi 0, %s44
      %s38 = sphi 0, %s36
      %s39 = sphi 0, %s37
      %s40 = sphi 0, %s38
      %s41 = sphi 0, %s39
      %s51 = sphi 0, %s53
      %s54 = sphi 0, %s51
      %s55 = sphi 0, %s54
      %s71 = sphi 0, %s55
      %s77 = sphi 0, %s79
      %s80 = sphi 0, %s77
      %s81 = sphi 0, %s80
      %s97 = sphi 0, %s81
      %s101 = sphi 0, %s101
      %s103 = sphi 0, %s101
      %s104 = sphi 0, %s103
      %s118 = sphi 0, %s104
      %s122 = sphi 0, %s122
      %s124 = sphi 0, %s122
      %s125 = sphi 0, %s124
      %s139 = sphi 0, %s125
      %s143 = sphi 0, %s143
      %s145 = sphi 0, %s143
      %s146 = sphi 0, %s145
      %s160 = sphi 0, %s146
      %s164 = sphi 0, %s164
      %s166 = sphi 0, %s164
      %s167 = sphi 0, %s166
      %s181 = sphi 0, %s167
      %s185 = sphi 0, %s185
      %s187 = sphi 0, %s185
      %s188 = sphi 0, %s187
      %s202 = sphi 0, %s188
      %s206 = sphi 0, %s206
      %s208 = sphi 0, %s206
      %s209 = sphi 0, %s208
      %s223 = sphi 0, %s209
      %s227 = sphi 0, %s227
      %s229 = sphi 0, %s227
      %s230 = sphi 0, %s229
      %s244 = sphi 0, %s230
      %s248 = sphi 0, %s248
      %s250 = sphi 0, %s248
      %s251 = sphi 0, %s250
      %s265 = sphi 0, %s251
      %s269 = sphi 0, %s269
      %s271 = sphi 0, %s269
      %s272 = sphi 0, %s271
      %s286 = sphi 0, %s272
      %s290 = sphi 0, %s290
      %s292 = sphi 0, %s290
      %s293 = sphi 0, %s292
      %s307 = sphi 0, %s293
      %s311 = sphi 0, %s311
      %s313 = sphi 0, %s311
      %s314 = sphi 0, %s313
      %s328 = sphi 0, %s314
      %s332 = sphi 0, %s332
      %s334 = sphi 0, %s332
      %s335 = sphi 0, %s334
      %s349 = sphi 0, %s335
      %s353 = sphi 0, %s353
      %s355 = sphi 0, %s353
      %s356 = sphi 0, %s355
      %s370 = sphi 0, %s356
      %s374 = sphi 0, %s374
      %s376 = sphi 0, %s374
      %s377 = sphi 0, %s376
      %s391 = sphi 0, %s377
      %s399 = sphi 0, %s401
      %s402 = sphi 0, %s399
      %s403 = sphi 0, %s402
      %s419 = sphi 0, %s403
    $region4: #{tpu_custom_call.1} parent=1 // loop_header_branch
      %32 = sbr.rel (%p30) target = $region8
    $region5: #{tpu_custom_call.1} parent=1 // loop_body
      %s34 = ssub.s32 %s29, 1
      %s35 = ssub.s32 %s29, 2
      %s42 = sadd.s32 1, %s37
      %p43 = scmp.ge.s32.totalorder %s42, 2
      %s44 = scalar_select %p43, 0, %s42
      %s45 = sadd.s32 1, %s36
      %s46 = scalar_select %p43, %s45, %s36
      %p47 = scmp.ge.s32.totalorder %s46, 2
      %s48 = scalar_select %p47, 0, %s46
      %s49 = ssub.s32 %s36, %s48
      %p50 = scmp.eq.s32.totalorder %s49, 0
      %s52 = sadd.s32 %s51, 1
      %s53 = scalar_select %p50, %s51, %s52
      %p56 = pneg %p50
      %p57 = scmp.eq.s32.totalorder %s29, 3
      %p58 = por %p56, %p57
      %p59 = scmp.ne.s32.totalorder %s51, %s54
      %p60 = scmp.eq.s32.totalorder %s29, 0
      %p61 = por %p59, %p60
      %p62 = scmp.ne.s32.totalorder %s51, %s54
      %p63 = scmp.eq.s32.totalorder %s34, 3
      %p64 = por %p62, %p63
      %p65 = scmp.ne.s32.totalorder %s54, %s55
      %p66 = scmp.eq.s32.totalorder %s34, 0
      %p67 = por %p65, %p66
      %p68 = scmp.ne.s32.totalorder %s54, %s55
      %p69 = scmp.eq.s32.totalorder %s35, 3
      %p70 = por %p68, %p69
      %p72 = scmp.ne.s32.totalorder %s55, %s71
      %p73 = scmp.eq.s32.totalorder %s35, 0
      %p74 = por %p72, %p73
      %s75 = ssub.s32 %s37, %s44
      %p76 = scmp.eq.s32.totalorder %s75, 0
      %s78 = sadd.s32 %s77, 1
      %s79 = scalar_select %p76, %s77, %s78
      %p82 = pneg %p76
      %p83 = scmp.eq.s32.totalorder %s29, 3
      %p84 = por %p82, %p83
      %p85 = scmp.ne.s32.totalorder %s77, %s80
      %p86 = scmp.eq.s32.totalorder %s29, 0
      %p87 = por %p85, %p86
      %p88 = scmp.ne.s32.totalorder %s77, %s80
      %p89 = scmp.eq.s32.totalorder %s34, 3
      %p90 = por %p88, %p89
      %p91 = scmp.ne.s32.totalorder %s80, %s81
      %p92 = scmp.eq.s32.totalorder %s34, 0
      %p93 = por %p91, %p92
      %p94 = scmp.ne.s32.totalorder %s80, %s81
      %p95 = scmp.eq.s32.totalorder %s35, 3
      %p96 = por %p94, %p95
      %p98 = scmp.ne.s32.totalorder %s81, %s97
      %p99 = scmp.eq.s32.totalorder %s35, 0
      %p100 = por %p98, %p99
      %s102 = sadd.s32 %s101, 1
      %p105 = scmp.eq.s32.totalorder %s29, 3
      %p106 = scmp.ne.s32.totalorder %s101, %s103
      %p107 = scmp.eq.s32.totalorder %s29, 0
      %p108 = por %p106, %p107
      %p109 = scmp.ne.s32.totalorder %s101, %s103
      %p110 = scmp.eq.s32.totalorder %s34, 3
      %p111 = por %p109, %p110
      %p112 = scmp.ne.s32.totalorder %s103, %s104
      %p113 = scmp.eq.s32.totalorder %s34, 0
      %p114 = por %p112, %p113
      %p115 = scmp.ne.s32.totalorder %s103, %s104
      %p116 = scmp.eq.s32.totalorder %s35, 3
      %p117 = por %p115, %p116
      %p119 = scmp.ne.s32.totalorder %s104, %s118
      %p120 = scmp.eq.s32.totalorder %s35, 0
      %p121 = por %p119, %p120
      %s123 = sadd.s32 %s122, 1
      %p126 = scmp.eq.s32.totalorder %s29, 3
      %p127 = scmp.ne.s32.totalorder %s122, %s124
      %p128 = scmp.eq.s32.totalorder %s29, 0
      %p129 = por %p127, %p128
      %p130 = scmp.ne.s32.totalorder %s122, %s124
      %p131 = scmp.eq.s32.totalorder %s34, 3
      %p132 = por %p130, %p131
      %p133 = scmp.ne.s32.totalorder %s124, %s125
      %p134 = scmp.eq.s32.totalorder %s34, 0
      %p135 = por %p133, %p134
      %p136 = scmp.ne.s32.totalorder %s124, %s125
      %p137 = scmp.eq.s32.totalorder %s35, 3
      %p138 = por %p136, %p137
      %p140 = scmp.ne.s32.totalorder %s125, %s139
      %p141 = scmp.eq.s32.totalorder %s35, 0
      %p142 = por %p140, %p141
      %s144 = sadd.s32 %s143, 1
      %p147 = scmp.eq.s32.totalorder %s29, 3
      %p148 = scmp.ne.s32.totalorder %s143, %s145
      %p149 = scmp.eq.s32.totalorder %s29, 0
      %p150 = por %p148, %p149
      %p151 = scmp.ne.s32.totalorder %s143, %s145
      %p152 = scmp.eq.s32.totalorder %s34, 3
      %p153 = por %p151, %p152
      %p154 = scmp.ne.s32.totalorder %s145, %s146
      %p155 = scmp.eq.s32.totalorder %s34, 0
      %p156 = por %p154, %p155
      %p157 = scmp.ne.s32.totalorder %s145, %s146
      %p158 = scmp.eq.s32.totalorder %s35, 3
      %p159 = por %p157, %p158
      %p161 = scmp.ne.s32.totalorder %s146, %s160
      %p162 = scmp.eq.s32.totalorder %s35, 0
      %p163 = por %p161, %p162
      %s165 = sadd.s32 %s164, 1
      %p168 = scmp.eq.s32.totalorder %s29, 3
      %p169 = scmp.ne.s32.totalorder %s164, %s166
      %p170 = scmp.eq.s32.totalorder %s29, 0
      %p171 = por %p169, %p170
      %p172 = scmp.ne.s32.totalorder %s164, %s166
      %p173 = scmp.eq.s32.totalorder %s34, 3
      %p174 = por %p172, %p173
      %p175 = scmp.ne.s32.totalorder %s166, %s167
      %p176 = scmp.eq.s32.totalorder %s34, 0
      %p177 = por %p175, %p176
      %p178 = scmp.ne.s32.totalorder %s166, %s167
      %p179 = scmp.eq.s32.totalorder %s35, 3
      %p180 = por %p178, %p179
      %p182 = scmp.ne.s32.totalorder %s167, %s181
      %p183 = scmp.eq.s32.totalorder %s35, 0
      %p184 = por %p182, %p183
      %s186 = sadd.s32 %s185, 1
      %p189 = scmp.eq.s32.totalorder %s29, 3
      %p190 = scmp.ne.s32.totalorder %s185, %s187
      %p191 = scmp.eq.s32.totalorder %s29, 0
      %p192 = por %p190, %p191
      %p193 = scmp.ne.s32.totalorder %s185, %s187
      %p194 = scmp.eq.s32.totalorder %s34, 3
      %p195 = por %p193, %p194
      %p196 = scmp.ne.s32.totalorder %s187, %s188
      %p197 = scmp.eq.s32.totalorder %s34, 0
      %p198 = por %p196, %p197
      %p199 = scmp.ne.s32.totalorder %s187, %s188
      %p200 = scmp.eq.s32.totalorder %s35, 3
      %p201 = por %p199, %p200
      %p203 = scmp.ne.s32.totalorder %s188, %s202
      %p204 = scmp.eq.s32.totalorder %s35, 0
      %p205 = por %p203, %p204
      %s207 = sadd.s32 %s206, 1
      %p210 = scmp.eq.s32.totalorder %s29, 3
      %p211 = scmp.ne.s32.totalorder %s206, %s208
      %p212 = scmp.eq.s32.totalorder %s29, 0
      %p213 = por %p211, %p212
      %p214 = scmp.ne.s32.totalorder %s206, %s208
      %p215 = scmp.eq.s32.totalorder %s34, 3
      %p216 = por %p214, %p215
      %p217 = scmp.ne.s32.totalorder %s208, %s209
      %p218 = scmp.eq.s32.totalorder %s34, 0
      %p219 = por %p217, %p218
      %p220 = scmp.ne.s32.totalorder %s208, %s209
      %p221 = scmp.eq.s32.totalorder %s35, 3
      %p222 = por %p220, %p221
      %p224 = scmp.ne.s32.totalorder %s209, %s223
      %p225 = scmp.eq.s32.totalorder %s35, 0
      %p226 = por %p224, %p225
      %s228 = sadd.s32 %s227, 1
      %p231 = scmp.eq.s32.totalorder %s29, 3
      %p232 = scmp.ne.s32.totalorder %s227, %s229
      %p233 = scmp.eq.s32.totalorder %s29, 0
      %p234 = por %p232, %p233
      %p235 = scmp.ne.s32.totalorder %s227, %s229
      %p236 = scmp.eq.s32.totalorder %s34, 3
      %p237 = por %p235, %p236
      %p238 = scmp.ne.s32.totalorder %s229, %s230
      %p239 = scmp.eq.s32.totalorder %s34, 0
      %p240 = por %p238, %p239
      %p241 = scmp.ne.s32.totalorder %s229, %s230
      %p242 = scmp.eq.s32.totalorder %s35, 3
      %p243 = por %p241, %p242
      %p245 = scmp.ne.s32.totalorder %s230, %s244
      %p246 = scmp.eq.s32.totalorder %s35, 0
      %p247 = por %p245, %p246
      %s249 = sadd.s32 %s248, 1
      %p252 = scmp.eq.s32.totalorder %s29, 3
      %p253 = scmp.ne.s32.totalorder %s248, %s250
      %p254 = scmp.eq.s32.totalorder %s29, 0
      %p255 = por %p253, %p254
      %p256 = scmp.ne.s32.totalorder %s248, %s250
      %p257 = scmp.eq.s32.totalorder %s34, 3
      %p258 = por %p256, %p257
      %p259 = scmp.ne.s32.totalorder %s250, %s251
      %p260 = scmp.eq.s32.totalorder %s34, 0
      %p261 = por %p259, %p260
      %p262 = scmp.ne.s32.totalorder %s250, %s251
      %p263 = scmp.eq.s32.totalorder %s35, 3
      %p264 = por %p262, %p263
      %p266 = scmp.ne.s32.totalorder %s251, %s265
      %p267 = scmp.eq.s32.totalorder %s35, 0
      %p268 = por %p266, %p267
      %s270 = sadd.s32 %s269, 1
      %p273 = scmp.eq.s32.totalorder %s29, 3
      %p274 = scmp.ne.s32.totalorder %s269, %s271
      %p275 = scmp.eq.s32.totalorder %s29, 0
      %p276 = por %p274, %p275
      %p277 = scmp.ne.s32.totalorder %s269, %s271
      %p278 = scmp.eq.s32.totalorder %s34, 3
      %p279 = por %p277, %p278
      %p280 = scmp.ne.s32.totalorder %s271, %s272
      %p281 = scmp.eq.s32.totalorder %s34, 0
      %p282 = por %p280, %p281
      %p283 = scmp.ne.s32.totalorder %s271, %s272
      %p284 = scmp.eq.s32.totalorder %s35, 3
      %p285 = por %p283, %p284
      %p287 = scmp.ne.s32.totalorder %s272, %s286
      %p288 = scmp.eq.s32.totalorder %s35, 0
      %p289 = por %p287, %p288
      %s291 = sadd.s32 %s290, 1
      %p294 = scmp.eq.s32.totalorder %s29, 3
      %p295 = scmp.ne.s32.totalorder %s290, %s292
      %p296 = scmp.eq.s32.totalorder %s29, 0
      %p297 = por %p295, %p296
      %p298 = scmp.ne.s32.totalorder %s290, %s292
      %p299 = scmp.eq.s32.totalorder %s34, 3
      %p300 = por %p298, %p299
      %p301 = scmp.ne.s32.totalorder %s292, %s293
      %p302 = scmp.eq.s32.totalorder %s34, 0
      %p303 = por %p301, %p302
      %p304 = scmp.ne.s32.totalorder %s292, %s293
      %p305 = scmp.eq.s32.totalorder %s35, 3
      %p306 = por %p304, %p305
      %p308 = scmp.ne.s32.totalorder %s293, %s307
      %p309 = scmp.eq.s32.totalorder %s35, 0
      %p310 = por %p308, %p309
      %s312 = sadd.s32 %s311, 1
      %p315 = scmp.eq.s32.totalorder %s29, 3
      %p316 = scmp.ne.s32.totalorder %s311, %s313
      %p317 = scmp.eq.s32.totalorder %s29, 0
      %p318 = por %p316, %p317
      %p319 = scmp.ne.s32.totalorder %s311, %s313
      %p320 = scmp.eq.s32.totalorder %s34, 3
      %p321 = por %p319, %p320
      %p322 = scmp.ne.s32.totalorder %s313, %s314
      %p323 = scmp.eq.s32.totalorder %s34, 0
      %p324 = por %p322, %p323
      %p325 = scmp.ne.s32.totalorder %s313, %s314
      %p326 = scmp.eq.s32.totalorder %s35, 3
      %p327 = por %p325, %p326
      %p329 = scmp.ne.s32.totalorder %s314, %s328
      %p330 = scmp.eq.s32.totalorder %s35, 0
      %p331 = por %p329, %p330
      %s333 = sadd.s32 %s332, 1
      %p336 = scmp.eq.s32.totalorder %s29, 3
      %p337 = scmp.ne.s32.totalorder %s332, %s334
      %p338 = scmp.eq.s32.totalorder %s29, 0
      %p339 = por %p337, %p338
      %p340 = scmp.ne.s32.totalorder %s332, %s334
      %p341 = scmp.eq.s32.totalorder %s34, 3
      %p342 = por %p340, %p341
      %p343 = scmp.ne.s32.totalorder %s334, %s335
      %p344 = scmp.eq.s32.totalorder %s34, 0
      %p345 = por %p343, %p344
      %p346 = scmp.ne.s32.totalorder %s334, %s335
      %p347 = scmp.eq.s32.totalorder %s35, 3
      %p348 = por %p346, %p347
      %p350 = scmp.ne.s32.totalorder %s335, %s349
      %p351 = scmp.eq.s32.totalorder %s35, 0
      %p352 = por %p350, %p351
      %s354 = sadd.s32 %s353, 1
      %p357 = scmp.eq.s32.totalorder %s29, 3
      %p358 = scmp.ne.s32.totalorder %s353, %s355
      %p359 = scmp.eq.s32.totalorder %s29, 0
      %p360 = por %p358, %p359
      %p361 = scmp.ne.s32.totalorder %s353, %s355
      %p362 = scmp.eq.s32.totalorder %s34, 3
      %p363 = por %p361, %p362
      %p364 = scmp.ne.s32.totalorder %s355, %s356
      %p365 = scmp.eq.s32.totalorder %s34, 0
      %p366 = por %p364, %p365
      %p367 = scmp.ne.s32.totalorder %s355, %s356
      %p368 = scmp.eq.s32.totalorder %s35, 3
      %p369 = por %p367, %p368
      %p371 = scmp.ne.s32.totalorder %s356, %s370
      %p372 = scmp.eq.s32.totalorder %s35, 0
      %p373 = por %p371, %p372
      %s375 = sadd.s32 %s374, 1
      %p378 = scmp.eq.s32.totalorder %s29, 3
      %p379 = scmp.ne.s32.totalorder %s374, %s376
      %p380 = scmp.eq.s32.totalorder %s29, 0
      %p381 = por %p379, %p380
      %p382 = scmp.ne.s32.totalorder %s374, %s376
      %p383 = scmp.eq.s32.totalorder %s34, 3
      %p384 = por %p382, %p383
      %p385 = scmp.ne.s32.totalorder %s376, %s377
      %p386 = scmp.eq.s32.totalorder %s34, 0
      %p387 = por %p385, %p386
      %p388 = scmp.ne.s32.totalorder %s376, %s377
      %p389 = scmp.eq.s32.totalorder %s35, 3
      %p390 = por %p388, %p389
      %p392 = scmp.ne.s32.totalorder %s377, %s391
      %p393 = scmp.eq.s32.totalorder %s35, 0
      %p394 = por %p392, %p393
      %s395 = ssub.s32 %s36, %s48
      %s396 = ssub.s32 %s37, %s44
      %s397 = sor.u32 %s395, %s396
      %p398 = scmp.eq.s32.totalorder %s397, 0
      %s400 = sadd.s32 %s399, 1
      %s401 = scalar_select %p398, %s399, %s400
      %p404 = pneg %p398
      %p405 = scmp.eq.s32.totalorder %s29, 3
      %p406 = por %p404, %p405
      %p407 = scmp.ne.s32.totalorder %s399, %s402
      %p408 = scmp.eq.s32.totalorder %s29, 0
      %p409 = por %p407, %p408
      %p410 = scmp.ne.s32.totalorder %s399, %s402
      %p411 = scmp.eq.s32.totalorder %s34, 3
      %p412 = por %p410, %p411
      %p413 = scmp.ne.s32.totalorder %s402, %s403
      %p414 = scmp.eq.s32.totalorder %s34, 0
      %p415 = por %p413, %p414
      %p416 = scmp.ne.s32.totalorder %s402, %s403
      %p417 = scmp.eq.s32.totalorder %s35, 3
      %p418 = por %p416, %p417
      %p420 = scmp.ne.s32.totalorder %s403, %s419
      %p421 = scmp.eq.s32.totalorder %s35, 0
      %p422 = por %p420, %p421
      %p423 = scmp.le.s32.totalorder 1, %s29
      %p424 = scmp.lt.s32.totalorder %s29, 5
      %p425 = pnand %p423, %p424
      %p426 = pneg %p425
      // Predicated region
      $region9: #{tpu_custom_call.1} parent=5 // pred_check
        _
      $region10: #{tpu_custom_call.1} parent=5 // pred_check_branch
        %428 = sbr.rel (%p425) target = $region12
      $region11: #{tpu_custom_call.1} parent=5 // pred_region
        %s429 = ssub.s32 %s29, 1
        // Predicated region
        $region13: #{tpu_custom_call.1} parent=11 // pred_check
          %p430 = pneg %p114
        $region14: #{tpu_custom_call.1} parent=11 // pred_check_branch
          %432 = sbr.rel (%p430) target = $region16
        $region15: #{tpu_custom_call.1} parent=11 // pred_region
          _
        $region16: #{tpu_custom_call.1} parent=11 // pred_fallthru
          _
        // Predicated region
        $region17: #{tpu_custom_call.1} parent=11 // pred_check
          %p433 = pneg %p135
        $region18: #{tpu_custom_call.1} parent=11 // pred_check_branch
          %435 = sbr.rel (%p433) target = $region20
        $region19: #{tpu_custom_call.1} parent=11 // pred_region
          _
        $region20: #{tpu_custom_call.1} parent=11 // pred_fallthru
          _
        // Predicated region
        $region21: #{tpu_custom_call.1} parent=11 // pred_check
          %p436 = pneg %p156
        $region22: #{tpu_custom_call.1} parent=11 // pred_check_branch
          %438 = sbr.rel (%p436) target = $region24
        $region23: #{tpu_custom_call.1} parent=11 // pred_region
          %s440 = ssub.s32 256, 256
          %441 = vsyncadd [#allocation5], %s440
          %s442 = sshll.u32 [#allocation4], 4
          %s443 = int_to_ptr.vmem [resolvable:$true] %s442
          %448 = dma.hbm_to_vmem [thread:$0]  %s4, 256, %s443, [#allocation5], 64, 64, 4
        $region24: #{tpu_custom_call.1} parent=11 // pred_fallthru
          _
        // Predicated region
        $region25: #{tpu_custom_call.1} parent=11 // pred_check
          %p449 = pneg %p177
        $region26: #{tpu_custom_call.1} parent=11 // pred_check_branch
          %451 = sbr.rel (%p449) target = $region28
        $region27: #{tpu_custom_call.1} parent=11 // pred_region
          %s453 = ssub.s32 16, 16
          %454 = vsyncadd [#allocation8], %s453
          %s456 = sshll.u32 [#allocation7], 4
          %s457 = int_to_ptr.vmem [resolvable:$true] %s456
          %459 = dma.hbm_to_vmem [thread:$0]  %s5, 16, %s457, [#allocation8]
        $region28: #{tpu_custom_call.1} parent=11 // pred_fallthru
          _
        // Predicated region
        $region29: #{tpu_custom_call.1} parent=11 // pred_check
          %p460 = pneg %p198
        $region30: #{tpu_custom_call.1} parent=11 // pred_check_branch
          %462 = sbr.rel (%p460) target = $region32
        $region31: #{tpu_custom_call.1} parent=11 // pred_region
          %s464 = ssub.s32 256, 256
          %465 = vsyncadd [#allocation8], %s464
          %s466 = sshll.u32 [#allocation9], 4
          %s467 = int_to_ptr.vmem [resolvable:$true] %s466
          %472 = dma.hbm_to_vmem [thread:$0]  %s6, 256, %s467, [#allocation8], 64, 64, 4
        $region32: #{tpu_custom_call.1} parent=11 // pred_fallthru
          _
        // Predicated region
        $region33: #{tpu_custom_call.1} parent=11 // pred_check
          %p473 = pneg %p219
        $region34: #{tpu_custom_call.1} parent=11 // pred_check_branch
          %475 = sbr.rel (%p473) target = $region36
        $region35: #{tpu_custom_call.1} parent=11 // pred_region
          %s477 = ssub.s32 16, 16
          %478 = vsyncadd [#allocation11], %s477
          %s480 = sshll.u32 [#allocation10], 4
          %s481 = int_to_ptr.vmem [resolvable:$true] %s480
          %483 = dma.hbm_to_vmem [thread:$0]  %s7, 16, %s481, [#allocation11]
        $region36: #{tpu_custom_call.1} parent=11 // pred_fallthru
          _
        // Predicated region
        $region37: #{tpu_custom_call.1} parent=11 // pred_check
          %p484 = pneg %p240
        $region38: #{tpu_custom_call.1} parent=11 // pred_check_branch
          %486 = sbr.rel (%p484) target = $region40
        $region39: #{tpu_custom_call.1} parent=11 // pred_region
          %s488 = ssub.s32 256, 256
          %489 = vsyncadd [#allocation11], %s488
          %s490 = sshll.u32 [#allocation12], 4
          %s491 = int_to_ptr.vmem [resolvable:$true] %s490
          %496 = dma.hbm_to_vmem [thread:$0]  %s8, 256, %s491, [#allocation11], 64, 64, 4
        $region40: #{tpu_custom_call.1} parent=11 // pred_fallthru
          _
        // Predicated region
        $region41: #{tpu_custom_call.1} parent=11 // pred_check
          %p497 = pneg %p261
        $region42: #{tpu_custom_call.1} parent=11 // pred_check_branch
          %499 = sbr.rel (%p497) target = $region44
        $region43: #{tpu_custom_call.1} parent=11 // pred_region
          %s501 = ssub.s32 16, 16
          %502 = vsyncadd [#allocation14], %s501
          %s504 = sshll.u32 [#allocation13], 4
          %s505 = int_to_ptr.vmem [resolvable:$true] %s504
          %507 = dma.hbm_to_vmem [thread:$0]  %s9, 16, %s505, [#allocation14]
        $region44: #{tpu_custom_call.1} parent=11 // pred_fallthru
          _
        // Predicated region
        $region45: #{tpu_custom_call.1} parent=11 // pred_check
          %p508 = pneg %p282
        $region46: #{tpu_custom_call.1} parent=11 // pred_check_branch
          %510 = sbr.rel (%p508) target = $region48
        $region47: #{tpu_custom_call.1} parent=11 // pred_region
          _
        $region48: #{tpu_custom_call.1} parent=11 // pred_fallthru
          _
        // Predicated region
        $region49: #{tpu_custom_call.1} parent=11 // pred_check
          %p511 = pneg %p303
        $region50: #{tpu_custom_call.1} parent=11 // pred_check_branch
          %513 = sbr.rel (%p511) target = $region52
        $region51: #{tpu_custom_call.1} parent=11 // pred_region
          _
        $region52: #{tpu_custom_call.1} parent=11 // pred_fallthru
          _
        // Predicated region
        $region53: #{tpu_custom_call.1} parent=11 // pred_check
          %p514 = pneg %p324
        $region54: #{tpu_custom_call.1} parent=11 // pred_check_branch
          %516 = sbr.rel (%p514) target = $region56
        $region55: #{tpu_custom_call.1} parent=11 // pred_region
          _
        $region56: #{tpu_custom_call.1} parent=11 // pred_fallthru
          _
        // Predicated region
        $region57: #{tpu_custom_call.1} parent=11 // pred_check
          %p517 = pneg %p345
        $region58: #{tpu_custom_call.1} parent=11 // pred_check_branch
          %519 = sbr.rel (%p517) target = $region60
        $region59: #{tpu_custom_call.1} parent=11 // pred_region
          _
        $region60: #{tpu_custom_call.1} parent=11 // pred_fallthru
          _
        // Predicated region
        $region61: #{tpu_custom_call.1} parent=11 // pred_check
          %p520 = pneg %p366
        $region62: #{tpu_custom_call.1} parent=11 // pred_check_branch
          %522 = sbr.rel (%p520) target = $region64
        $region63: #{tpu_custom_call.1} parent=11 // pred_region
          _
        $region64: #{tpu_custom_call.1} parent=11 // pred_fallthru
          _
        // Predicated region
        $region65: #{tpu_custom_call.1} parent=11 // pred_check
          %p523 = pneg %p387
        $region66: #{tpu_custom_call.1} parent=11 // pred_check_branch
          %525 = sbr.rel (%p523) target = $region68
        $region67: #{tpu_custom_call.1} parent=11 // pred_region
          _
        $region68: #{tpu_custom_call.1} parent=11 // pred_fallthru
          _
      $region12: #{tpu_custom_call.1} parent=5 // pred_fallthru
        _
      %p526 = scmp.lt.s32.totalorder %s29, 4
      // Predicated region
      $region69: #{tpu_custom_call.1} parent=5 // pred_check
        %p527 = pneg %p526
      $region70: #{tpu_custom_call.1} parent=5 // pred_check_branch
        %529 = sbr.rel (%p527) target = $region72
      $region71: #{tpu_custom_call.1} parent=5 // pred_region
        // Predicated region
        $region73: #{tpu_custom_call.1} parent=71 // pred_check
          %p530 = pneg %p61
        $region74: #{tpu_custom_call.1} parent=71 // pred_check_branch
          %532 = sbr.rel (%p530) target = $region76
        $region75: #{tpu_custom_call.1} parent=71 // pred_region
          %p533 = scmp.lt.s32.totalorder %s36, 1
          %s534 = scalar_select %p533, %s36, 1
          %s535 = smul.addr %s534, 2
          %s536 = smul.addr %s535, 8
          %s537 = scalar_lea.vmem %s0, %s536
        $region76: #{tpu_custom_call.1} parent=71 // pred_fallthru
          _
        // Predicated region
        $region77: #{tpu_custom_call.1} parent=71 // pred_check
          %p538 = pneg %p87
        $region78: #{tpu_custom_call.1} parent=71 // pred_check_branch
          %540 = sbr.rel (%p538) target = $region80
        $region79: #{tpu_custom_call.1} parent=71 // pred_region
          %p541 = scmp.lt.s32.totalorder %s37, 1
          %s542 = scalar_select %p541, %s37, 1
          %s543 = smul.addr %s542, 8
          %s544 = scalar_lea.vmem %s1, %s543
        $region80: #{tpu_custom_call.1} parent=71 // pred_fallthru
          _
      $region72: #{tpu_custom_call.1} parent=5 // pred_fallthru
        _
      %p545 = scmp.le.s32.totalorder 1, %s29
      %p546 = scmp.lt.s32.totalorder %s29, 5
      %p547 = pnand %p545, %p546
      %p548 = pneg %p547
      // Predicated region
      $region81: #{tpu_custom_call.1} parent=5 // pred_check
        _
      $region82: #{tpu_custom_call.1} parent=5 // pred_check_branch
        %550 = sbr.rel (%p547) target = $region84
      $region83: #{tpu_custom_call.1} parent=5 // pred_region
        %s551 = ssub.s32 %s29, 1
        // Predicated region
        $region85: #{tpu_custom_call.1} parent=83 // pred_check
          %p552 = pneg %p156
        $region86: #{tpu_custom_call.1} parent=83 // pred_check_branch
          %554 = sbr.rel (%p552) target = $region88
        $region87: #{tpu_custom_call.1} parent=83 // pred_region
          %555 = dma.done [#allocation5], 256
        $region88: #{tpu_custom_call.1} parent=83 // pred_fallthru
          _
        // Predicated region
        $region89: #{tpu_custom_call.1} parent=83 // pred_check
          %p556 = pneg %p177
        $region90: #{tpu_custom_call.1} parent=83 // pred_check_branch
          %558 = sbr.rel (%p556) target = $region92
        $region91: #{tpu_custom_call.1} parent=83 // pred_region
          %559 = dma.done [#allocation8], 16
        $region92: #{tpu_custom_call.1} parent=83 // pred_fallthru
          _
        // Predicated region
        $region93: #{tpu_custom_call.1} parent=83 // pred_check
          %p560 = pneg %p198
        $region94: #{tpu_custom_call.1} parent=83 // pred_check_branch
          %562 = sbr.rel (%p560) target = $region96
        $region95: #{tpu_custom_call.1} parent=83 // pred_region
          %563 = dma.done [#allocation8], 256
        $region96: #{tpu_custom_call.1} parent=83 // pred_fallthru
          _
        // Predicated region
        $region97: #{tpu_custom_call.1} parent=83 // pred_check
          %p564 = pneg %p219
        $region98: #{tpu_custom_call.1} parent=83 // pred_check_branch
          %566 = sbr.rel (%p564) target = $region100
        $region99: #{tpu_custom_call.1} parent=83 // pred_region
          %567 = dma.done [#allocation11], 16
        $region100: #{tpu_custom_call.1} parent=83 // pred_fallthru
          _
        // Predicated region
        $region101: #{tpu_custom_call.1} parent=83 // pred_check
          %p568 = pneg %p240
        $region102: #{tpu_custom_call.1} parent=83 // pred_check_branch
          %570 = sbr.rel (%p568) target = $region104
        $region103: #{tpu_custom_call.1} parent=83 // pred_region
          %571 = dma.done [#allocation11], 256
        $region104: #{tpu_custom_call.1} parent=83 // pred_fallthru
          _
        // Predicated region
        $region105: #{tpu_custom_call.1} parent=83 // pred_check
          %p572 = pneg %p261
        $region106: #{tpu_custom_call.1} parent=83 // pred_check_branch
          %574 = sbr.rel (%p572) target = $region108
        $region107: #{tpu_custom_call.1} parent=83 // pred_region
          %575 = dma.done [#allocation14], 16
        $region108: #{tpu_custom_call.1} parent=83 // pred_fallthru
          _
        %p576 = scmp.lt.s32.totalorder %s38, 1
        %s577 = scalar_select %p576, %s38, 1
        %s578 = smul.addr %s577, 2
        %s579 = smul.addr %s578, 8
        %s580 = scalar_lea.vmem %s0, %s579
        %p581 = pneg %p67
        %p582 = pneg %p64
        %p583 = scmp.lt.s32.totalorder %s39, 1
        %s584 = scalar_select %p583, %s39, 1
        %s585 = smul.addr %s584, 8
        %s586 = scalar_lea.vmem %s1, %s585
        %p587 = pneg %p93
        %p588 = pneg %p90
        %p589 = pneg %p114
        %p590 = pneg %p111
        %p591 = pneg %p135
        %p592 = pneg %p132
        %p593 = pneg %p156
        %p594 = pneg %p153
        %p595 = pneg %p177
        %p596 = pneg %p174
        %p597 = pneg %p198
        %p598 = pneg %p195
        %p599 = pneg %p219
        %p600 = pneg %p216
        %p601 = pneg %p240
        %p602 = pneg %p237
        %p603 = pneg %p261
        %p604 = pneg %p258
        %p605 = pneg %p282
        %p606 = pneg %p279
        %p607 = pneg %p303
        %p608 = pneg %p300
        %p609 = pneg %p324
        %p610 = pneg %p321
        %p611 = pneg %p345
        %p612 = pneg %p342
        %p613 = pneg %p366
        %p614 = pneg %p363
        %p615 = pneg %p387
        %p616 = pneg %p384
        %p617 = pneg %p415
        %p618 = pneg %p412
        %s619 = sand.u32 %s402, 1
        %s620 = scalar_lea.sflag [#allocation6], %s619
        %s621 = sand.u32 %s402, 1
        %s622 = smul.addr %s621, 8
        %s623 = scalar_lea.vmem [#allocation15], %s622
        %p624 = scmp.lt.s32.totalorder %s38, 1
        %s625 = scalar_select %p624, %s38, 1
        %s626 = smul.addr %s625, 2
        %s627 = smul.addr %s626, 8
        %s628 = scalar_lea.vmem %s0, %s627
        %p629 = scmp.lt.s32.totalorder %s39, 1
        %s630 = scalar_select %p629, %s39, 1
        %s631 = smul.addr %s630, 8
        %s632 = scalar_lea.vmem %s1, %s631
        %p634 = scmp.eq.s32.totalorder %s39, 0
        // Predicated region
        $region109: #{tpu_custom_call.1} parent=83 // pred_check
          %p635 = pneg %p634
        $region110: #{tpu_custom_call.1} parent=83 // pred_check_branch
          %637 = sbr.rel (%p635) target = $region112
        $region111: #{tpu_custom_call.1} parent=83 // pred_region
          %v638 = vld [vmem:[%s628] sm:$0xff]
          %v639 = vld [vmem:[%s628 + $0x8] sm:$0xff]
          %v640 = vld [vmem:[%s2] sm:$0x1]
          %v641 = vld [vmem:[%s3] sm:$0x1]
          %vm642 = vcmask 261120
          %v643 = vsel %vm642, %v638, 0.0
          %644 = vadd.xlane.f32.xlu0 %v643
          %v645 = vpop.xlane.xlu0 %644
          %v646 = vsel %vm642, %v639, 0.0
          %647 = vadd.xlane.f32.xlu0 %v646
          %v648 = vpop.xlane.xlu0 %647
          %v649 = vrcp.pop 32.0
          %v650 = vmul.f32 %v645, %v649
          %v651 = vmul.f32 %v648, %v649
          %v652 = vsub.f32 %v638, %v650
          %v653 = vsub.f32 %v639, %v651
          %v654 = vmul.f32 %v652, %v652
          %v655 = vmul.f32 %v653, %v653
          %v656 = vsel %vm642, %v654, 0.0
          %657 = vadd.xlane.f32.xlu0 %v656
          %v658 = vpop.xlane.xlu0 %657
          %v659 = vsel %vm642, %v655, 0.0
          %660 = vadd.xlane.f32.xlu0 %v659
          %v661 = vpop.xlane.xlu0 %660
          %v662 = vmul.f32 %v658, %v649
          %v663 = vmul.f32 %v661, %v649
          %v664 = vadd.f32 %v662, 1e-05
          %v665 = vadd.f32 %v663, 1e-05
          %v666 = vrsqrt.pop %v664
          %v667 = vrsqrt.pop %v665
          %v668 = vmul.f32 %v652, %v666
          %v669 = vmul.f32 %v653, %v667
          %v671 = vlaneseq
          %v672 = vshrl.u32 %v671, 7
          %v673 = vsub.s32 0, %v672
          %v674 = vrot.slane %v640, %v673
          %v676 = vmul.f32 %v668, %v674
          %v677 = vmul.f32 %v669, %v674
          %v679 = vlaneseq
          %v680 = vshrl.u32 %v679, 7
          %v681 = vsub.s32 0, %v680
          %v682 = vrot.slane %v641, %v681
          %v684 = vadd.f32 %v676, %v682
          %v685 = vadd.f32 %v677, %v682
          %v686 = vpack.c.bf16 %v685, %v684
          %v687 = vld [vmem:[#allocation9] sm:$0xf]
          %v688 = vld [vmem:[#allocation9 + $0x4] sm:$0xf]
          %v689 = vld [vmem:[#allocation9 + $0x8] sm:$0xf]
          %v690 = vld [vmem:[#allocation9 + $0xc] sm:$0xf]
          %v691 = vld [vmem:[#allocation10] sm:$0x1]
          %v693 = vlaneseq
          %v694 = vshrl.u32 %v693, 7
          %v695 = vsub.s32 0, %v694
          %v696 = vrot.slane %v691, %v695
          %v702 = vunpack.c.l.b16 %v687
          %v703 = vunpack.c.l.b16 %v688
          %v704 = vunpack.c.l.b16 %v689
          %v705 = vunpack.c.l.b16 %v690
          %v706 = vpack.c.b16 %v703, %v702
          %v707 = vpack.c.b16 %v705, %v704
          %v711 = vsel %vm642, %v686, 0
          %713 = vmatprep.subr.bf16.mxu0 0
          %714 = vmatpush1.bf16.msra.mxu0 %v706
          %715 = vmatprep.subr.bf16.mxu0 0
          %716 = vmatpush1.bf16.msra.mxu0 %v707
          %717 = vmatprep.subr.bf16.mxu0 0
          %718 = vmatpush1.bf16.msra.mxu0 0
          %719 = vmatprep.subr.bf16.mxu0 0
          %720 = vmatpush1.bf16.msra.mxu0 0
          %721 = vmatprep.subr.bf16.mxu0 0
          %722 = vmatpush1.bf16.msra.mxu0 0
          %723 = vmatprep.subr.bf16.mxu0 0
          %724 = vmatpush1.bf16.msra.mxu0 0
          %725 = vmatprep.subr.bf16.mxu0 0
          %726 = vmatpush1.bf16.msra.mxu0 0
          %727 = vmatprep.subr.bf16.mxu0 0
          %728 = vmatpush1.bf16.msra.mxu0 0
          %729 = vmatprep.subr.bf16.mxu0 0
          %730 = vmatpush1.bf16.msra.mxu0 0
          %731 = vmatprep.subr.bf16.mxu0 0
          %732 = vmatpush1.bf16.msra.mxu0 0
          %733 = vmatprep.subr.bf16.mxu0 0
          %734 = vmatpush1.bf16.msra.mxu0 0
          %735 = vmatprep.subr.bf16.mxu0 0
          %736 = vmatpush1.bf16.msra.mxu0 0
          %737 = vmatprep.subr.bf16.mxu0 0
          %738 = vmatpush1.bf16.msra.mxu0 0
          %739 = vmatprep.subr.bf16.mxu0 0
          %740 = vmatpush1.bf16.msra.mxu0 0
          %741 = vmatprep.subr.bf16.mxu0 0
          %742 = vmatpush1.bf16.msra.mxu0 0
          %743 = vmatprep.subr.bf16.mxu0 0
          %744 = vmatpush1.bf16.msra.mxu0 0
          %745 = vmatprep.mubr.bf16.mxu0 0
          %746 = vmatmul.mubr.bf16.gmra.mrb[0].mxu0 %v711
          %v747 = vpop.f32.mrb[0].mxu0
          %v748 = vadd.f32 %v696, %v747
          %v749 = vpop.f32.mrb[0].mxu0
          %v750 = vpop.f32.mrb[0].mxu0
          %v751 = vadd.f32 %v696, %v750
          %v752 = vpop.f32.mrb[0].mxu0
          %753 = vdwg.mxu0
          %v754 = vpack.c.bf16 %v751, %v748
          %756 = vrot.lane.b32.xlu0 %v754, 120
          %v757 = vpop.permute.xlu0 %756
          %758 = vrot.lane.b32.xlu0 %v754, 112
          %v759 = vpop.permute.xlu0 %758
          %760 = vrot.lane.b32.xlu0 %v754, 104
          %v761 = vpop.permute.xlu0 %760
          %v764 = vpack.i.b16 %v757, %v754
          %v766 = vshrl.u32 %v754, 16
          %v767 = vshrl.u32 %v757, 16
          %v768 = vpack.i.b16 %v767, %v766
          %v772 = vpack.i.b16 %v761, %v759
          %v774 = vshrl.u32 %v759, 16
          %v775 = vshrl.u32 %v761, 16
          %v776 = vpack.i.b16 %v775, %v774
          %v779 = vpack.i.b16 0, 0
          %v781 = vshrl.u32 0, 16
          %v782 = vpack.i.b16 %v781, %v781
          %v784 = vcombine.high %v764, %v779
          %v786 = vunpack.c.l.s4 1983009808
          %v787 = vunpack.c.0.s8 %v786
          %v788 = vlaneseq
          %v789 = vshrl.u32 %v788, 7
          %v790 = vsub.s32 %v787, %v789
          %v791 = vrot.slane %v764, %v790
          %v793 = vunpack.c.l.s4 1983009808
          %v794 = vunpack.c.0.s8 %v793
          %v795 = vlaneseq
          %v796 = vshrl.u32 %v795, 7
          %v797 = vsub.s32 %v794, %v796
          %v798 = vrot.slane %v784, %v797
          %v799 = vcombine.high %v772, %v779
          %v801 = vunpack.c.l.s4 1983009808
          %v802 = vunpack.c.0.s8 %v801
          %v803 = vlaneseq
          %v804 = vshrl.u32 %v803, 7
          %v805 = vsub.s32 %v802, %v804
          %v806 = vrot.slane %v772, %v805
          %v808 = vunpack.c.l.s4 1983009808
          %v809 = vunpack.c.0.s8 %v808
          %v810 = vlaneseq
          %v811 = vshrl.u32 %v810, 7
          %v812 = vsub.s32 %v809, %v811
          %v813 = vrot.slane %v799, %v812
          %v814 = vcombine.low %v791, %v806
          %v815 = vcombine.high %v791, %v806
          %v817 = vunpack.c.l.s4 1934713408
          %v818 = vunpack.c.0.s8 %v817
          %v819 = vlaneseq
          %v820 = vshrl.u32 %v819, 7
          %v821 = vsub.s32 %v818, %v820
          %v822 = vrot.slane %v814, %v821
          %v824 = vunpack.c.l.s4 1934713408
          %v825 = vunpack.c.0.s8 %v824
          %v826 = vlaneseq
          %v827 = vshrl.u32 %v826, 7
          %v828 = vsub.s32 %v825, %v827
          %v829 = vrot.slane %v815, %v828
          %v830 = vcombine.low %v798, %v813
          %v831 = vcombine.high %v798, %v813
          %v833 = vunpack.c.l.s4 1934713408
          %v834 = vunpack.c.0.s8 %v833
          %v835 = vlaneseq
          %v836 = vshrl.u32 %v835, 7
          %v837 = vsub.s32 %v834, %v836
          %v838 = vrot.slane %v830, %v837
          %v840 = vunpack.c.l.s4 1934713408
          %v841 = vunpack.c.0.s8 %v840
          %v842 = vlaneseq
          %v843 = vshrl.u32 %v842, 7
          %v844 = vsub.s32 %v841, %v843
          %v845 = vrot.slane %v831, %v844
          %v846 = vcombine.high %v822, 0
          %v847 = vcombine.high %v829, 0
          %v848 = vcombine.high %v838, 0
          %v849 = vcombine.high %v845, 0
          %v850 = vcombine.high %v768, %v782
          %v852 = vunpack.c.l.s4 1983009808
          %v853 = vunpack.c.0.s8 %v852
          %v854 = vlaneseq
          %v855 = vshrl.u32 %v854, 7
          %v856 = vsub.s32 %v853, %v855
          %v857 = vrot.slane %v768, %v856
          %v859 = vunpack.c.l.s4 1983009808
          %v860 = vunpack.c.0.s8 %v859
          %v861 = vlaneseq
          %v862 = vshrl.u32 %v861, 7
          %v863 = vsub.s32 %v860, %v862
          %v864 = vrot.slane %v850, %v863
          %v865 = vcombine.high %v776, %v782
          %v867 = vunpack.c.l.s4 1983009808
          %v868 = vunpack.c.0.s8 %v867
          %v869 = vlaneseq
          %v870 = vshrl.u32 %v869, 7
          %v871 = vsub.s32 %v868, %v870
          %v872 = vrot.slane %v776, %v871
          %v874 = vunpack.c.l.s4 1983009808
          %v875 = vunpack.c.0.s8 %v874
          %v876 = vlaneseq
          %v877 = vshrl.u32 %v876, 7
          %v878 = vsub.s32 %v875, %v877
          %v879 = vrot.slane %v865, %v878
          %v880 = vcombine.low %v857, %v872
          %v881 = vcombine.high %v857, %v872
          %v883 = vunpack.c.l.s4 1934713408
          %v884 = vunpack.c.0.s8 %v883
          %v885 = vlaneseq
          %v886 = vshrl.u32 %v885, 7
          %v887 = vsub.s32 %v884, %v886
          %v888 = vrot.slane %v880, %v887
          %v890 = vunpack.c.l.s4 1934713408
          %v891 = vunpack.c.0.s8 %v890
          %v892 = vlaneseq
          %v893 = vshrl.u32 %v892, 7
          %v894 = vsub.s32 %v891, %v893
          %v895 = vrot.slane %v881, %v894
          %v896 = vcombine.low %v864, %v879
          %v897 = vcombine.high %v864, %v879
          %v899 = vunpack.c.l.s4 1934713408
          %v900 = vunpack.c.0.s8 %v899
          %v901 = vlaneseq
          %v902 = vshrl.u32 %v901, 7
          %v903 = vsub.s32 %v900, %v902
          %v904 = vrot.slane %v896, %v903
          %v906 = vunpack.c.l.s4 1934713408
          %v907 = vunpack.c.0.s8 %v906
          %v908 = vlaneseq
          %v909 = vshrl.u32 %v908, 7
          %v910 = vsub.s32 %v907, %v909
          %v911 = vrot.slane %v897, %v910
          %v912 = vcombine.high %v888, 0
          %v913 = vcombine.high %v895, 0
          %v914 = vcombine.high %v904, 0
          %v915 = vcombine.high %v911, 0
          %v916 = vcombine.low %v822, %v829
          %v918 = vunpack.c.l.s4 1983009808
          %v919 = vunpack.c.0.s8 %v918
          %v920 = vlaneseq
          %v921 = vshrl.u32 %v920, 7
          %v922 = vsub.s32 %v919, %v921
          %v923 = vrot.slane %v916, %v922
          %v924 = vcombine.low %v846, %v847
          %v926 = vunpack.c.l.s4 1983009808
          %v927 = vunpack.c.0.s8 %v926
          %v928 = vlaneseq
          %v929 = vshrl.u32 %v928, 7
          %v930 = vsub.s32 %v927, %v929
          %v931 = vrot.slane %v924, %v930
          %v932 = vcombine.low %v838, %v845
          %v934 = vunpack.c.l.s4 1983009808
          %v935 = vunpack.c.0.s8 %v934
          %v936 = vlaneseq
          %v937 = vshrl.u32 %v936, 7
          %v938 = vsub.s32 %v935, %v937
          %v939 = vrot.slane %v932, %v938
          %v940 = vcombine.low %v848, %v849
          %v942 = vunpack.c.l.s4 1983009808
          %v943 = vunpack.c.0.s8 %v942
          %v944 = vlaneseq
          %v945 = vshrl.u32 %v944, 7
          %v946 = vsub.s32 %v943, %v945
          %v947 = vrot.slane %v940, %v946
          %v948 = vcombine.low %v923, %v931
          %v950 = vunpack.c.l.s4 1934713408
          %v951 = vunpack.c.0.s8 %v950
          %v952 = vlaneseq
          %v953 = vshrl.u32 %v952, 7
          %v954 = vsub.s32 %v951, %v953
          %v955 = vrot.slane %v948, %v954
          %v956 = vcombine.low %v939, %v947
          %v958 = vunpack.c.l.s4 1934713408
          %v959 = vunpack.c.0.s8 %v958
          %v960 = vlaneseq
          %v961 = vshrl.u32 %v960, 7
          %v962 = vsub.s32 %v959, %v961
          %v963 = vrot.slane %v956, %v962
          %v964 = vcombine.low %v955, %v963
          %v965 = vcombine.high %v955, %v963
          %v966 = vcombine.low %v888, %v895
          %v968 = vunpack.c.l.s4 1983009808
          %v969 = vunpack.c.0.s8 %v968
          %v970 = vlaneseq
          %v971 = vshrl.u32 %v970, 7
          %v972 = vsub.s32 %v969, %v971
          %v973 = vrot.slane %v966, %v972
          %v974 = vcombine.low %v912, %v913
          %v976 = vunpack.c.l.s4 1983009808
          %v977 = vunpack.c.0.s8 %v976
          %v978 = vlaneseq
          %v979 = vshrl.u32 %v978, 7
          %v980 = vsub.s32 %v977, %v979
          %v981 = vrot.slane %v974, %v980
          %v982 = vcombine.low %v904, %v911
          %v984 = vunpack.c.l.s4 1983009808
          %v985 = vunpack.c.0.s8 %v984
          %v986 = vlaneseq
          %v987 = vshrl.u32 %v986, 7
          %v988 = vsub.s32 %v985, %v987
          %v989 = vrot.slane %v982, %v988
          %v990 = vcombine.low %v914, %v915
          %v992 = vunpack.c.l.s4 1983009808
          %v993 = vunpack.c.0.s8 %v992
          %v994 = vlaneseq
          %v995 = vshrl.u32 %v994, 7
          %v996 = vsub.s32 %v993, %v995
          %v997 = vrot.slane %v990, %v996
          %v998 = vcombine.low %v973, %v981
          %v1000 = vunpack.c.l.s4 1934713408
          %v1001 = vunpack.c.0.s8 %v1000
          %v1002 = vlaneseq
          %v1003 = vshrl.u32 %v1002, 7
          %v1004 = vsub.s32 %v1001, %v1003
          %v1005 = vrot.slane %v998, %v1004
          %v1006 = vcombine.low %v989, %v997
          %v1008 = vunpack.c.l.s4 1934713408
          %v1009 = vunpack.c.0.s8 %v1008
          %v1010 = vlaneseq
          %v1011 = vshrl.u32 %v1010, 7
          %v1012 = vsub.s32 %v1009, %v1011
          %v1013 = vrot.slane %v1006, %v1012
          %v1014 = vcombine.low %v1005, %v1013
          %v1015 = vcombine.high %v1005, %v1013
          %v1018 = vpack.i.b16 %v1014, %v964
          %v1020 = vshrl.u32 %v964, 16
          %v1021 = vshrl.u32 %v1014, 16
          %v1022 = vpack.i.b16 %v1021, %v1020
          %v1026 = vpack.i.b16 %v1015, %v965
          %v1028 = vshrl.u32 %v965, 16
          %v1029 = vshrl.u32 %v1015, 16
          %v1030 = vpack.i.b16 %v1029, %v1028
          %vm1032 = vcmask 64512
          %1033 = vst.msk [vmem:[#allocation2] sm:$0xff] %vm1032, %v1018
          %1034 = vst.msk [vmem:[#allocation2 + $0x8] sm:$0xff] %vm1032, %v1022
          %1035 = vst.msk [vmem:[#allocation2 + $0x10] sm:$0xff] %vm1032, %v1026
          %1036 = vst.msk [vmem:[#allocation2 + $0x18] sm:$0xff] %vm1032, %v1030
          %1037 = vrot.lane.b32.xlu0 %v754, 96
          %v1038 = vpop.permute.xlu0 %1037
          %1039 = vrot.lane.b32.xlu0 %v757, 96
          %v1040 = vpop.permute.xlu0 %1039
          %1041 = vrot.lane.b32.xlu0 %v759, 96
          %v1042 = vpop.permute.xlu0 %1041
          %1043 = vrot.lane.b32.xlu0 %v761, 96
          %v1044 = vpop.permute.xlu0 %1043
          %v1047 = vpack.i.b16 %v1040, %v1038
          %v1049 = vshrl.u32 %v1038, 16
          %v1050 = vshrl.u32 %v1040, 16
          %v1051 = vpack.i.b16 %v1050, %v1049
          %v1055 = vpack.i.b16 %v1044, %v1042
          %v1057 = vshrl.u32 %v1042, 16
          %v1058 = vshrl.u32 %v1044, 16
          %v1059 = vpack.i.b16 %v1058, %v1057
          %v1061 = vcombine.high %v1047, %v779
          %v1063 = vunpack.c.l.s4 1983009808
          %v1064 = vunpack.c.0.s8 %v1063
          %v1065 = vlaneseq
          %v1066 = vshrl.u32 %v1065, 7
          %v1067 = vsub.s32 %v1064, %v1066
          %v1068 = vrot.slane %v1047, %v1067
          %v1070 = vunpack.c.l.s4 1983009808
          %v1071 = vunpack.c.0.s8 %v1070
          %v1072 = vlaneseq
          %v1073 = vshrl.u32 %v1072, 7
          %v1074 = vsub.s32 %v1071, %v1073
          %v1075 = vrot.slane %v1061, %v1074
          %v1076 = vcombine.high %v1055, %v779
          %v1078 = vunpack.c.l.s4 1983009808
          %v1079 = vunpack.c.0.s8 %v1078
          %v1080 = vlaneseq
          %v1081 = vshrl.u32 %v1080, 7
          %v1082 = vsub.s32 %v1079, %v1081
          %v1083 = vrot.slane %v1055, %v1082
          %v1085 = vunpack.c.l.s4 1983009808
          %v1086 = vunpack.c.0.s8 %v1085
          %v1087 = vlaneseq
          %v1088 = vshrl.u32 %v1087, 7
          %v1089 = vsub.s32 %v1086, %v1088
          %v1090 = vrot.slane %v1076, %v1089
          %v1091 = vcombine.low %v1068, %v1083
          %v1092 = vcombine.high %v1068, %v1083
          %v1094 = vunpack.c.l.s4 1934713408
          %v1095 = vunpack.c.0.s8 %v1094
          %v1096 = vlaneseq
          %v1097 = vshrl.u32 %v1096, 7
          %v1098 = vsub.s32 %v1095, %v1097
          %v1099 = vrot.slane %v1091, %v1098
          %v1101 = vunpack.c.l.s4 1934713408
          %v1102 = vunpack.c.0.s8 %v1101
          %v1103 = vlaneseq
          %v1104 = vshrl.u32 %v1103, 7
          %v1105 = vsub.s32 %v1102, %v1104
          %v1106 = vrot.slane %v1092, %v1105
          %v1107 = vcombine.low %v1075, %v1090
          %v1108 = vcombine.high %v1075, %v1090
          %v1110 = vunpack.c.l.s4 1934713408
          %v1111 = vunpack.c.0.s8 %v1110
          %v1112 = vlaneseq
          %v1113 = vshrl.u32 %v1112, 7
          %v1114 = vsub.s32 %v1111, %v1113
          %v1115 = vrot.slane %v1107, %v1114
          %v1117 = vunpack.c.l.s4 1934713408
          %v1118 = vunpack.c.0.s8 %v1117
          %v1119 = vlaneseq
          %v1120 = vshrl.u32 %v1119, 7
          %v1121 = vsub.s32 %v1118, %v1120
          %v1122 = vrot.slane %v1108, %v1121
          %v1123 = vcombine.high %v1099, 0
          %v1124 = vcombine.high %v1106, 0
          %v1125 = vcombine.high %v1115, 0
          %v1126 = vcombine.high %v1122, 0
          %v1127 = vcombine.high %v1051, %v782
          %v1129 = vunpack.c.l.s4 1983009808
          %v1130 = vunpack.c.0.s8 %v1129
          %v1131 = vlaneseq
          %v1132 = vshrl.u32 %v1131, 7
          %v1133 = vsub.s32 %v1130, %v1132
          %v1134 = vrot.slane %v1051, %v1133
          %v1136 = vunpack.c.l.s4 1983009808
          %v1137 = vunpack.c.0.s8 %v1136
          %v1138 = vlaneseq
          %v1139 = vshrl.u32 %v1138, 7
          %v1140 = vsub.s32 %v1137, %v1139
          %v1141 = vrot.slane %v1127, %v1140
          %v1142 = vcombine.high %v1059, %v782
          %v1144 = vunpack.c.l.s4 1983009808
          %v1145 = vunpack.c.0.s8 %v1144
          %v1146 = vlaneseq
          %v1147 = vshrl.u32 %v1146, 7
          %v1148 = vsub.s32 %v1145, %v1147
          %v1149 = vrot.slane %v1059, %v1148
          %v1151 = vunpack.c.l.s4 1983009808
          %v1152 = vunpack.c.0.s8 %v1151
          %v1153 = vlaneseq
          %v1154 = vshrl.u32 %v1153, 7
          %v1155 = vsub.s32 %v1152, %v1154
          %v1156 = vrot.slane %v1142, %v1155
          %v1157 = vcombine.low %v1134, %v1149
          %v1158 = vcombine.high %v1134, %v1149
          %v1160 = vunpack.c.l.s4 1934713408
          %v1161 = vunpack.c.0.s8 %v1160
          %v1162 = vlaneseq
          %v1163 = vshrl.u32 %v1162, 7
          %v1164 = vsub.s32 %v1161, %v1163
          %v1165 = vrot.slane %v1157, %v1164
          %v1167 = vunpack.c.l.s4 1934713408
          %v1168 = vunpack.c.0.s8 %v1167
          %v1169 = vlaneseq
          %v1170 = vshrl.u32 %v1169, 7
          %v1171 = vsub.s32 %v1168, %v1170
          %v1172 = vrot.slane %v1158, %v1171
          %v1173 = vcombine.low %v1141, %v1156
          %v1174 = vcombine.high %v1141, %v1156
          %v1176 = vunpack.c.l.s4 1934713408
          %v1177 = vunpack.c.0.s8 %v1176
          %v1178 = vlaneseq
          %v1179 = vshrl.u32 %v1178, 7
          %v1180 = vsub.s32 %v1177, %v1179
          %v1181 = vrot.slane %v1173, %v1180
          %v1183 = vunpack.c.l.s4 1934713408
          %v1184 = vunpack.c.0.s8 %v1183
          %v1185 = vlaneseq
          %v1186 = vshrl.u32 %v1185, 7
          %v1187 = vsub.s32 %v1184, %v1186
          %v1188 = vrot.slane %v1174, %v1187
          %v1189 = vcombine.high %v1165, 0
          %v1190 = vcombine.high %v1172, 0
          %v1191 = vcombine.high %v1181, 0
          %v1192 = vcombine.high %v1188, 0
          %v1193 = vcombine.low %v1099, %v1106
          %v1195 = vunpack.c.l.s4 1983009808
          %v1196 = vunpack.c.0.s8 %v1195
          %v1197 = vlaneseq
          %v1198 = vshrl.u32 %v1197, 7
          %v1199 = vsub.s32 %v1196, %v1198
          %v1200 = vrot.slane %v1193, %v1199
          %v1201 = vcombine.low %v1123, %v1124
          %v1203 = vunpack.c.l.s4 1983009808
          %v1204 = vunpack.c.0.s8 %v1203
          %v1205 = vlaneseq
          %v1206 = vshrl.u32 %v1205, 7
          %v1207 = vsub.s32 %v1204, %v1206
          %v1208 = vrot.slane %v1201, %v1207
          %v1209 = vcombine.low %v1115, %v1122
          %v1211 = vunpack.c.l.s4 1983009808
          %v1212 = vunpack.c.0.s8 %v1211
          %v1213 = vlaneseq
          %v1214 = vshrl.u32 %v1213, 7
          %v1215 = vsub.s32 %v1212, %v1214
          %v1216 = vrot.slane %v1209, %v1215
          %v1217 = vcombine.low %v1125, %v1126
          %v1219 = vunpack.c.l.s4 1983009808
          %v1220 = vunpack.c.0.s8 %v1219
          %v1221 = vlaneseq
          %v1222 = vshrl.u32 %v1221, 7
          %v1223 = vsub.s32 %v1220, %v1222
          %v1224 = vrot.slane %v1217, %v1223
          %v1225 = vcombine.low %v1200, %v1208
          %v1227 = vunpack.c.l.s4 1934713408
          %v1228 = vunpack.c.0.s8 %v1227
          %v1229 = vlaneseq
          %v1230 = vshrl.u32 %v1229, 7
          %v1231 = vsub.s32 %v1228, %v1230
          %v1232 = vrot.slane %v1225, %v1231
          %v1233 = vcombine.low %v1216, %v1224
          %v1235 = vunpack.c.l.s4 1934713408
          %v1236 = vunpack.c.0.s8 %v1235
          %v1237 = vlaneseq
          %v1238 = vshrl.u32 %v1237, 7
          %v1239 = vsub.s32 %v1236, %v1238
          %v1240 = vrot.slane %v1233, %v1239
          %v1241 = vcombine.low %v1232, %v1240
          %v1242 = vcombine.high %v1232, %v1240
          %v1243 = vcombine.low %v1165, %v1172
          %v1245 = vunpack.c.l.s4 1983009808
          %v1246 = vunpack.c.0.s8 %v1245
          %v1247 = vlaneseq
          %v1248 = vshrl.u32 %v1247, 7
          %v1249 = vsub.s32 %v1246, %v1248
          %v1250 = vrot.slane %v1243, %v1249
          %v1251 = vcombine.low %v1189, %v1190
          %v1253 = vunpack.c.l.s4 1983009808
          %v1254 = vunpack.c.0.s8 %v1253
          %v1255 = vlaneseq
          %v1256 = vshrl.u32 %v1255, 7
          %v1257 = vsub.s32 %v1254, %v1256
          %v1258 = vrot.slane %v1251, %v1257
          %v1259 = vcombine.low %v1181, %v1188
          %v1261 = vunpack.c.l.s4 1983009808
          %v1262 = vunpack.c.0.s8 %v1261
          %v1263 = vlaneseq
          %v1264 = vshrl.u32 %v1263, 7
          %v1265 = vsub.s32 %v1262, %v1264
          %v1266 = vrot.slane %v1259, %v1265
          %v1267 = vcombine.low %v1191, %v1192
          %v1269 = vunpack.c.l.s4 1983009808
          %v1270 = vunpack.c.0.s8 %v1269
          %v1271 = vlaneseq
          %v1272 = vshrl.u32 %v1271, 7
          %v1273 = vsub.s32 %v1270, %v1272
          %v1274 = vrot.slane %v1267, %v1273
          %v1275 = vcombine.low %v1250, %v1258
          %v1277 = vunpack.c.l.s4 1934713408
          %v1278 = vunpack.c.0.s8 %v1277
          %v1279 = vlaneseq
          %v1280 = vshrl.u32 %v1279, 7
          %v1281 = vsub.s32 %v1278, %v1280
          %v1282 = vrot.slane %v1275, %v1281
          %v1283 = vcombine.low %v1266, %v1274
          %v1285 = vunpack.c.l.s4 1934713408
          %v1286 = vunpack.c.0.s8 %v1285
          %v1287 = vlaneseq
          %v1288 = vshrl.u32 %v1287, 7
          %v1289 = vsub.s32 %v1286, %v1288
          %v1290 = vrot.slane %v1283, %v1289
          %v1291 = vcombine.low %v1282, %v1290
          %v1292 = vcombine.high %v1282, %v1290
          %v1295 = vpack.i.b16 %v1291, %v1241
          %v1297 = vshrl.u32 %v1241, 16
          %v1298 = vshrl.u32 %v1291, 16
          %v1299 = vpack.i.b16 %v1298, %v1297
          %v1303 = vpack.i.b16 %v1292, %v1242
          %v1305 = vshrl.u32 %v1242, 16
          %v1306 = vshrl.u32 %v1292, 16
          %v1307 = vpack.i.b16 %v1306, %v1305
          %1309 = vst.msk [vmem:[#allocation3] sm:$0xff] %vm1032, %v1295
          %1310 = vst.msk [vmem:[#allocation3 + $0x8] sm:$0xff] %vm1032, %v1299
          %1311 = vst.msk [vmem:[#allocation3 + $0x10] sm:$0xff] %vm1032, %v1303
          %1312 = vst.msk [vmem:[#allocation3 + $0x18] sm:$0xff] %vm1032, %v1307
        $region112: #{tpu_custom_call.1} parent=83 // pred_fallthru
          _
        %s1313 = smul.u32 %s39, 8
        %s1314 = scalar_lea.vmem %s628, %s1313
        %v1315 = vld [vmem:[%s1314] sm:$0xff]
        %v1316 = vld [vmem:[%s2] sm:$0x1]
        %v1317 = vld [vmem:[%s3] sm:$0x1]
        %vm1318 = vcmask 261120
        %v1319 = vsel %vm1318, %v1315, 0.0
        %1320 = vadd.xlane.f32.xlu0 %v1319
        %v1321 = vpop.xlane.xlu0 %1320
        %v1322 = vrcp.pop 32.0
        %v1323 = vmul.f32 %v1321, %v1322
        %v1324 = vsub.f32 %v1315, %v1323
        %v1325 = vmul.f32 %v1324, %v1324
        %v1326 = vsel %vm1318, %v1325, 0.0
        %1327 = vadd.xlane.f32.xlu0 %v1326
        %v1328 = vpop.xlane.xlu0 %1327
        %v1329 = vmul.f32 %v1328, %v1322
        %v1330 = vadd.f32 %v1329, 1e-05
        %v1331 = vrsqrt.pop %v1330
        %v1332 = vmul.f32 %v1324, %v1331
        %v1334 = vlaneseq
        %v1335 = vshrl.u32 %v1334, 7
        %v1336 = vsub.s32 0, %v1335
        %v1337 = vrot.slane %v1316, %v1336
        %v1339 = vmul.f32 %v1332, %v1337
        %v1341 = vlaneseq
        %v1342 = vshrl.u32 %v1341, 7
        %v1343 = vsub.s32 0, %v1342
        %v1344 = vrot.slane %v1317, %v1343
        %v1346 = vadd.f32 %v1339, %v1344
        %v1347 = vpack.c.bf16 %v1346, %v1346
        %v1348 = vld [vmem:[#allocation4] sm:$0xf]
        %v1349 = vld [vmem:[#allocation4 + $0x4] sm:$0xf]
        %v1350 = vld [vmem:[#allocation4 + $0x8] sm:$0xf]
        %v1351 = vld [vmem:[#allocation4 + $0xc] sm:$0xf]
        %v1352 = vld [vmem:[#allocation7] sm:$0x1]
        %v1354 = vlaneseq
        %v1355 = vshrl.u32 %v1354, 7
        %v1356 = vsub.s32 0, %v1355
        %v1357 = vrot.slane %v1352, %v1356
        %v1363 = vunpack.c.l.b16 %v1348
        %v1364 = vunpack.c.l.b16 %v1349
        %v1365 = vunpack.c.l.b16 %v1350
        %v1366 = vunpack.c.l.b16 %v1351
        %v1367 = vpack.c.b16 %v1364, %v1363
        %v1368 = vpack.c.b16 %v1366, %v1365
        %v1372 = vsel %vm1318, %v1347, 0
        %1374 = vmatprep.subr.bf16.mxu0 0
        %1375 = vmatpush1.bf16.msra.mxu0 %v1367
        %1376 = vmatprep.subr.bf16.mxu0 0
        %1377 = vmatpush1.bf16.msra.mxu0 %v1368
        %1378 = vmatprep.subr.bf16.mxu0 0
        %1379 = vmatpush1.bf16.msra.mxu0 0
        %1380 = vmatprep.subr.bf16.mxu0 0
        %1381 = vmatpush1.bf16.msra.mxu0 0
        %1382 = vmatprep.subr.bf16.mxu0 0
        %1383 = vmatpush1.bf16.msra.mxu0 0
        %1384 = vmatprep.subr.bf16.mxu0 0
        %1385 = vmatpush1.bf16.msra.mxu0 0
        %1386 = vmatprep.subr.bf16.mxu0 0
        %1387 = vmatpush1.bf16.msra.mxu0 0
        %1388 = vmatprep.subr.bf16.mxu0 0
        %1389 = vmatpush1.bf16.msra.mxu0 0
        %1390 = vmatprep.subr.bf16.mxu0 0
        %1391 = vmatpush1.bf16.msra.mxu0 0
        %1392 = vmatprep.subr.bf16.mxu0 0
        %1393 = vmatpush1.bf16.msra.mxu0 0
        %1394 = vmatprep.subr.bf16.mxu0 0
        %1395 = vmatpush1.bf16.msra.mxu0 0
        %1396 = vmatprep.subr.bf16.mxu0 0
        %1397 = vmatpush1.bf16.msra.mxu0 0
        %1398 = vmatprep.subr.bf16.mxu0 0
        %1399 = vmatpush1.bf16.msra.mxu0 0
        %1400 = vmatprep.subr.bf16.mxu0 0
        %1401 = vmatpush1.bf16.msra.mxu0 0
        %1402 = vmatprep.subr.bf16.mxu0 0
        %1403 = vmatpush1.bf16.msra.mxu0 0
        %1404 = vmatprep.subr.bf16.mxu0 0
        %1405 = vmatpush1.bf16.msra.mxu0 0
        %1406 = vmatprep.mubr.bf16.mxu0 0
        %1407 = vmatmul.mubr.bf16.gmra.mrb[0].mxu0 %v1372
        %v1408 = vpop.f32.mrb[0].mxu0
        %v1409 = vadd.f32 %v1357, %v1408
        %v1410 = vpop.f32.mrb[0].mxu0
        %v1411 = vpop.f32.mrb[0].mxu0
        %v1412 = vpop.f32.mrb[0].mxu0
        %1413 = vdwg.mxu0
        %v1414 = vmul.f32 %v1409, 0.35355338
        %v1415 = vpack.c.bf16 %v1414, %v1414
        %1417 = vrot.lane.b32.xlu0 %v1415, 120
        %v1418 = vpop.permute.xlu0 %1417
        %1419 = vrot.lane.b32.xlu0 %v1415, 112
        %v1420 = vpop.permute.xlu0 %1419
        %1421 = vrot.lane.b32.xlu0 %v1415, 104
        %v1422 = vpop.permute.xlu0 %1421
        %v1424 = vunpack.c.l.s4 1983009808
        %v1425 = vunpack.c.0.s8 %v1424
        %v1426 = vlaneseq
        %v1427 = vshrl.u32 %v1426, 7
        %v1428 = vsub.s32 %v1425, %v1427
        %v1429 = vrot.slane %v1415, %v1428
        %v1432 = vunpack.c.l.s4 1983009808
        %v1433 = vunpack.c.0.s8 %v1432
        %v1434 = vlaneseq
        %v1435 = vshrl.u32 %v1434, 7
        %v1436 = vsub.s32 %v1433, %v1435
        %v1437 = vrot.slane %v1420, %v1436
        %v1438 = vcombine.low %v1429, %v1437
        %v1439 = vcombine.high %v1429, %v1437
        %v1441 = vunpack.c.l.s4 1934713408
        %v1442 = vunpack.c.0.s8 %v1441
        %v1443 = vlaneseq
        %v1444 = vshrl.u32 %v1443, 7
        %v1445 = vsub.s32 %v1442, %v1444
        %v1446 = vrot.slane %v1438, %v1445
        %v1448 = vunpack.c.l.s4 1934713408
        %v1449 = vunpack.c.0.s8 %v1448
        %v1450 = vlaneseq
        %v1451 = vshrl.u32 %v1450, 7
        %v1452 = vsub.s32 %v1449, %v1451
        %v1453 = vrot.slane %v1439, %v1452
        %v1454 = vcombine.high %v1446, 0
        %v1455 = vcombine.high %v1453, 0
        %v1458 = vunpack.c.l.s4 1983009808
        %v1459 = vunpack.c.0.s8 %v1458
        %v1460 = vlaneseq
        %v1461 = vshrl.u32 %v1460, 7
        %v1462 = vsub.s32 %v1459, %v1461
        %v1463 = vrot.slane %v1418, %v1462
        %v1466 = vunpack.c.l.s4 1983009808
        %v1467 = vunpack.c.0.s8 %v1466
        %v1468 = vlaneseq
        %v1469 = vshrl.u32 %v1468, 7
        %v1470 = vsub.s32 %v1467, %v1469
        %v1471 = vrot.slane %v1422, %v1470
        %v1472 = vcombine.low %v1463, %v1471
        %v1473 = vcombine.high %v1463, %v1471
        %v1475 = vunpack.c.l.s4 1934713408
        %v1476 = vunpack.c.0.s8 %v1475
        %v1477 = vlaneseq
        %v1478 = vshrl.u32 %v1477, 7
        %v1479 = vsub.s32 %v1476, %v1478
        %v1480 = vrot.slane %v1472, %v1479
        %v1482 = vunpack.c.l.s4 1934713408
        %v1483 = vunpack.c.0.s8 %v1482
        %v1484 = vlaneseq
        %v1485 = vshrl.u32 %v1484, 7
        %v1486 = vsub.s32 %v1483, %v1485
        %v1487 = vrot.slane %v1473, %v1486
        %v1488 = vcombine.high %v1480, 0
        %v1489 = vcombine.high %v1487, 0
        %v1492 = vpack.i.b16 %v1480, %v1446
        %v1494 = vshrl.u32 %v1446, 16
        %v1495 = vshrl.u32 %v1480, 16
        %v1496 = vpack.i.b16 %v1495, %v1494
        %v1500 = vpack.i.b16 %v1488, %v1454
        %v1502 = vshrl.u32 %v1454, 16
        %v1503 = vshrl.u32 %v1488, 16
        %v1504 = vpack.i.b16 %v1503, %v1502
        %v1508 = vpack.i.b16 %v1487, %v1453
        %v1510 = vshrl.u32 %v1453, 16
        %v1511 = vshrl.u32 %v1487, 16
        %v1512 = vpack.i.b16 %v1511, %v1510
        %v1516 = vpack.i.b16 %v1489, %v1455
        %v1518 = vshrl.u32 %v1455, 16
        %v1519 = vshrl.u32 %v1489, 16
        %v1520 = vpack.i.b16 %v1519, %v1518
        %v1522 = vcombine.low %v1492, %v1508
        %v1524 = vunpack.c.l.s4 1983009808
        %v1525 = vunpack.c.0.s8 %v1524
        %v1526 = vlaneseq
        %v1527 = vshrl.u32 %v1526, 7
        %v1528 = vsub.s32 %v1525, %v1527
        %v1529 = vrot.slane %v1522, %v1528
        %v1530 = vcombine.low %v1500, %v1516
        %v1532 = vunpack.c.l.s4 1983009808
        %v1533 = vunpack.c.0.s8 %v1532
        %v1534 = vlaneseq
        %v1535 = vshrl.u32 %v1534, 7
        %v1536 = vsub.s32 %v1533, %v1535
        %v1537 = vrot.slane %v1530, %v1536
        %v1538 = vcombine.low %v1529, %v1537
        %v1540 = vunpack.c.l.s4 1934713408
        %v1541 = vunpack.c.0.s8 %v1540
        %v1542 = vlaneseq
        %v1543 = vshrl.u32 %v1542, 7
        %v1544 = vsub.s32 %v1541, %v1543
        %v1545 = vrot.slane %v1538, %v1544
        %v1546 = vcombine.high %v1545, 0
        %v1547 = vcombine.low %v1496, %v1512
        %v1549 = vunpack.c.l.s4 1983009808
        %v1550 = vunpack.c.0.s8 %v1549
        %v1551 = vlaneseq
        %v1552 = vshrl.u32 %v1551, 7
        %v1553 = vsub.s32 %v1550, %v1552
        %v1554 = vrot.slane %v1547, %v1553
        %v1555 = vcombine.low %v1504, %v1520
        %v1557 = vunpack.c.l.s4 1983009808
        %v1558 = vunpack.c.0.s8 %v1557
        %v1559 = vlaneseq
        %v1560 = vshrl.u32 %v1559, 7
        %v1561 = vsub.s32 %v1558, %v1560
        %v1562 = vrot.slane %v1555, %v1561
        %v1563 = vcombine.low %v1554, %v1562
        %v1565 = vunpack.c.l.s4 1934713408
        %v1566 = vunpack.c.0.s8 %v1565
        %v1567 = vlaneseq
        %v1568 = vshrl.u32 %v1567, 7
        %v1569 = vsub.s32 %v1566, %v1568
        %v1570 = vrot.slane %v1563, %v1569
        %v1571 = vcombine.high %v1570, 0
        %v1574 = vpack.i.b16 %v1570, %v1545
        %v1575 = vshrl.u32 %v1545, 16
        %v1576 = vshrl.u32 %v1570, 16
        %v1577 = vpack.i.b16 %v1576, %v1575
        %v1580 = vpack.i.b16 %v1571, %v1546
        %v1581 = vshrl.u32 %v1546, 16
        %v1582 = vshrl.u32 %v1571, 16
        %v1583 = vpack.i.b16 %v1582, %v1581
        %v1584 = vld [vmem:[#allocation2] sm:$0xff]
        %v1585 = vld [vmem:[#allocation2 + $0x8] sm:$0xff]
        %v1586 = vld [vmem:[#allocation2 + $0x10] sm:$0xff]
        %v1587 = vld [vmem:[#allocation2 + $0x18] sm:$0xff]
        %v1588 = vld [vmem:[%s632] sm:$0xff]
        %vm1589 = vcmask 64512
        %v1591 = vsel %vm1589, %v1574, 0
        %v1594 = vsel %vm1589, %v1584, 0
        %1596 = vmatprep.subr.bf16.mxu0 0
        %1597 = vmatpush1.bf16.xpose.msra.mxu0 %v1594
        %1598 = vmatprep.subr.bf16.mxu0 0
        %1599 = vmatpush1.bf16.xpose.msra.mxu0 0
        %1600 = vmatprep.subr.bf16.mxu0 0
        %1601 = vmatpush1.bf16.xpose.msra.mxu0 0
        %1602 = vmatprep.subr.bf16.mxu0 0
        %1603 = vmatpush1.bf16.xpose.msra.mxu0 0
        %1604 = vmatprep.subr.bf16.mxu0 0
        %1605 = vmatpush1.bf16.xpose.msra.mxu0 0
        %1606 = vmatprep.subr.bf16.mxu0 0
        %1607 = vmatpush1.bf16.xpose.msra.mxu0 0
        %1608 = vmatprep.subr.bf16.mxu0 0
        %1609 = vmatpush1.bf16.xpose.msra.mxu0 0
        %1610 = vmatprep.subr.bf16.mxu0 0
        %1611 = vmatpush1.bf16.xpose.msra.mxu0 0
        %1612 = vmatprep.subr.bf16.mxu0 0
        %1613 = vmatpush1.bf16.xpose.msra.mxu0 0
        %1614 = vmatprep.subr.bf16.mxu0 0
        %1615 = vmatpush1.bf16.xpose.msra.mxu0 0
        %1616 = vmatprep.subr.bf16.mxu0 0
        %1617 = vmatpush1.bf16.xpose.msra.mxu0 0
        %1618 = vmatprep.subr.bf16.mxu0 0
        %1619 = vmatpush1.bf16.xpose.msra.mxu0 0
        %1620 = vmatprep.subr.bf16.mxu0 0
        %1621 = vmatpush1.bf16.xpose.msra.mxu0 0
        %1622 = vmatprep.subr.bf16.mxu0 0
        %1623 = vmatpush1.bf16.xpose.msra.mxu0 0
        %1624 = vmatprep.subr.bf16.mxu0 0
        %1625 = vmatpush1.bf16.xpose.msra.mxu0 0
        %1626 = vmatprep.subr.bf16.mxu0 0
        %1627 = vmatpush1.bf16.xpose.msra.mxu0 0
        %1628 = vmatprep.mubr.bf16.mxu0 0
        %1629 = vmatmul.mubr.bf16.gmra.mrb[0].mxu0 %v1591
        %v1630 = vpop.f32.mrb[0].mxu0
        %v1631 = vadd.f32 %v1588, %v1630
        %v1632 = vpop.f32.mrb[0].mxu0
        %v1633 = vpop.f32.mrb[0].mxu0
        %v1634 = vpop.f32.mrb[0].mxu0
        %1635 = vdwg.mxu0
        %v1637 = vsel %vm1589, %v1577, 0
        %v1640 = vsel %vm1589, %v1585, 0
        %1642 = vmatprep.subr.bf16.mxu0 0
        %1643 = vmatpush1.bf16.xpose.msra.mxu0 %v1640
        %1644 = vmatprep.subr.bf16.mxu0 0
        %1645 = vmatpush1.bf16.xpose.msra.mxu0 0
        %1646 = vmatprep.subr.bf16.mxu0 0
        %1647 = vmatpush1.bf16.xpose.msra.mxu0 0
        %1648 = vmatprep.subr.bf16.mxu0 0
        %1649 = vmatpush1.bf16.xpose.msra.mxu0 0
        %1650 = vmatprep.subr.bf16.mxu0 0
        %1651 = vmatpush1.bf16.xpose.msra.mxu0 0
        %1652 = vmatprep.subr.bf16.mxu0 0
        %1653 = vmatpush1.bf16.xpose.msra.mxu0 0
        %1654 = vmatprep.subr.bf16.mxu0 0
        %1655 = vmatpush1.bf16.xpose.msra.mxu0 0
        %1656 = vmatprep.subr.bf16.mxu0 0
        %1657 = vmatpush1.bf16.xpose.msra.mxu0 0
        %1658 = vmatprep.subr.bf16.mxu0 0
        %1659 = vmatpush1.bf16.xpose.msra.mxu0 0
        %1660 = vmatprep.subr.bf16.mxu0 0
        %1661 = vmatpush1.bf16.xpose.msra.mxu0 0
        %1662 = vmatprep.subr.bf16.mxu0 0
        %1663 = vmatpush1.bf16.xpose.msra.mxu0 0
        %1664 = vmatprep.subr.bf16.mxu0 0
        %1665 = vmatpush1.bf16.xpose.msra.mxu0 0
        %1666 = vmatprep.subr.bf16.mxu0 0
        %1667 = vmatpush1.bf16.xpose.msra.mxu0 0
        %1668 = vmatprep.subr.bf16.mxu0 0
        %1669 = vmatpush1.bf16.xpose.msra.mxu0 0
        %1670 = vmatprep.subr.bf16.mxu0 0
        %1671 = vmatpush1.bf16.xpose.msra.mxu0 0
        %1672 = vmatprep.subr.bf16.mxu0 0
        %1673 = vmatpush1.bf16.xpose.msra.mxu0 0
        %1674 = vmatprep.mubr.bf16.mxu0 0
        %1675 = vmatmul.mubr.bf16.gmra.mrb[0].mxu0 %v1637
        %v1676 = vpop.f32.mrb[0].mxu0
        %v1677 = vadd.f32 %v1588, %v1676
        %v1678 = vpop.f32.mrb[0].mxu0
        %v1679 = vpop.f32.mrb[0].mxu0
        %v1680 = vpop.f32.mrb[0].mxu0
        %1681 = vdwg.mxu0
        %v1683 = vsel %vm1589, %v1580, 0
        %v1686 = vsel %vm1589, %v1586, 0
        %1688 = vmatprep.subr.bf16.mxu0 0
        %1689 = vmatpush1.bf16.xpose.msra.mxu0 %v1686
        %1690 = vmatprep.subr.bf16.mxu0 0
        %1691 = vmatpush1.bf16.xpose.msra.mxu0 0
        %1692 = vmatprep.subr.bf16.mxu0 0
        %1693 = vmatpush1.bf16.xpose.msra.mxu0 0
        %1694 = vmatprep.subr.bf16.mxu0 0
        %1695 = vmatpush1.bf16.xpose.msra.mxu0 0
        %1696 = vmatprep.subr.bf16.mxu0 0
        %1697 = vmatpush1.bf16.xpose.msra.mxu0 0
        %1698 = vmatprep.subr.bf16.mxu0 0
        %1699 = vmatpush1.bf16.xpose.msra.mxu0 0
        %1700 = vmatprep.subr.bf16.mxu0 0
        %1701 = vmatpush1.bf16.xpose.msra.mxu0 0
        %1702 = vmatprep.subr.bf16.mxu0 0
        %1703 = vmatpush1.bf16.xpose.msra.mxu0 0
        %1704 = vmatprep.subr.bf16.mxu0 0
        %1705 = vmatpush1.bf16.xpose.msra.mxu0 0
        %1706 = vmatprep.subr.bf16.mxu0 0
        %1707 = vmatpush1.bf16.xpose.msra.mxu0 0
        %1708 = vmatprep.subr.bf16.mxu0 0
        %1709 = vmatpush1.bf16.xpose.msra.mxu0 0
        %1710 = vmatprep.subr.bf16.mxu0 0
        %1711 = vmatpush1.bf16.xpose.msra.mxu0 0
        %1712 = vmatprep.subr.bf16.mxu0 0
        %1713 = vmatpush1.bf16.xpose.msra.mxu0 0
        %1714 = vmatprep.subr.bf16.mxu0 0
        %1715 = vmatpush1.bf16.xpose.msra.mxu0 0
        %1716 = vmatprep.subr.bf16.mxu0 0
        %1717 = vmatpush1.bf16.xpose.msra.mxu0 0
        %1718 = vmatprep.subr.bf16.mxu0 0
        %1719 = vmatpush1.bf16.xpose.msra.mxu0 0
        %1720 = vmatprep.mubr.bf16.mxu0 0
        %1721 = vmatmul.mubr.bf16.gmra.mrb[0].mxu0 %v1683
        %v1722 = vpop.f32.mrb[0].mxu0
        %v1723 = vadd.f32 %v1588, %v1722
        %v1724 = vpop.f32.mrb[0].mxu0
        %v1725 = vpop.f32.mrb[0].mxu0
        %v1726 = vpop.f32.mrb[0].mxu0
        %1727 = vdwg.mxu0
        %v1729 = vsel %vm1589, %v1583, 0
        %v1732 = vsel %vm1589, %v1587, 0
        %1734 = vmatprep.subr.bf16.mxu0 0
        %1735 = vmatpush1.bf16.xpose.msra.mxu0 %v1732
        %1736 = vmatprep.subr.bf16.mxu0 0
        %1737 = vmatpush1.bf16.xpose.msra.mxu0 0
        %1738 = vmatprep.subr.bf16.mxu0 0
        %1739 = vmatpush1.bf16.xpose.msra.mxu0 0
        %1740 = vmatprep.subr.bf16.mxu0 0
        %1741 = vmatpush1.bf16.xpose.msra.mxu0 0
        %1742 = vmatprep.subr.bf16.mxu0 0
        %1743 = vmatpush1.bf16.xpose.msra.mxu0 0
        %1744 = vmatprep.subr.bf16.mxu0 0
        %1745 = vmatpush1.bf16.xpose.msra.mxu0 0
        %1746 = vmatprep.subr.bf16.mxu0 0
        %1747 = vmatpush1.bf16.xpose.msra.mxu0 0
        %1748 = vmatprep.subr.bf16.mxu0 0
        %1749 = vmatpush1.bf16.xpose.msra.mxu0 0
        %1750 = vmatprep.subr.bf16.mxu0 0
        %1751 = vmatpush1.bf16.xpose.msra.mxu0 0
        %1752 = vmatprep.subr.bf16.mxu0 0
        %1753 = vmatpush1.bf16.xpose.msra.mxu0 0
        %1754 = vmatprep.subr.bf16.mxu0 0
        %1755 = vmatpush1.bf16.xpose.msra.mxu0 0
        %1756 = vmatprep.subr.bf16.mxu0 0
        %1757 = vmatpush1.bf16.xpose.msra.mxu0 0
        %1758 = vmatprep.subr.bf16.mxu0 0
        %1759 = vmatpush1.bf16.xpose.msra.mxu0 0
        %1760 = vmatprep.subr.bf16.mxu0 0
        %1761 = vmatpush1.bf16.xpose.msra.mxu0 0
        %1762 = vmatprep.subr.bf16.mxu0 0
        %1763 = vmatpush1.bf16.xpose.msra.mxu0 0
        %1764 = vmatprep.subr.bf16.mxu0 0
        %1765 = vmatpush1.bf16.xpose.msra.mxu0 0
        %1766 = vmatprep.mubr.bf16.mxu0 0
        %1767 = vmatmul.mubr.bf16.gmra.mrb[0].mxu0 %v1729
        %v1768 = vpop.f32.mrb[0].mxu0
        %v1769 = vadd.f32 %v1588, %v1768
        %v1770 = vpop.f32.mrb[0].mxu0
        %v1771 = vpop.f32.mrb[0].mxu0
        %v1772 = vpop.f32.mrb[0].mxu0
        %1773 = vdwg.mxu0
        %vm1774 = vcmask 130048
        %v1775 = vsel %vm1774, %v1631, -inf
        %1776 = vmax.xlane.f32.xlu0 %v1775
        %v1777 = vpop.xlane.xlu0 %1776
        %v1778 = vsel %vm1774, %v1677, -inf
        %1779 = vmax.xlane.f32.xlu0 %v1778
        %v1780 = vpop.xlane.xlu0 %1779
        %v1781 = vsel %vm1774, %v1723, -inf
        %1782 = vmax.xlane.f32.xlu0 %v1781
        %v1783 = vpop.xlane.xlu0 %1782
        %v1784 = vsel %vm1774, %v1769, -inf
        %1785 = vmax.xlane.f32.xlu0 %v1784
        %v1786 = vpop.xlane.xlu0 %1785
        %v1787 = vsub.f32 %v1631, %v1777
        %v1788 = vsub.f32 %v1677, %v1780
        %v1789 = vsub.f32 %v1723, %v1783
        %v1790 = vsub.f32 %v1769, %v1786
        %v1791 = vmul.f32 %v1787, 1.442695
        %v1792 = vpow.pop %v1791
        %v1793 = vmul.f32 %v1788, 1.442695
        %v1794 = vpow.pop %v1793
        %v1795 = vmul.f32 %v1789, 1.442695
        %v1796 = vpow.pop %v1795
        %v1797 = vmul.f32 %v1790, 1.442695
        %v1798 = vpow.pop %v1797
        %v1799 = vsel %vm1774, %v1792, 0.0
        %1800 = vadd.xlane.f32.xlu0 %v1799
        %v1801 = vpop.xlane.xlu0 %1800
        %v1802 = vsel %vm1774, %v1794, 0.0
        %1803 = vadd.xlane.f32.xlu0 %v1802
        %v1804 = vpop.xlane.xlu0 %1803
        %v1805 = vsel %vm1774, %v1796, 0.0
        %1806 = vadd.xlane.f32.xlu0 %v1805
        %v1807 = vpop.xlane.xlu0 %1806
        %v1808 = vsel %vm1774, %v1798, 0.0
        %1809 = vadd.xlane.f32.xlu0 %v1808
        %v1810 = vpop.xlane.xlu0 %1809
        %v1811 = vrcp.pop %v1801
        %v1812 = vrcp.pop %v1804
        %v1813 = vrcp.pop %v1807
        %v1814 = vrcp.pop %v1810
        %v1815 = vmul.f32 %v1792, %v1811
        %v1816 = vmul.f32 %v1794, %v1812
        %v1817 = vmul.f32 %v1796, %v1813
        %v1818 = vmul.f32 %v1798, %v1814
        %v1819 = vpack.c.bf16 %v1815, %v1815
        %v1820 = vpack.c.bf16 %v1816, %v1816
        %v1821 = vpack.c.bf16 %v1817, %v1817
        %v1822 = vpack.c.bf16 %v1818, %v1818
        %v1823 = vld [vmem:[#allocation3] sm:$0xff]
        %v1824 = vld [vmem:[#allocation3 + $0x8] sm:$0xff]
        %v1825 = vld [vmem:[#allocation3 + $0x10] sm:$0xff]
        %v1826 = vld [vmem:[#allocation3 + $0x18] sm:$0xff]
        %v1828 = vsel %vm1774, %v1819, 0
        %1830 = vmatprep.subr.bf16.mxu0 0
        %1831 = vmatpush1.bf16.msra.mxu0 %v1823
        %1832 = vmatprep.subr.bf16.mxu0 0
        %1833 = vmatpush1.bf16.msra.mxu0 0
        %1834 = vmatprep.subr.bf16.mxu0 0
        %1835 = vmatpush1.bf16.msra.mxu0 0
        %1836 = vmatprep.subr.bf16.mxu0 0
        %1837 = vmatpush1.bf16.msra.mxu0 0
        %1838 = vmatprep.subr.bf16.mxu0 0
        %1839 = vmatpush1.bf16.msra.mxu0 0
        %1840 = vmatprep.subr.bf16.mxu0 0
        %1841 = vmatpush1.bf16.msra.mxu0 0
        %1842 = vmatprep.subr.bf16.mxu0 0
        %1843 = vmatpush1.bf16.msra.mxu0 0
        %1844 = vmatprep.subr.bf16.mxu0 0
        %1845 = vmatpush1.bf16.msra.mxu0 0
        %1846 = vmatprep.subr.bf16.mxu0 0
        %1847 = vmatpush1.bf16.msra.mxu0 0
        %1848 = vmatprep.subr.bf16.mxu0 0
        %1849 = vmatpush1.bf16.msra.mxu0 0
        %1850 = vmatprep.subr.bf16.mxu0 0
        %1851 = vmatpush1.bf16.msra.mxu0 0
        %1852 = vmatprep.subr.bf16.mxu0 0
        %1853 = vmatpush1.bf16.msra.mxu0 0
        %1854 = vmatprep.subr.bf16.mxu0 0
        %1855 = vmatpush1.bf16.msra.mxu0 0
        %1856 = vmatprep.subr.bf16.mxu0 0
        %1857 = vmatpush1.bf16.msra.mxu0 0
        %1858 = vmatprep.subr.bf16.mxu0 0
        %1859 = vmatpush1.bf16.msra.mxu0 0
        %1860 = vmatprep.subr.bf16.mxu0 0
        %1861 = vmatpush1.bf16.msra.mxu0 0
        %1862 = vmatprep.mubr.bf16.mxu0 0
        %1863 = vmatmul.mubr.bf16.gmra.mrb[0].mxu0 %v1828
        %v1864 = vpop.f32.mrb[0].mxu0
        %v1865 = vadd.f32 0.0, %v1864
        %v1866 = vpop.f32.mrb[0].mxu0
        %v1867 = vpop.f32.mrb[0].mxu0
        %v1868 = vpop.f32.mrb[0].mxu0
        %1869 = vdwg.mxu0
        %v1871 = vsel %vm1774, %v1820, 0
        %1873 = vmatprep.subr.bf16.mxu0 0
        %1874 = vmatpush1.bf16.msra.mxu0 %v1824
        %1875 = vmatprep.subr.bf16.mxu0 0
        %1876 = vmatpush1.bf16.msra.mxu0 0
        %1877 = vmatprep.subr.bf16.mxu0 0
        %1878 = vmatpush1.bf16.msra.mxu0 0
        %1879 = vmatprep.subr.bf16.mxu0 0
        %1880 = vmatpush1.bf16.msra.mxu0 0
        %1881 = vmatprep.subr.bf16.mxu0 0
        %1882 = vmatpush1.bf16.msra.mxu0 0
        %1883 = vmatprep.subr.bf16.mxu0 0
        %1884 = vmatpush1.bf16.msra.mxu0 0
        %1885 = vmatprep.subr.bf16.mxu0 0
        %1886 = vmatpush1.bf16.msra.mxu0 0
        %1887 = vmatprep.subr.bf16.mxu0 0
        %1888 = vmatpush1.bf16.msra.mxu0 0
        %1889 = vmatprep.subr.bf16.mxu0 0
        %1890 = vmatpush1.bf16.msra.mxu0 0
        %1891 = vmatprep.subr.bf16.mxu0 0
        %1892 = vmatpush1.bf16.msra.mxu0 0
        %1893 = vmatprep.subr.bf16.mxu0 0
        %1894 = vmatpush1.bf16.msra.mxu0 0
        %1895 = vmatprep.subr.bf16.mxu0 0
        %1896 = vmatpush1.bf16.msra.mxu0 0
        %1897 = vmatprep.subr.bf16.mxu0 0
        %1898 = vmatpush1.bf16.msra.mxu0 0
        %1899 = vmatprep.subr.bf16.mxu0 0
        %1900 = vmatpush1.bf16.msra.mxu0 0
        %1901 = vmatprep.subr.bf16.mxu0 0
        %1902 = vmatpush1.bf16.msra.mxu0 0
        %1903 = vmatprep.subr.bf16.mxu0 0
        %1904 = vmatpush1.bf16.msra.mxu0 0
        %1905 = vmatprep.mubr.bf16.mxu0 0
        %1906 = vmatmul.mubr.bf16.gmra.mrb[0].mxu0 %v1871
        %v1907 = vpop.f32.mrb[0].mxu0
        %v1908 = vadd.f32 0.0, %v1907
        %v1909 = vpop.f32.mrb[0].mxu0
        %v1910 = vpop.f32.mrb[0].mxu0
        %v1911 = vpop.f32.mrb[0].mxu0
        %1912 = vdwg.mxu0
        %v1914 = vsel %vm1774, %v1821, 0
        %1916 = vmatprep.subr.bf16.mxu0 0
        %1917 = vmatpush1.bf16.msra.mxu0 %v1825
        %1918 = vmatprep.subr.bf16.mxu0 0
        %1919 = vmatpush1.bf16.msra.mxu0 0
        %1920 = vmatprep.subr.bf16.mxu0 0
        %1921 = vmatpush1.bf16.msra.mxu0 0
        %1922 = vmatprep.subr.bf16.mxu0 0
        %1923 = vmatpush1.bf16.msra.mxu0 0
        %1924 = vmatprep.subr.bf16.mxu0 0
        %1925 = vmatpush1.bf16.msra.mxu0 0
        %1926 = vmatprep.subr.bf16.mxu0 0
        %1927 = vmatpush1.bf16.msra.mxu0 0
        %1928 = vmatprep.subr.bf16.mxu0 0
        %1929 = vmatpush1.bf16.msra.mxu0 0
        %1930 = vmatprep.subr.bf16.mxu0 0
        %1931 = vmatpush1.bf16.msra.mxu0 0
        %1932 = vmatprep.subr.bf16.mxu0 0
        %1933 = vmatpush1.bf16.msra.mxu0 0
        %1934 = vmatprep.subr.bf16.mxu0 0
        %1935 = vmatpush1.bf16.msra.mxu0 0
        %1936 = vmatprep.subr.bf16.mxu0 0
        %1937 = vmatpush1.bf16.msra.mxu0 0
        %1938 = vmatprep.subr.bf16.mxu0 0
        %1939 = vmatpush1.bf16.msra.mxu0 0
        %1940 = vmatprep.subr.bf16.mxu0 0
        %1941 = vmatpush1.bf16.msra.mxu0 0
        %1942 = vmatprep.subr.bf16.mxu0 0
        %1943 = vmatpush1.bf16.msra.mxu0 0
        %1944 = vmatprep.subr.bf16.mxu0 0
        %1945 = vmatpush1.bf16.msra.mxu0 0
        %1946 = vmatprep.subr.bf16.mxu0 0
        %1947 = vmatpush1.bf16.msra.mxu0 0
        %1948 = vmatprep.mubr.bf16.mxu0 0
        %1949 = vmatmul.mubr.bf16.gmra.mrb[0].mxu0 %v1914
        %v1950 = vpop.f32.mrb[0].mxu0
        %v1951 = vadd.f32 0.0, %v1950
        %v1952 = vpop.f32.mrb[0].mxu0
        %v1953 = vpop.f32.mrb[0].mxu0
        %v1954 = vpop.f32.mrb[0].mxu0
        %1955 = vdwg.mxu0
        %v1957 = vsel %vm1774, %v1822, 0
        %1959 = vmatprep.subr.bf16.mxu0 0
        %1960 = vmatpush1.bf16.msra.mxu0 %v1826
        %1961 = vmatprep.subr.bf16.mxu0 0
        %1962 = vmatpush1.bf16.msra.mxu0 0
        %1963 = vmatprep.subr.bf16.mxu0 0
        %1964 = vmatpush1.bf16.msra.mxu0 0
        %1965 = vmatprep.subr.bf16.mxu0 0
        %1966 = vmatpush1.bf16.msra.mxu0 0
        %1967 = vmatprep.subr.bf16.mxu0 0
        %1968 = vmatpush1.bf16.msra.mxu0 0
        %1969 = vmatprep.subr.bf16.mxu0 0
        %1970 = vmatpush1.bf16.msra.mxu0 0
        %1971 = vmatprep.subr.bf16.mxu0 0
        %1972 = vmatpush1.bf16.msra.mxu0 0
        %1973 = vmatprep.subr.bf16.mxu0 0
        %1974 = vmatpush1.bf16.msra.mxu0 0
        %1975 = vmatprep.subr.bf16.mxu0 0
        %1976 = vmatpush1.bf16.msra.mxu0 0
        %1977 = vmatprep.subr.bf16.mxu0 0
        %1978 = vmatpush1.bf16.msra.mxu0 0
        %1979 = vmatprep.subr.bf16.mxu0 0
        %1980 = vmatpush1.bf16.msra.mxu0 0
        %1981 = vmatprep.subr.bf16.mxu0 0
        %1982 = vmatpush1.bf16.msra.mxu0 0
        %1983 = vmatprep.subr.bf16.mxu0 0
        %1984 = vmatpush1.bf16.msra.mxu0 0
        %1985 = vmatprep.subr.bf16.mxu0 0
        %1986 = vmatpush1.bf16.msra.mxu0 0
        %1987 = vmatprep.subr.bf16.mxu0 0
        %1988 = vmatpush1.bf16.msra.mxu0 0
        %1989 = vmatprep.subr.bf16.mxu0 0
        %1990 = vmatpush1.bf16.msra.mxu0 0
        %1991 = vmatprep.mubr.bf16.mxu0 0
        %1992 = vmatmul.mubr.bf16.gmra.mrb[0].mxu0 %v1957
        %v1993 = vpop.f32.mrb[0].mxu0
        %v1994 = vadd.f32 0.0, %v1993
        %v1995 = vpop.f32.mrb[0].mxu0
        %v1996 = vpop.f32.mrb[0].mxu0
        %v1997 = vpop.f32.mrb[0].mxu0
        %1998 = vdwg.mxu0
        %v1999 = vcombine.low %v1865, %v1951
        %v2000 = vcombine.high %v1865, %v1951
        %v2002 = vunpack.c.l.s4 1983009808
        %v2003 = vunpack.c.0.s8 %v2002
        %v2004 = vlaneseq
        %v2005 = vshrl.u32 %v2004, 7
        %v2006 = vsub.s32 %v2003, %v2005
        %v2007 = vrot.slane %v1999, %v2006
        %v2009 = vunpack.c.l.s4 1983009808
        %v2010 = vunpack.c.0.s8 %v2009
        %v2011 = vlaneseq
        %v2012 = vshrl.u32 %v2011, 7
        %v2013 = vsub.s32 %v2010, %v2012
        %v2014 = vrot.slane %v2000, %v2013
        %v2015 = vcombine.low %v1908, %v1994
        %v2016 = vcombine.high %v1908, %v1994
        %v2018 = vunpack.c.l.s4 1983009808
        %v2019 = vunpack.c.0.s8 %v2018
        %v2020 = vlaneseq
        %v2021 = vshrl.u32 %v2020, 7
        %v2022 = vsub.s32 %v2019, %v2021
        %v2023 = vrot.slane %v2015, %v2022
        %v2025 = vunpack.c.l.s4 1983009808
        %v2026 = vunpack.c.0.s8 %v2025
        %v2027 = vlaneseq
        %v2028 = vshrl.u32 %v2027, 7
        %v2029 = vsub.s32 %v2026, %v2028
        %v2030 = vrot.slane %v2016, %v2029
        %v2031 = vcombine.low %v2007, %v2023
        %v2032 = vcombine.high %v2007, %v2023
        %v2034 = vunpack.c.l.s4 1934713408
        %v2035 = vunpack.c.0.s8 %v2034
        %v2036 = vlaneseq
        %v2037 = vshrl.u32 %v2036, 7
        %v2038 = vsub.s32 %v2035, %v2037
        %v2039 = vrot.slane %v2031, %v2038
        %v2041 = vunpack.c.l.s4 1934713408
        %v2042 = vunpack.c.0.s8 %v2041
        %v2043 = vlaneseq
        %v2044 = vshrl.u32 %v2043, 7
        %v2045 = vsub.s32 %v2042, %v2044
        %v2046 = vrot.slane %v2032, %v2045
        %v2047 = vcombine.low %v2014, %v2030
        %v2048 = vcombine.high %v2014, %v2030
        %v2050 = vunpack.c.l.s4 1934713408
        %v2051 = vunpack.c.0.s8 %v2050
        %v2052 = vlaneseq
        %v2053 = vshrl.u32 %v2052, 7
        %v2054 = vsub.s32 %v2051, %v2053
        %v2055 = vrot.slane %v2047, %v2054
        %v2057 = vunpack.c.l.s4 1934713408
        %v2058 = vunpack.c.0.s8 %v2057
        %v2059 = vlaneseq
        %v2060 = vshrl.u32 %v2059, 7
        %v2061 = vsub.s32 %v2058, %v2060
        %v2062 = vrot.slane %v2048, %v2061
        %v2063 = vcombine.high %v2039, 0.0
        %v2064 = vcombine.high %v2046, 0.0
        %v2065 = vcombine.high %v2055, 0.0
        %v2066 = vcombine.high %v2062, 0.0
        %v2067 = vcombine.low %v2039, %v2046
        %v2069 = vunpack.c.l.s4 1983009808
        %v2070 = vunpack.c.0.s8 %v2069
        %v2071 = vlaneseq
        %v2072 = vshrl.u32 %v2071, 7
        %v2073 = vsub.s32 %v2070, %v2072
        %v2074 = vrot.slane %v2067, %v2073
        %v2075 = vcombine.low %v2063, %v2064
        %v2077 = vunpack.c.l.s4 1983009808
        %v2078 = vunpack.c.0.s8 %v2077
        %v2079 = vlaneseq
        %v2080 = vshrl.u32 %v2079, 7
        %v2081 = vsub.s32 %v2078, %v2080
        %v2082 = vrot.slane %v2075, %v2081
        %v2083 = vcombine.low %v2055, %v2062
        %v2085 = vunpack.c.l.s4 1983009808
        %v2086 = vunpack.c.0.s8 %v2085
        %v2087 = vlaneseq
        %v2088 = vshrl.u32 %v2087, 7
        %v2089 = vsub.s32 %v2086, %v2088
        %v2090 = vrot.slane %v2083, %v2089
        %v2091 = vcombine.low %v2065, %v2066
        %v2093 = vunpack.c.l.s4 1983009808
        %v2094 = vunpack.c.0.s8 %v2093
        %v2095 = vlaneseq
        %v2096 = vshrl.u32 %v2095, 7
        %v2097 = vsub.s32 %v2094, %v2096
        %v2098 = vrot.slane %v2091, %v2097
        %v2099 = vcombine.low %v2074, %v2082
        %v2100 = vcombine.high %v2074, %v2082
        %v2102 = vunpack.c.l.s4 1934713408
        %v2103 = vunpack.c.0.s8 %v2102
        %v2104 = vlaneseq
        %v2105 = vshrl.u32 %v2104, 7
        %v2106 = vsub.s32 %v2103, %v2105
        %v2107 = vrot.slane %v2099, %v2106
        %v2109 = vunpack.c.l.s4 1934713408
        %v2110 = vunpack.c.0.s8 %v2109
        %v2111 = vlaneseq
        %v2112 = vshrl.u32 %v2111, 7
        %v2113 = vsub.s32 %v2110, %v2112
        %v2114 = vrot.slane %v2100, %v2113
        %v2115 = vcombine.low %v2090, %v2098
        %v2116 = vcombine.high %v2090, %v2098
        %v2118 = vunpack.c.l.s4 1934713408
        %v2119 = vunpack.c.0.s8 %v2118
        %v2120 = vlaneseq
        %v2121 = vshrl.u32 %v2120, 7
        %v2122 = vsub.s32 %v2119, %v2121
        %v2123 = vrot.slane %v2115, %v2122
        %v2125 = vunpack.c.l.s4 1934713408
        %v2126 = vunpack.c.0.s8 %v2125
        %v2127 = vlaneseq
        %v2128 = vshrl.u32 %v2127, 7
        %v2129 = vsub.s32 %v2126, %v2128
        %v2130 = vrot.slane %v2116, %v2129
        %v2131 = vcombine.low %v2107, %v2123
        %v2132 = vcombine.high %v2107, %v2123
        %v2133 = vcombine.low %v2114, %v2130
        %v2134 = vcombine.high %v2114, %v2130
        %2136 = vrot.lane.b32.xlu0 %v2132, 8
        %v2137 = vpop.permute.xlu0 %2136
        %2140 = vrot.lane.b32.xlu0 %v2133, 16
        %v2141 = vpop.permute.xlu0 %2140
        %2144 = vrot.lane.b32.xlu0 %v2134, 24
        %v2145 = vpop.permute.xlu0 %2144
        %v2147 = vsel %vm1589, %v2131, %v2137
        %v2148 = vsel %vm1774, %v2147, %v2141
        %vm2149 = vcmask 195584
        %v2150 = vsel %vm2149, %v2148, %v2145
        %v2151 = vpack.c.bf16 %v2150, %v2150
        %v2152 = vld [vmem:[#allocation12] sm:$0xf]
        %v2153 = vld [vmem:[#allocation12 + $0x4] sm:$0xf]
        %v2154 = vld [vmem:[#allocation12 + $0x8] sm:$0xf]
        %v2155 = vld [vmem:[#allocation12 + $0xc] sm:$0xf]
        %v2156 = vld [vmem:[#allocation13] sm:$0x1]
        %v2158 = vlaneseq
        %v2159 = vshrl.u32 %v2158, 7
        %v2160 = vsub.s32 0, %v2159
        %v2161 = vrot.slane %v2156, %v2160
        %v2167 = vunpack.c.l.b16 %v2152
        %v2168 = vunpack.c.l.b16 %v2153
        %v2169 = vunpack.c.l.b16 %v2154
        %v2170 = vunpack.c.l.b16 %v2155
        %v2171 = vpack.c.b16 %v2168, %v2167
        %v2172 = vpack.c.b16 %v2170, %v2169
        %v2176 = vsel %vm1318, %v2151, 0
        %2178 = vmatprep.subr.bf16.mxu0 0
        %2179 = vmatpush1.bf16.msra.mxu0 %v2171
        %2180 = vmatprep.subr.bf16.mxu0 0
        %2181 = vmatpush1.bf16.msra.mxu0 %v2172
        %2182 = vmatprep.subr.bf16.mxu0 0
        %2183 = vmatpush1.bf16.msra.mxu0 0
        %2184 = vmatprep.subr.bf16.mxu0 0
        %2185 = vmatpush1.bf16.msra.mxu0 0
        %2186 = vmatprep.subr.bf16.mxu0 0
        %2187 = vmatpush1.bf16.msra.mxu0 0
        %2188 = vmatprep.subr.bf16.mxu0 0
        %2189 = vmatpush1.bf16.msra.mxu0 0
        %2190 = vmatprep.subr.bf16.mxu0 0
        %2191 = vmatpush1.bf16.msra.mxu0 0
        %2192 = vmatprep.subr.bf16.mxu0 0
        %2193 = vmatpush1.bf16.msra.mxu0 0
        %2194 = vmatprep.subr.bf16.mxu0 0
        %2195 = vmatpush1.bf16.msra.mxu0 0
        %2196 = vmatprep.subr.bf16.mxu0 0
        %2197 = vmatpush1.bf16.msra.mxu0 0
        %2198 = vmatprep.subr.bf16.mxu0 0
        %2199 = vmatpush1.bf16.msra.mxu0 0
        %2200 = vmatprep.subr.bf16.mxu0 0
        %2201 = vmatpush1.bf16.msra.mxu0 0
        %2202 = vmatprep.subr.bf16.mxu0 0
        %2203 = vmatpush1.bf16.msra.mxu0 0
        %2204 = vmatprep.subr.bf16.mxu0 0
        %2205 = vmatpush1.bf16.msra.mxu0 0
        %2206 = vmatprep.subr.bf16.mxu0 0
        %2207 = vmatpush1.bf16.msra.mxu0 0
        %2208 = vmatprep.subr.bf16.mxu0 0
        %2209 = vmatpush1.bf16.msra.mxu0 0
        %2210 = vmatprep.mubr.bf16.mxu0 0
        %2211 = vmatmul.mubr.bf16.gmra.mrb[0].mxu0 %v2176
        %v2212 = vpop.f32.mrb[0].mxu0
        %v2213 = vadd.f32 %v2161, %v2212
        %v2214 = vpop.f32.mrb[0].mxu0
        %v2215 = vpop.f32.mrb[0].mxu0
        %v2216 = vpop.f32.mrb[0].mxu0
        %2217 = vdwg.mxu0
        %v2218 = vadd.f32 %v1315, %v2213
        %v2219 = vld [vmem:[%s10] sm:$0x1]
        %v2220 = vld [vmem:[%s11] sm:$0x1]
        %v2221 = vsel %vm1318, %v2218, 0.0
        %2222 = vadd.xlane.f32.xlu0 %v2221
        %v2223 = vpop.xlane.xlu0 %2222
        %v2224 = vmul.f32 %v2223, %v1322
        %v2225 = vsub.f32 %v2218, %v2224
        %v2226 = vmul.f32 %v2225, %v2225
        %v2227 = vsel %vm1318, %v2226, 0.0
        %2228 = vadd.xlane.f32.xlu0 %v2227
        %v2229 = vpop.xlane.xlu0 %2228
        %v2230 = vmul.f32 %v2229, %v1322
        %v2231 = vadd.f32 %v2230, 1e-05
        %v2232 = vrsqrt.pop %v2231
        %v2233 = vmul.f32 %v2225, %v2232
        %v2235 = vlaneseq
        %v2236 = vshrl.u32 %v2235, 7
        %v2237 = vsub.s32 0, %v2236
        %v2238 = vrot.slane %v2219, %v2237
        %v2240 = vmul.f32 %v2233, %v2238
        %v2242 = vlaneseq
        %v2243 = vshrl.u32 %v2242, 7
        %v2244 = vsub.s32 0, %v2243
        %v2245 = vrot.slane %v2220, %v2244
        %v2247 = vadd.f32 %v2240, %v2245
        %v2248 = vpack.c.bf16 %v2247, %v2247
        %v2249 = vld [vmem:[%s12] sm:$0xf]
        %v2250 = vld [vmem:[%s12 + $0x4] sm:$0xf]
        %v2251 = vld [vmem:[%s12 + $0x8] sm:$0xf]
        %v2252 = vld [vmem:[%s12 + $0xc] sm:$0xf]
        %v2253 = vld [vmem:[%s13] sm:$0x1]
        %v2255 = vlaneseq
        %v2256 = vshrl.u32 %v2255, 7
        %v2257 = vsub.s32 0, %v2256
        %v2258 = vrot.slane %v2253, %v2257
        %v2264 = vunpack.c.l.b16 %v2249
        %v2265 = vunpack.c.l.b16 %v2250
        %v2266 = vunpack.c.l.b16 %v2251
        %v2267 = vunpack.c.l.b16 %v2252
        %v2268 = vpack.c.b16 %v2265, %v2264
        %v2269 = vpack.c.b16 %v2267, %v2266
        %v2273 = vsel %vm1318, %v2248, 0
        %2275 = vmatprep.subr.bf16.mxu0 0
        %2276 = vmatpush1.bf16.msra.mxu0 %v2268
        %2277 = vmatprep.subr.bf16.mxu0 0
        %2278 = vmatpush1.bf16.msra.mxu0 %v2269
        %2279 = vmatprep.subr.bf16.mxu0 0
        %2280 = vmatpush1.bf16.msra.mxu0 0
        %2281 = vmatprep.subr.bf16.mxu0 0
        %2282 = vmatpush1.bf16.msra.mxu0 0
        %2283 = vmatprep.subr.bf16.mxu0 0
        %2284 = vmatpush1.bf16.msra.mxu0 0
        %2285 = vmatprep.subr.bf16.mxu0 0
        %2286 = vmatpush1.bf16.msra.mxu0 0
        %2287 = vmatprep.subr.bf16.mxu0 0
        %2288 = vmatpush1.bf16.msra.mxu0 0
        %2289 = vmatprep.subr.bf16.mxu0 0
        %2290 = vmatpush1.bf16.msra.mxu0 0
        %2291 = vmatprep.subr.bf16.mxu0 0
        %2292 = vmatpush1.bf16.msra.mxu0 0
        %2293 = vmatprep.subr.bf16.mxu0 0
        %2294 = vmatpush1.bf16.msra.mxu0 0
        %2295 = vmatprep.subr.bf16.mxu0 0
        %2296 = vmatpush1.bf16.msra.mxu0 0
        %2297 = vmatprep.subr.bf16.mxu0 0
        %2298 = vmatpush1.bf16.msra.mxu0 0
        %2299 = vmatprep.subr.bf16.mxu0 0
        %2300 = vmatpush1.bf16.msra.mxu0 0
        %2301 = vmatprep.subr.bf16.mxu0 0
        %2302 = vmatpush1.bf16.msra.mxu0 0
        %2303 = vmatprep.subr.bf16.mxu0 0
        %2304 = vmatpush1.bf16.msra.mxu0 0
        %2305 = vmatprep.subr.bf16.mxu0 0
        %2306 = vmatpush1.bf16.msra.mxu0 0
        %2307 = vmatprep.mubr.bf16.mxu0 0
        %2308 = vmatmul.mubr.bf16.gmra.mrb[0].mxu0 %v2273
        %v2309 = vpop.f32.mrb[0].mxu0
        %v2310 = vadd.f32 %v2258, %v2309
        %v2311 = vpop.f32.mrb[0].mxu0
        %v2312 = vpop.f32.mrb[0].mxu0
        %v2313 = vpop.f32.mrb[0].mxu0
        %2314 = vdwg.mxu0
        %v2315 = vmax.f32 %v2310, 0.0
        %v2316 = vpack.c.bf16 %v2315, %v2315
        %v2317 = vld [vmem:[%s14] sm:$0xf]
        %v2318 = vld [vmem:[%s14 + $0x4] sm:$0xf]
        %v2319 = vld [vmem:[%s14 + $0x8] sm:$0xf]
        %v2320 = vld [vmem:[%s14 + $0xc] sm:$0xf]
        %v2321 = vld [vmem:[%s14 + $0x10] sm:$0xf]
        %v2322 = vld [vmem:[%s14 + $0x14] sm:$0xf]
        %v2323 = vld [vmem:[%s14 + $0x18] sm:$0xf]
        %v2324 = vld [vmem:[%s14 + $0x1c] sm:$0xf]
        %v2325 = vld [vmem:[%s15] sm:$0x1]
        %v2327 = vlaneseq
        %v2328 = vshrl.u32 %v2327, 7
        %v2329 = vsub.s32 0, %v2328
        %v2330 = vrot.slane %v2325, %v2329
        %v2340 = vunpack.c.l.b16 %v2317
        %v2341 = vunpack.c.l.b16 %v2318
        %v2342 = vunpack.c.l.b16 %v2319
        %v2343 = vunpack.c.l.b16 %v2320
        %v2344 = vunpack.c.l.b16 %v2321
        %v2345 = vunpack.c.l.b16 %v2322
        %v2346 = vunpack.c.l.b16 %v2323
        %v2347 = vunpack.c.l.b16 %v2324
        %v2348 = vpack.c.b16 %v2341, %v2340
        %v2349 = vpack.c.b16 %v2343, %v2342
        %v2350 = vpack.c.b16 %v2345, %v2344
        %v2351 = vpack.c.b16 %v2347, %v2346
        %vm2356 = vcmask 523264
        %v2358 = vsel %vm2356, %v2316, 0
        %2360 = vmatprep.subr.bf16.mxu0 0
        %2361 = vmatpush1.bf16.msra.mxu0 %v2348
        %2362 = vmatprep.subr.bf16.mxu0 0
        %2363 = vmatpush1.bf16.msra.mxu0 %v2349
        %2364 = vmatprep.subr.bf16.mxu0 0
        %2365 = vmatpush1.bf16.msra.mxu0 %v2350
        %2366 = vmatprep.subr.bf16.mxu0 0
        %2367 = vmatpush1.bf16.msra.mxu0 %v2351
        %2368 = vmatprep.subr.bf16.mxu0 0
        %2369 = vmatpush1.bf16.msra.mxu0 0
        %2370 = vmatprep.subr.bf16.mxu0 0
        %2371 = vmatpush1.bf16.msra.mxu0 0
        %2372 = vmatprep.subr.bf16.mxu0 0
        %2373 = vmatpush1.bf16.msra.mxu0 0
        %2374 = vmatprep.subr.bf16.mxu0 0
        %2375 = vmatpush1.bf16.msra.mxu0 0
        %2376 = vmatprep.subr.bf16.mxu0 0
        %2377 = vmatpush1.bf16.msra.mxu0 0
        %2378 = vmatprep.subr.bf16.mxu0 0
        %2379 = vmatpush1.bf16.msra.mxu0 0
        %2380 = vmatprep.subr.bf16.mxu0 0
        %2381 = vmatpush1.bf16.msra.mxu0 0
        %2382 = vmatprep.subr.bf16.mxu0 0
        %2383 = vmatpush1.bf16.msra.mxu0 0
        %2384 = vmatprep.subr.bf16.mxu0 0
        %2385 = vmatpush1.bf16.msra.mxu0 0
        %2386 = vmatprep.subr.bf16.mxu0 0
        %2387 = vmatpush1.bf16.msra.mxu0 0
        %2388 = vmatprep.subr.bf16.mxu0 0
        %2389 = vmatpush1.bf16.msra.mxu0 0
        %2390 = vmatprep.subr.bf16.mxu0 0
        %2391 = vmatpush1.bf16.msra.mxu0 0
        %2392 = vmatprep.mubr.bf16.mxu0 0
        %2393 = vmatmul.mubr.bf16.gmra.mrb[0].mxu0 %v2358
        %v2394 = vpop.f32.mrb[0].mxu0
        %v2395 = vadd.f32 %v2330, %v2394
        %v2396 = vpop.f32.mrb[0].mxu0
        %v2397 = vpop.f32.mrb[0].mxu0
        %v2398 = vpop.f32.mrb[0].mxu0
        %2399 = vdwg.mxu0
        %v2400 = vadd.f32 %v2218, %v2395
        %2401 = vst.msk [vmem:[%s623] sm:$0xff] %vm1318, %v2400
        %s2402 = sand.u32 %s402, 1
        %s2403 = scalar_lea.sflag [#allocation6], %s2402
        %s2404 = sand.u32 %s402, 1
        %s2405 = smul.addr %s2404, 8
        %s2406 = scalar_lea.vmem [#allocation15], %s2405
        // Predicated region
        $region113: #{tpu_custom_call.1} parent=83 // pred_check
          %p2407 = pneg %p412
        $region114: #{tpu_custom_call.1} parent=83 // pred_check_branch
          %2409 = sbr.rel (%p2407) target = $region116
        $region115: #{tpu_custom_call.1} parent=83 // pred_region
          %s2411 = ssub.s32 128, 128
          %2412 = vsyncadd %s2403, %s2411
          %s2413 = smul.addr %s38, 2
          %s2414 = sadd.s32 %s39, %s2413
          %s2415 = smul.addr %s2414, 128
          %s2416 = scalar_lea.hbm %s16, %s2415
          %s2418 = sshll.u32 %s2406, 4
          %s2419 = int_to_ptr.vmem [resolvable:$true] %s2418
          %2421 = dma.vmem_to_hbm [thread:$0]  %s2419, 128, %s2416, %s2403
        $region116: #{tpu_custom_call.1} parent=83 // pred_fallthru
          _
      $region84: #{tpu_custom_call.1} parent=5 // pred_fallthru
        _
      %p2422 = scmp.le.s32.totalorder 2, %s29
      // Predicated region
      $region117: #{tpu_custom_call.1} parent=5 // pred_check
        %p2423 = pneg %p2422
      $region118: #{tpu_custom_call.1} parent=5 // pred_check_branch
        %2425 = sbr.rel (%p2423) target = $region120
      $region119: #{tpu_custom_call.1} parent=5 // pred_region
        %s2426 = ssub.s32 %s29, 2
        // Predicated region
        $region121: #{tpu_custom_call.1} parent=119 // pred_check
          %p2427 = pneg %p418
        $region122: #{tpu_custom_call.1} parent=119 // pred_check_branch
          %2429 = sbr.rel (%p2427) target = $region124
        $region123: #{tpu_custom_call.1} parent=119 // pred_region
          %s2430 = sand.u32 %s403, 1
          %s2431 = scalar_lea.sflag [#allocation6], %s2430
          %s2432 = sand.u32 %s403, 1
          %s2433 = smul.addr %s2432, 8
          %s2434 = scalar_lea.vmem [#allocation15], %s2433
          %2435 = dma.done %s2431, 128
        $region124: #{tpu_custom_call.1} parent=119 // pred_fallthru
          _
      $region120: #{tpu_custom_call.1} parent=5 // pred_fallthru
        _
    $region6: #{tpu_custom_call.1} parent=1 // loop_footer
      %s33 = sadd.s32 1, %s29
    $region7: #{tpu_custom_call.1} parent=1 // loop_footer_branch
      %28 = sbr.rel target = $region3
    $region8: #{tpu_custom_call.1} parent=1 // loop_exit
      _
    %2436 = vsyncpa [#allocation5], 1
    %s2437 = scalar_lea.sflag [#allocation5], 1
    %2438 = vsyncpa %s2437, 1
    %2439 = vsyncpa [#allocation8], 1
    %2440 = vsyncpa [#allocation11], 1
    %2441 = vsyncpa [#allocation14], 1
    %2442 = vsyncpa [#allocation6], 1
    %s2443 = scalar_lea.sflag [#allocation6], 1
    %2444 = vsyncpa %s2443, 1

</llo_original>
